<compile_context>
chip_gen: v7x
topology: tpu7x:2x2x1
jax: 0.10.0
libtpu: 0.0.40
codegen_flags: <defaults>
</compile_context>

<pallas_src>
import jax
import jax.numpy as jnp
from jax.experimental import pallas as pl
from jax.experimental.pallas import tpu as pltpu

# Small, lane-aligned stand-ins for the module's defaults (input_dim=2048, etc.).
INPUT_DIM = 256
HIDDEN_DIM = 128
VOXEL_RES = 16
OUT_DIM = VOXEL_RES ** 3          # 4096
BATCH = 8
LN_EPS = 1e-5                     # torch.nn.LayerNorm default eps

TILE_N = 2048                     # head output tile (multiple of 128, lane-dense)
N_TILES = OUT_DIM // TILE_N       # 2 -> one tile per TC under megacore on v7x


def _layernorm(h, gamma, beta):
    mu = jnp.mean(h, axis=-1, keepdims=True)
    var = jnp.mean((h - mu) * (h - mu), axis=-1, keepdims=True)
    return (h - mu) * jax.lax.rsqrt(var + LN_EPS) * gamma + beta


def _mm(a_f32, w_bf16):
    # bf16 x bf16 MXU matmul, f32 accumulation; activations stay f32 elsewhere.
    return jnp.dot(a_f32.astype(jnp.bfloat16), w_bf16,
                   preferred_element_type=jnp.float32)


def shape3d_decoder_kernel(x_ref,
                           w1_ref, b1_ref, g1_ref, be1_ref,
                           w2_ref, b2_ref, g2_ref, be2_ref,
                           w3_ref, b3_ref, g3_ref, be3_ref,
                           w4_ref, b4_ref,
                           out_ref):
    # Trunk (layers 1-3): recomputed per head tile.  This removes any cross-step
    # state, so the grid axis is "parallel" (megacore-shardable on v7x); the trunk's
    # tiny compute hides entirely under the per-tile w4 DMA.
    h = _mm(x_ref[...], w1_ref[...]) + b1_ref[...]
    h = jnp.maximum(h, 0.0)
    h = _layernorm(h, g1_ref[...], be1_ref[...])

    h = _mm(h, w2_ref[...]) + b2_ref[...]
    h = jnp.maximum(h, 0.0)
    h = _layernorm(h, g2_ref[...], be2_ref[...])

    h = _mm(h, w3_ref[...]) + b3_ref[...]
    h = jnp.maximum(h, 0.0)
    h3 = _layernorm(h, g3_ref[...], be3_ref[...]).astype(jnp.bfloat16)

    # Head tile: (B, 4H) @ (4H, TILE_N) -> sigmoid, lane-dense output store.
    logits = jnp.dot(h3, w4_ref[...], preferred_element_type=jnp.float32) + b4_ref[...]
    out_ref[...] = jax.nn.sigmoid(logits)


def init_params(key):
    """Deterministic synthetic parameters (shapes follow the torch module).

    Weights are stored bf16 (halves weight DMA); biases / LayerNorm params stay f32.
    """
    dims = [(INPUT_DIM, HIDDEN_DIM),
            (HIDDEN_DIM, 2 * HIDDEN_DIM),
            (2 * HIDDEN_DIM, 4 * HIDDEN_DIM),
            (4 * HIDDEN_DIM, OUT_DIM)]
    params = []
    keys = jax.random.split(key, len(dims))
    for i, ((din, dout), k) in enumerate(zip(dims, keys)):
        kw, kb = jax.random.split(k)
        # torch Linear stores (dout, din); we store the transposed (din, dout) for x @ W.
        w = (jax.random.uniform(kw, (din, dout), jnp.float32, -1.0, 1.0)
             / jnp.sqrt(din)).astype(jnp.bfloat16)
        b = jax.random.uniform(kb, (1, dout), jnp.float32, -1.0, 1.0) / jnp.sqrt(din)
        params += [w, b]
        if i < 3:  # first three blocks have a LayerNorm (gamma=1, beta=0 at init)
            params += [jnp.ones((1, dout), jnp.float32),
                       jnp.zeros((1, dout), jnp.float32)]
    return params


def shape3d_decoder(x, params, multi_view: bool = False):
    # TODO(synk): multi_view=True attention-fusion path not implemented.
    assert not multi_view, "multi_view fusion path not implemented (see TODO)"
    batch = x.shape[0]
    (w1, b1, g1, be1, w2, b2, g2, be2, w3, b3, g3, be3, w4, b4) = params

    # Pre-tile the head weight so each per-tile DMA is one contiguous (4H, TILE_N)
    # slab: (4H, OUT_DIM) -> (N_TILES, 4H, TILE_N), tile j == w4[:, j*TILE_N:(j+1)*TILE_N].
    w4_tiled = w4.reshape(4 * HIDDEN_DIM, N_TILES, TILE_N).transpose(1, 0, 2)

    full = lambda j: (0, 0)   # trunk operands: constant block index (fetched once)
    head = lambda j: (0, j)   # head bias / output: tiled along N

    in_specs = [
        pl.BlockSpec((batch, INPUT_DIM), full),                 # x
        pl.BlockSpec((INPUT_DIM, HIDDEN_DIM), full),            # w1
        pl.BlockSpec((1, HIDDEN_DIM), full),                    # b1
        pl.BlockSpec((1, HIDDEN_DIM), full),                    # g1
        pl.BlockSpec((1, HIDDEN_DIM), full),                    # be1
        pl.BlockSpec((HIDDEN_DIM, 2 * HIDDEN_DIM), full),       # w2
        pl.BlockSpec((1, 2 * HIDDEN_DIM), full),                # b2
        pl.BlockSpec((1, 2 * HIDDEN_DIM), full),                # g2
        pl.BlockSpec((1, 2 * HIDDEN_DIM), full),                # be2
        pl.BlockSpec((2 * HIDDEN_DIM, 4 * HIDDEN_DIM), full),   # w3
        pl.BlockSpec((1, 4 * HIDDEN_DIM), full),                # b3
        pl.BlockSpec((1, 4 * HIDDEN_DIM), full),                # g3
        pl.BlockSpec((1, 4 * HIDDEN_DIM), full),                # be3
        # w4 tile: contiguous (4H, TILE_N) bf16 slab per step (leading dim squeezed)
        pl.BlockSpec((None, 4 * HIDDEN_DIM, TILE_N), lambda j: (j, 0, 0)),
        pl.BlockSpec((1, TILE_N), head),                        # b4 tile
    ]

    vox_flat = pl.pallas_call(
        shape3d_decoder_kernel,
        out_shape=jax.ShapeDtypeStruct((batch, OUT_DIM), jnp.float32),
        grid=(N_TILES,),
        in_specs=in_specs,
        out_specs=pl.BlockSpec((batch, TILE_N), head),
        # No cross-step state -> head tiles are independent -> megacore-shardable.
        compiler_params=pltpu.CompilerParams(
            dimension_semantics=("parallel",),
        ),
    )(x, w1, b1, g1, be1, w2, b2, g2, be2, w3, b3, g3, be3, w4_tiled, b4)
    return vox_flat.reshape(batch, VOXEL_RES, VOXEL_RES, VOXEL_RES)


def shape3d_decoder_ref(x, params):
    """Plain-JAX reference mirroring the kernel's precision (bf16 matmul operands)."""
    (w1, b1, g1, be1, w2, b2, g2, be2, w3, b3, g3, be3, w4, b4) = params
    h = jnp.maximum(_mm(x, w1) + b1, 0.0)
    h = _layernorm(h, g1, be1)
    h = jnp.maximum(_mm(h, w2) + b2, 0.0)
    h = _layernorm(h, g2, be2)
    h = jnp.maximum(_mm(h, w3) + b3, 0.0)
    h = _layernorm(h, g3, be3)
    out = jax.nn.sigmoid(_mm(h, w4) + b4)
    return out.reshape(x.shape[0], VOXEL_RES, VOXEL_RES, VOXEL_RES)


def shape3d_decoder_ref_f32(x, params):
    """Full-f32 reference (same bf16-stored weights, f32 matmuls): fidelity check."""
    (w1, b1, g1, be1, w2, b2, g2, be2, w3, b3, g3, be3, w4, b4) = params
    mm = lambda a, w: jnp.dot(a, w.astype(jnp.float32),
                              preferred_element_type=jnp.float32)
    h = jnp.maximum(mm(x, w1) + b1, 0.0)
    h = _layernorm(h, g1, be1)
    h = jnp.maximum(mm(h, w2) + b2, 0.0)
    h = _layernorm(h, g2, be2)
    h = jnp.maximum(mm(h, w3) + b3, 0.0)
    h = _layernorm(h, g3, be3)
    out = jax.nn.sigmoid(mm(h, w4) + b4)
    return out.reshape(x.shape[0], VOXEL_RES, VOXEL_RES, VOXEL_RES)


if __name__ == "__main__":
    key = jax.random.PRNGKey(0)
    kx, kp = jax.random.split(key)
    x = jax.random.normal(kx, (BATCH, INPUT_DIM), jnp.float32)
    params = init_params(kp)

    voxels = jax.block_until_ready(shape3d_decoder(x, params))
    assert voxels.shape == (BATCH, VOXEL_RES, VOXEL_RES, VOXEL_RES)

    # Tight check vs. precision-matched reference.
    ref_bf16 = shape3d_decoder_ref(x, params)
    assert jnp.allclose(voxels, ref_bf16, atol=2e-3, rtol=2e-3), "mismatch vs bf16 ref"

    # Looser check vs. full-f32 (torch-like) semantics, per the review's fidelity note.
    ref_f32 = shape3d_decoder_ref_f32(x, params)
    assert jnp.allclose(voxels, ref_f32, atol=3e-2, rtol=3e-2), "mismatch vs f32 ref"

    print("KERNEL_OK")
</pallas_src>

<mosaic_0001>
module attributes {stable_mosaic.version = 11 : i64} {
  func.func @shape3d_decoder_kernel(%arg0: i32, %arg1: memref<8x256xf32, #tpu.memory_space<vmem>>, %arg2: memref<256x128xbf16, #tpu.memory_space<vmem>>, %arg3: memref<1x128xf32, #tpu.memory_space<vmem>>, %arg4: memref<1x128xf32, #tpu.memory_space<vmem>>, %arg5: memref<1x128xf32, #tpu.memory_space<vmem>>, %arg6: memref<128x256xbf16, #tpu.memory_space<vmem>>, %arg7: memref<1x256xf32, #tpu.memory_space<vmem>>, %arg8: memref<1x256xf32, #tpu.memory_space<vmem>>, %arg9: memref<1x256xf32, #tpu.memory_space<vmem>>, %arg10: memref<256x512xbf16, #tpu.memory_space<vmem>>, %arg11: memref<1x512xf32, #tpu.memory_space<vmem>>, %arg12: memref<1x512xf32, #tpu.memory_space<vmem>>, %arg13: memref<1x512xf32, #tpu.memory_space<vmem>>, %arg14: memref<1x512x2048xbf16, #tpu.memory_space<vmem>>, %arg15: memref<1x2048xf32, #tpu.memory_space<vmem>>, %arg16: memref<8x2048xf32, #tpu.memory_space<vmem>>) attributes {dimension_semantics = [#tpu.dimension_semantics<parallel>], iteration_bounds = array<i64: 2>, scalar_prefetch = 0 : i64, scratch_operands = 0 : i64, tpu.core_type = #tpu.core_type<tc>, window_params = [{pipeline_mode = #tpu.pipeline_mode<synchronous>, transform_indices = @transform_0, window_bounds = array<i64: 8, 256>}, {pipeline_mode = #tpu.pipeline_mode<synchronous>, transform_indices = @transform_1, window_bounds = array<i64: 256, 128>}, {pipeline_mode = #tpu.pipeline_mode<synchronous>, transform_indices = @transform_2, window_bounds = array<i64: 1, 128>}, {pipeline_mode = #tpu.pipeline_mode<synchronous>, transform_indices = @transform_3, window_bounds = array<i64: 1, 128>}, {pipeline_mode = #tpu.pipeline_mode<synchronous>, transform_indices = @transform_4, window_bounds = array<i64: 1, 128>}, {pipeline_mode = #tpu.pipeline_mode<synchronous>, transform_indices = @transform_5, window_bounds = array<i64: 128, 256>}, {pipeline_mode = #tpu.pipeline_mode<synchronous>, transform_indices = @transform_6, window_bounds = array<i64: 1, 256>}, {pipeline_mode = #tpu.pipeline_mode<synchronous>, transform_indices = @transform_7, window_bounds = array<i64: 1, 256>}, {pipeline_mode = #tpu.pipeline_mode<synchronous>, transform_indices = @transform_8, window_bounds = array<i64: 1, 256>}, {pipeline_mode = #tpu.pipeline_mode<synchronous>, transform_indices = @transform_9, window_bounds = array<i64: 256, 512>}, {pipeline_mode = #tpu.pipeline_mode<synchronous>, transform_indices = @transform_10, window_bounds = array<i64: 1, 512>}, {pipeline_mode = #tpu.pipeline_mode<synchronous>, transform_indices = @transform_11, window_bounds = array<i64: 1, 512>}, {pipeline_mode = #tpu.pipeline_mode<synchronous>, transform_indices = @transform_12, window_bounds = array<i64: 1, 512>}, {transform_indices = @transform_13, window_bounds = array<i64: 1, 512, 2048>}, {transform_indices = @transform_14, window_bounds = array<i64: 1, 2048>}, {transform_indices = @transform_15, window_bounds = array<i64: 8, 2048>}]} {
    %c0 = arith.constant 0 : index
    %c0_0 = arith.constant 0 : index
    %0 = vector.load %arg1[%c0, %c0_0] : memref<8x256xf32, #tpu.memory_space<vmem>>, vector<8x256xf32>
    %c0_1 = arith.constant 0 : index
    %c0_2 = arith.constant 0 : index
    %1 = vector.load %arg2[%c0_1, %c0_2] : memref<256x128xbf16, #tpu.memory_space<vmem>>, vector<256x128xbf16>
    %2 = arith.truncf %0 : vector<8x256xf32> to vector<8x256xbf16>
    %cst = arith.constant dense<0.000000e+00> : vector<8x128xf32>
    %3 = tpu.matmul %2, %1, %cst {dimension_numbers = #tpu.dot_dimension_numbers<[1], [0], [0], [1], [0, 0, 1, 1], [], []>} : vector<8x256xbf16>, vector<256x128xbf16>, vector<8x128xf32> -> vector<8x128xf32>
    %c0_3 = arith.constant 0 : index
    %c0_4 = arith.constant 0 : index
    %4 = vector.load %arg3[%c0_3, %c0_4] : memref<1x128xf32, #tpu.memory_space<vmem>>, vector<1x128xf32>
    %5 = vector.broadcast %4 : vector<1x128xf32> to vector<8x128xf32>
    %6 = arith.addf %3, %5 : vector<8x128xf32>
    %cst_5 = arith.constant 0.000000e+00 : f32
    %7 = vector.broadcast %cst_5 : f32 to vector<8x128xf32>
    %8 = arith.maximumf %6, %7 : vector<8x128xf32>
    %c0_6 = arith.constant 0 : index
    %c0_7 = arith.constant 0 : index
    %9 = vector.load %arg4[%c0_6, %c0_7] : memref<1x128xf32, #tpu.memory_space<vmem>>, vector<1x128xf32>
    %c0_8 = arith.constant 0 : index
    %c0_9 = arith.constant 0 : index
    %10 = vector.load %arg5[%c0_8, %c0_9] : memref<1x128xf32, #tpu.memory_space<vmem>>, vector<1x128xf32>
    %cst_10 = arith.constant dense<0.000000e+00> : vector<8xf32>
    %11 = vector.multi_reduction <add>, %8, %cst_10 [1] : vector<8x128xf32> to vector<8xf32>
    %12 = vector.shape_cast %11 : vector<8xf32> to vector<8x1xf32>
    %cst_11 = arith.constant 1.280000e+02 : f32
    %13 = vector.broadcast %cst_11 : f32 to vector<8x1xf32>
    %14 = arith.divf %12, %13 : vector<8x1xf32>
    %15 = vector.broadcast %14 : vector<8x1xf32> to vector<8x128xf32>
    %16 = arith.subf %8, %15 : vector<8x128xf32>
    %17 = vector.broadcast %14 : vector<8x1xf32> to vector<8x128xf32>
    %18 = arith.subf %8, %17 : vector<8x128xf32>
    %19 = arith.mulf %16, %18 : vector<8x128xf32>
    %cst_12 = arith.constant dense<0.000000e+00> : vector<8xf32>
    %20 = vector.multi_reduction <add>, %19, %cst_12 [1] : vector<8x128xf32> to vector<8xf32>
    %21 = vector.shape_cast %20 : vector<8xf32> to vector<8x1xf32>
    %cst_13 = arith.constant 1.280000e+02 : f32
    %22 = vector.broadcast %cst_13 : f32 to vector<8x1xf32>
    %23 = arith.divf %21, %22 : vector<8x1xf32>
    %24 = vector.broadcast %14 : vector<8x1xf32> to vector<8x128xf32>
    %25 = arith.subf %8, %24 : vector<8x128xf32>
    %cst_14 = arith.constant 9.99999974E-6 : f32
    %26 = vector.broadcast %cst_14 : f32 to vector<8x1xf32>
    %27 = arith.addf %23, %26 : vector<8x1xf32>
    %28 = math.rsqrt %27 : vector<8x1xf32>
    %29 = vector.broadcast %28 : vector<8x1xf32> to vector<8x128xf32>
    %30 = arith.mulf %25, %29 : vector<8x128xf32>
    %31 = vector.broadcast %9 : vector<1x128xf32> to vector<8x128xf32>
    %32 = arith.mulf %30, %31 : vector<8x128xf32>
    %33 = vector.broadcast %10 : vector<1x128xf32> to vector<8x128xf32>
    %34 = arith.addf %32, %33 : vector<8x128xf32>
    %c0_15 = arith.constant 0 : index
    %c0_16 = arith.constant 0 : index
    %35 = vector.load %arg6[%c0_15, %c0_16] : memref<128x256xbf16, #tpu.memory_space<vmem>>, vector<128x256xbf16>
    %36 = arith.truncf %34 : vector<8x128xf32> to vector<8x128xbf16>
    %cst_17 = arith.constant dense<0.000000e+00> : vector<8x256xf32>
    %37 = tpu.matmul %36, %35, %cst_17 {dimension_numbers = #tpu.dot_dimension_numbers<[1], [0], [0], [1], [0, 0, 1, 1], [], []>} : vector<8x128xbf16>, vector<128x256xbf16>, vector<8x256xf32> -> vector<8x256xf32>
    %c0_18 = arith.constant 0 : index
    %c0_19 = arith.constant 0 : index
    %38 = vector.load %arg7[%c0_18, %c0_19] : memref<1x256xf32, #tpu.memory_space<vmem>>, vector<1x256xf32>
    %39 = vector.broadcast %38 : vector<1x256xf32> to vector<8x256xf32>
    %40 = arith.addf %37, %39 : vector<8x256xf32>
    %cst_20 = arith.constant 0.000000e+00 : f32
    %41 = vector.broadcast %cst_20 : f32 to vector<8x256xf32>
    %42 = arith.maximumf %40, %41 : vector<8x256xf32>
    %c0_21 = arith.constant 0 : index
    %c0_22 = arith.constant 0 : index
    %43 = vector.load %arg8[%c0_21, %c0_22] : memref<1x256xf32, #tpu.memory_space<vmem>>, vector<1x256xf32>
    %c0_23 = arith.constant 0 : index
    %c0_24 = arith.constant 0 : index
    %44 = vector.load %arg9[%c0_23, %c0_24] : memref<1x256xf32, #tpu.memory_space<vmem>>, vector<1x256xf32>
    %cst_25 = arith.constant dense<0.000000e+00> : vector<8xf32>
    %45 = vector.multi_reduction <add>, %42, %cst_25 [1] : vector<8x256xf32> to vector<8xf32>
    %46 = vector.shape_cast %45 : vector<8xf32> to vector<8x1xf32>
    %cst_26 = arith.constant 2.560000e+02 : f32
    %47 = vector.broadcast %cst_26 : f32 to vector<8x1xf32>
    %48 = arith.divf %46, %47 : vector<8x1xf32>
    %49 = vector.broadcast %48 : vector<8x1xf32> to vector<8x256xf32>
    %50 = arith.subf %42, %49 : vector<8x256xf32>
    %51 = vector.broadcast %48 : vector<8x1xf32> to vector<8x256xf32>
    %52 = arith.subf %42, %51 : vector<8x256xf32>
    %53 = arith.mulf %50, %52 : vector<8x256xf32>
    %cst_27 = arith.constant dense<0.000000e+00> : vector<8xf32>
    %54 = vector.multi_reduction <add>, %53, %cst_27 [1] : vector<8x256xf32> to vector<8xf32>
    %55 = vector.shape_cast %54 : vector<8xf32> to vector<8x1xf32>
    %cst_28 = arith.constant 2.560000e+02 : f32
    %56 = vector.broadcast %cst_28 : f32 to vector<8x1xf32>
    %57 = arith.divf %55, %56 : vector<8x1xf32>
    %58 = vector.broadcast %48 : vector<8x1xf32> to vector<8x256xf32>
    %59 = arith.subf %42, %58 : vector<8x256xf32>
    %cst_29 = arith.constant 9.99999974E-6 : f32
    %60 = vector.broadcast %cst_29 : f32 to vector<8x1xf32>
    %61 = arith.addf %57, %60 : vector<8x1xf32>
    %62 = math.rsqrt %61 : vector<8x1xf32>
    %63 = vector.broadcast %62 : vector<8x1xf32> to vector<8x256xf32>
    %64 = arith.mulf %59, %63 : vector<8x256xf32>
    %65 = vector.broadcast %43 : vector<1x256xf32> to vector<8x256xf32>
    %66 = arith.mulf %64, %65 : vector<8x256xf32>
    %67 = vector.broadcast %44 : vector<1x256xf32> to vector<8x256xf32>
    %68 = arith.addf %66, %67 : vector<8x256xf32>
    %c0_30 = arith.constant 0 : index
    %c0_31 = arith.constant 0 : index
    %69 = vector.load %arg10[%c0_30, %c0_31] : memref<256x512xbf16, #tpu.memory_space<vmem>>, vector<256x512xbf16>
    %70 = arith.truncf %68 : vector<8x256xf32> to vector<8x256xbf16>
    %cst_32 = arith.constant dense<0.000000e+00> : vector<8x512xf32>
    %71 = tpu.matmul %70, %69, %cst_32 {dimension_numbers = #tpu.dot_dimension_numbers<[1], [0], [0], [1], [0, 0, 1, 1], [], []>} : vector<8x256xbf16>, vector<256x512xbf16>, vector<8x512xf32> -> vector<8x512xf32>
    %c0_33 = arith.constant 0 : index
    %c0_34 = arith.constant 0 : index
    %72 = vector.load %arg11[%c0_33, %c0_34] : memref<1x512xf32, #tpu.memory_space<vmem>>, vector<1x512xf32>
    %73 = vector.broadcast %72 : vector<1x512xf32> to vector<8x512xf32>
    %74 = arith.addf %71, %73 : vector<8x512xf32>
    %cst_35 = arith.constant 0.000000e+00 : f32
    %75 = vector.broadcast %cst_35 : f32 to vector<8x512xf32>
    %76 = arith.maximumf %74, %75 : vector<8x512xf32>
    %c0_36 = arith.constant 0 : index
    %c0_37 = arith.constant 0 : index
    %77 = vector.load %arg12[%c0_36, %c0_37] : memref<1x512xf32, #tpu.memory_space<vmem>>, vector<1x512xf32>
    %c0_38 = arith.constant 0 : index
    %c0_39 = arith.constant 0 : index
    %78 = vector.load %arg13[%c0_38, %c0_39] : memref<1x512xf32, #tpu.memory_space<vmem>>, vector<1x512xf32>
    %cst_40 = arith.constant dense<0.000000e+00> : vector<8xf32>
    %79 = vector.multi_reduction <add>, %76, %cst_40 [1] : vector<8x512xf32> to vector<8xf32>
    %80 = vector.shape_cast %79 : vector<8xf32> to vector<8x1xf32>
    %cst_41 = arith.constant 5.120000e+02 : f32
    %81 = vector.broadcast %cst_41 : f32 to vector<8x1xf32>
    %82 = arith.divf %80, %81 : vector<8x1xf32>
    %83 = vector.broadcast %82 : vector<8x1xf32> to vector<8x512xf32>
    %84 = arith.subf %76, %83 : vector<8x512xf32>
    %85 = vector.broadcast %82 : vector<8x1xf32> to vector<8x512xf32>
    %86 = arith.subf %76, %85 : vector<8x512xf32>
    %87 = arith.mulf %84, %86 : vector<8x512xf32>
    %cst_42 = arith.constant dense<0.000000e+00> : vector<8xf32>
    %88 = vector.multi_reduction <add>, %87, %cst_42 [1] : vector<8x512xf32> to vector<8xf32>
    %89 = vector.shape_cast %88 : vector<8xf32> to vector<8x1xf32>
    %cst_43 = arith.constant 5.120000e+02 : f32
    %90 = vector.broadcast %cst_43 : f32 to vector<8x1xf32>
    %91 = arith.divf %89, %90 : vector<8x1xf32>
    %92 = vector.broadcast %82 : vector<8x1xf32> to vector<8x512xf32>
    %93 = arith.subf %76, %92 : vector<8x512xf32>
    %cst_44 = arith.constant 9.99999974E-6 : f32
    %94 = vector.broadcast %cst_44 : f32 to vector<8x1xf32>
    %95 = arith.addf %91, %94 : vector<8x1xf32>
    %96 = math.rsqrt %95 : vector<8x1xf32>
    %97 = vector.broadcast %96 : vector<8x1xf32> to vector<8x512xf32>
    %98 = arith.mulf %93, %97 : vector<8x512xf32>
    %99 = vector.broadcast %77 : vector<1x512xf32> to vector<8x512xf32>
    %100 = arith.mulf %98, %99 : vector<8x512xf32>
    %101 = vector.broadcast %78 : vector<1x512xf32> to vector<8x512xf32>
    %102 = arith.addf %100, %101 : vector<8x512xf32>
    %103 = arith.truncf %102 : vector<8x512xf32> to vector<8x512xbf16>
    %c0_45 = arith.constant 0 : index
    %c0_46 = arith.constant 0 : index
    %c0_47 = arith.constant 0 : index
    %104 = vector.load %arg14[%c0_45, %c0_46, %c0_47] : memref<1x512x2048xbf16, #tpu.memory_space<vmem>>, vector<1x512x2048xbf16>
    %105 = vector.shape_cast %104 : vector<1x512x2048xbf16> to vector<512x2048xbf16>
    %cst_48 = arith.constant dense<0.000000e+00> : vector<8x2048xf32>
    %106 = tpu.matmul %103, %105, %cst_48 {dimension_numbers = #tpu.dot_dimension_numbers<[1], [0], [0], [1], [0, 0, 1, 1], [], []>} : vector<8x512xbf16>, vector<512x2048xbf16>, vector<8x2048xf32> -> vector<8x2048xf32>
    %c0_49 = arith.constant 0 : index
    %c0_50 = arith.constant 0 : index
    %107 = vector.load %arg15[%c0_49, %c0_50] : memref<1x2048xf32, #tpu.memory_space<vmem>>, vector<1x2048xf32>
    %108 = vector.broadcast %107 : vector<1x2048xf32> to vector<8x2048xf32>
    %109 = arith.addf %106, %108 : vector<8x2048xf32>
    %110 = arith.negf %109 : vector<8x2048xf32>
    %111 = math.exp %110 : vector<8x2048xf32>
    %cst_51 = arith.constant 1.000000e+00 : f32
    %112 = vector.broadcast %cst_51 : f32 to vector<8x2048xf32>
    %113 = arith.addf %112, %111 : vector<8x2048xf32>
    %114 = arith.divf %112, %113 : vector<8x2048xf32>
    %c0_52 = arith.constant 0 : index
    %c0_53 = arith.constant 0 : index
    %115 = vector.load %arg16[%c0_52, %c0_53] : memref<8x2048xf32, #tpu.memory_space<vmem>>, vector<8x2048xf32>
    tpu.vector_store %arg16[%c0_52, %c0_53], %114 {strides = array<i32>} : memref<8x2048xf32, #tpu.memory_space<vmem>>, vector<8x2048xf32>,
    return
  }
  func.func @transform_0(%arg0: i32) -> (i32, i32) {
    %c0_i32 = arith.constant 0 : i32
    %c0_i32_0 = arith.constant 0 : i32
    %c0_i32_1 = arith.constant 0 : i32
    return %c0_i32, %c0_i32_0 : i32, i32
  }
  func.func @transform_1(%arg0: i32) -> (i32, i32) {
    %c0_i32 = arith.constant 0 : i32
    %c0_i32_0 = arith.constant 0 : i32
    %c0_i32_1 = arith.constant 0 : i32
    return %c0_i32, %c0_i32_0 : i32, i32
  }
  func.func @transform_2(%arg0: i32) -> (i32, i32) {
    %c0_i32 = arith.constant 0 : i32
    %c0_i32_0 = arith.constant 0 : i32
    %c0_i32_1 = arith.constant 0 : i32
    return %c0_i32, %c0_i32_0 : i32, i32
  }
  func.func @transform_3(%arg0: i32) -> (i32, i32) {
    %c0_i32 = arith.constant 0 : i32
    %c0_i32_0 = arith.constant 0 : i32
    %c0_i32_1 = arith.constant 0 : i32
    return %c0_i32, %c0_i32_0 : i32, i32
  }
  func.func @transform_4(%arg0: i32) -> (i32, i32) {
    %c0_i32 = arith.constant 0 : i32
    %c0_i32_0 = arith.constant 0 : i32
    %c0_i32_1 = arith.constant 0 : i32
    return %c0_i32, %c0_i32_0 : i32, i32
  }
  func.func @transform_5(%arg0: i32) -> (i32, i32) {
    %c0_i32 = arith.constant 0 : i32
    %c0_i32_0 = arith.constant 0 : i32
    %c0_i32_1 = arith.constant 0 : i32
    return %c0_i32, %c0_i32_0 : i32, i32
  }
  func.func @transform_6(%arg0: i32) -> (i32, i32) {
    %c0_i32 = arith.constant 0 : i32
    %c0_i32_0 = arith.constant 0 : i32
    %c0_i32_1 = arith.constant 0 : i32
    return %c0_i32, %c0_i32_0 : i32, i32
  }
  func.func @transform_7(%arg0: i32) -> (i32, i32) {
    %c0_i32 = arith.constant 0 : i32
    %c0_i32_0 = arith.constant 0 : i32
    %c0_i32_1 = arith.constant 0 : i32
    return %c0_i32, %c0_i32_0 : i32, i32
  }
  func.func @transform_8(%arg0: i32) -> (i32, i32) {
    %c0_i32 = arith.constant 0 : i32
    %c0_i32_0 = arith.constant 0 : i32
    %c0_i32_1 = arith.constant 0 : i32
    return %c0_i32, %c0_i32_0 : i32, i32
  }
  func.func @transform_9(%arg0: i32) -> (i32, i32) {
    %c0_i32 = arith.constant 0 : i32
    %c0_i32_0 = arith.constant 0 : i32
    %c0_i32_1 = arith.constant 0 : i32
    return %c0_i32, %c0_i32_0 : i32, i32
  }
  func.func @transform_10(%arg0: i32) -> (i32, i32) {
    %c0_i32 = arith.constant 0 : i32
    %c0_i32_0 = arith.constant 0 : i32
    %c0_i32_1 = arith.constant 0 : i32
    return %c0_i32, %c0_i32_0 : i32, i32
  }
  func.func @transform_11(%arg0: i32) -> (i32, i32) {
    %c0_i32 = arith.constant 0 : i32
    %c0_i32_0 = arith.constant 0 : i32
    %c0_i32_1 = arith.constant 0 : i32
    return %c0_i32, %c0_i32_0 : i32, i32
  }
  func.func @transform_12(%arg0: i32) -> (i32, i32) {
    %c0_i32 = arith.constant 0 : i32
    %c0_i32_0 = arith.constant 0 : i32
    %c0_i32_1 = arith.constant 0 : i32
    return %c0_i32, %c0_i32_0 : i32, i32
  }
  func.func @transform_13(%arg0: i32) -> (i32, i32, i32) {
    %c0_i32 = arith.constant 0 : i32
    %c0_i32_0 = arith.constant 0 : i32
    %c0_i32_1 = arith.constant 0 : i32
    return %arg0, %c0_i32, %c0_i32_0 : i32, i32, i32
  }
  func.func @transform_14(%arg0: i32) -> (i32, i32) {
    %c0_i32 = arith.constant 0 : i32
    %c0_i32_0 = arith.constant 0 : i32
    return %c0_i32, %arg0 : i32, i32
  }
  func.func @transform_15(%arg0: i32) -> (i32, i32) {
    %c0_i32 = arith.constant 0 : i32
    %c0_i32_0 = arith.constant 0 : i32
    return %c0_i32, %arg0 : i32, i32
  }
}

</mosaic_0001>

<llo_original>
// kernel: tpu_custom_call.1
$region0: #{tpu_custom_call.1}
  #allocation0 [shape = 'u32[]', space=smem, size = 0x4, offset = 0x4, fixed_abs, tag = 'smem constant byte address 0x4 - core index']
  #allocation1 [shape = 'u32[144,128]{1,0:T(1,128)}', space=vmem, size = 0x12000, scoped, tag = 'internal scratch']
  %s0 = inlined_call_operand.hbm [shape: f32[8,256], index: 0, kind: input, shape index: {}]
  %s1 = inlined_call_operand.hbm [shape: bf16[256,128], index: 1, kind: input, shape index: {}]
  %s2 = inlined_call_operand.hbm [shape: f32[1,128], index: 2, kind: input, shape index: {}]
  %s3 = inlined_call_operand.hbm [shape: f32[1,128], index: 3, kind: input, shape index: {}]
  %s4 = inlined_call_operand.hbm [shape: f32[1,128], index: 4, kind: input, shape index: {}]
  %s5 = inlined_call_operand.hbm [shape: bf16[128,256], index: 5, kind: input, shape index: {}]
  %s6 = inlined_call_operand.hbm [shape: f32[1,256], index: 6, kind: input, shape index: {}]
  %s7 = inlined_call_operand.hbm [shape: f32[1,256], index: 7, kind: input, shape index: {}]
  %s8 = inlined_call_operand.hbm [shape: f32[1,256], index: 8, kind: input, shape index: {}]
  %s9 = inlined_call_operand.hbm [shape: bf16[256,512], index: 9, kind: input, shape index: {}]
  %s10 = inlined_call_operand.hbm [shape: f32[1,512], index: 10, kind: input, shape index: {}]
  %s11 = inlined_call_operand.hbm [shape: f32[1,512], index: 11, kind: input, shape index: {}]
  %s12 = inlined_call_operand.hbm [shape: f32[1,512], index: 12, kind: input, shape index: {}]
  %s13 = inlined_call_operand.hbm [shape: bf16[2,512,2048], index: 13, kind: input, shape index: {}]
  %s14 = inlined_call_operand.hbm [shape: f32[1,4096], index: 14, kind: input, shape index: {}]
  %s15 = inlined_call_operand.hbm [shape: f32[8,4096], index: 15, kind: output, shape index: {}]
  %s16 = sld [smem:[#allocation0]]
  $region153: #{tpu_custom_call.1} parent=0
    _
  %s18 = ssub.s32 1, %s16
  %s19 = scalar_select 0, %s18, %s16
  $region1: #{tpu_custom_call.1} parent=0
    #allocation2 [shape = 'u8[8192]{0}', space=vmem, size = 0x2000, scoped, tag = 'input window, operand 0, single buffered']
    #allocation3 [shape = 's32[2]{0}', space=sflag, size = 0x8, scoped, tag = 'scoped memory for tpu_custom_call.1']
    #allocation4 [shape = 's32[2]{0}', space=sflag, size = 0x8, scoped, tag = 'scoped memory for tpu_custom_call.1']
    #allocation5 [shape = 'u8[65536]{0}', space=vmem, size = 0x10000, scoped, tag = 'input window, operand 1, single buffered']
    #allocation6 [shape = 's32[1]{0}', space=sflag, size = 0x4, scoped, tag = 'scoped memory for tpu_custom_call.1']
    #allocation7 [shape = 'u8[512]{0}', space=vmem, size = 0x400, scoped, tag = 'input window, operand 2, single buffered']
    #allocation8 [shape = 'u8[512]{0}', space=vmem, size = 0x400, scoped, tag = 'input window, operand 3, single buffered']
    #allocation9 [shape = 's32[1]{0}', space=sflag, size = 0x4, scoped, tag = 'scoped memory for tpu_custom_call.1']
    #allocation10 [shape = 'u8[512]{0}', space=vmem, size = 0x400, scoped, tag = 'input window, operand 4, single buffered']
    #allocation11 [shape = 'u8[65536]{0}', space=vmem, size = 0x10000, scoped, tag = 'input window, operand 5, single buffered']
    #allocation12 [shape = 's32[1]{0}', space=sflag, size = 0x4, scoped, tag = 'scoped memory for tpu_custom_call.1']
    #allocation13 [shape = 'u8[1024]{0}', space=vmem, size = 0x400, scoped, tag = 'input window, operand 6, single buffered']
    #allocation14 [shape = 'u8[1024]{0}', space=vmem, size = 0x400, scoped, tag = 'input window, operand 7, single buffered']
    #allocation15 [shape = 's32[1]{0}', space=sflag, size = 0x4, scoped, tag = 'scoped memory for tpu_custom_call.1']
    #allocation16 [shape = 'u8[1024]{0}', space=vmem, size = 0x400, scoped, tag = 'input window, operand 8, single buffered']
    #allocation17 [shape = 'u8[262144]{0}', space=vmem, size = 0x40000, scoped, tag = 'input window, operand 9, single buffered']
    #allocation18 [shape = 's32[1]{0}', space=sflag, size = 0x4, scoped, tag = 'scoped memory for tpu_custom_call.1']
    #allocation19 [shape = 'u8[2048]{0}', space=vmem, size = 0x800, scoped, tag = 'input window, operand 10, single buffered']
    #allocation20 [shape = 'u8[2048]{0}', space=vmem, size = 0x800, scoped, tag = 'input window, operand 11, single buffered']
    #allocation21 [shape = 's32[1]{0}', space=sflag, size = 0x4, scoped, tag = 'scoped memory for tpu_custom_call.1']
    #allocation22 [shape = 'u8[2048]{0}', space=vmem, size = 0x800, scoped, tag = 'input window, operand 12, single buffered']
    #allocation23 [shape = 'u8[4194304]{0}', space=vmem, size = 0x400000, scoped, tag = 'input window, operand 13']
    #allocation24 [shape = 's32[2]{0}', space=sflag, size = 0x8, scoped, tag = 'scoped memory for tpu_custom_call.1']
    #allocation25 [shape = 'u8[16384]{0}', space=vmem, size = 0x4000, scoped, tag = 'input window, operand 14']
    #allocation26 [shape = 'u8[131072]{0}', space=vmem, size = 0x20000, scoped, tag = 'output window, operand 0']
    %20 = vsyncpa [#allocation3], 0
    %21 = vsyncpa [#allocation6], 0
    %22 = vsyncpa [#allocation9], 0
    %23 = vsyncpa [#allocation12], 0
    %24 = vsyncpa [#allocation15], 0
    %25 = vsyncpa [#allocation18], 0
    %26 = vsyncpa [#allocation21], 0
    %27 = vsyncpa [#allocation24], 0
    %s28 = scalar_lea.sflag [#allocation24], 1
    %29 = vsyncpa %s28, 0
    %30 = vsyncpa [#allocation4], 0
    %s31 = scalar_lea.sflag [#allocation4], 1
    %32 = vsyncpa %s31, 0
    loop: start=0, step=1, limit=4
    $region2: #{tpu_custom_call.1} parent=1 // loop_pre_header
      _
    $region3: #{tpu_custom_call.1} parent=1 // loop_header
      %s34 = sphi 0, %s38
      %p35 = scmp.ge.s32.totalorder %s34, 4
      %s42 = sphi 0, %s42
      %s44 = sphi 0, %s42
      %s45 = sphi 0, %s44
      %s59 = sphi 0, %s45
      %s63 = sphi 0, %s63
      %s65 = sphi 0, %s63
      %s66 = sphi 0, %s65
      %s80 = sphi 0, %s66
      %s84 = sphi 0, %s84
      %s86 = sphi 0, %s84
      %s87 = sphi 0, %s86
      %s101 = sphi 0, %s87
      %s105 = sphi 0, %s105
      %s107 = sphi 0, %s105
      %s108 = sphi 0, %s107
      %s122 = sphi 0, %s108
      %s126 = sphi 0, %s126
      %s128 = sphi 0, %s126
      %s129 = sphi 0, %s128
      %s143 = sphi 0, %s129
      %s147 = sphi 0, %s147
      %s149 = sphi 0, %s147
      %s150 = sphi 0, %s149
      %s164 = sphi 0, %s150
      %s168 = sphi 0, %s168
      %s170 = sphi 0, %s168
      %s171 = sphi 0, %s170
      %s185 = sphi 0, %s171
      %s189 = sphi 0, %s189
      %s191 = sphi 0, %s189
      %s192 = sphi 0, %s191
      %s206 = sphi 0, %s192
      %s210 = sphi 0, %s210
      %s212 = sphi 0, %s210
      %s213 = sphi 0, %s212
      %s227 = sphi 0, %s213
      %s231 = sphi 0, %s231
      %s233 = sphi 0, %s231
      %s234 = sphi 0, %s233
      %s248 = sphi 0, %s234
      %s252 = sphi 0, %s252
      %s254 = sphi 0, %s252
      %s255 = sphi 0, %s254
      %s269 = sphi 0, %s255
      %s273 = sphi 0, %s273
      %s275 = sphi 0, %s273
      %s276 = sphi 0, %s275
      %s290 = sphi 0, %s276
      %s294 = sphi 0, %s294
      %s296 = sphi 0, %s294
      %s297 = sphi 0, %s296
      %s311 = sphi 0, %s297
      %s317 = sphi 0, %s319
      %s320 = sphi 0, %s317
      %s321 = sphi 0, %s320
      %s337 = sphi 0, %s321
      %s343 = sphi 0, %s345
      %s346 = sphi 0, %s343
      %s347 = sphi 0, %s346
      %s363 = sphi 0, %s347
      %s369 = sphi 0, %s371
      %s372 = sphi 0, %s369
      %s373 = sphi 0, %s372
      %s389 = sphi 0, %s373
    $region4: #{tpu_custom_call.1} parent=1 // loop_header_branch
      %37 = sbr.rel (%p35) target = $region8
    $region5: #{tpu_custom_call.1} parent=1 // loop_body
      %s39 = ssub.s32 %s34, 1
      %s40 = ssub.s32 %s34, 2
      %s41 = sadd.s32 %s34, 1
      %s43 = sadd.s32 %s42, 1
      %p46 = scmp.eq.s32.totalorder %s34, 1
      %p47 = scmp.ne.s32.totalorder %s42, %s44
      %p48 = scmp.eq.s32.totalorder %s34, 0
      %p49 = por %p47, %p48
      %p50 = scmp.ne.s32.totalorder %s42, %s44
      %p51 = scmp.eq.s32.totalorder %s39, 1
      %p52 = por %p50, %p51
      %p53 = scmp.ne.s32.totalorder %s44, %s45
      %p54 = scmp.eq.s32.totalorder %s39, 0
      %p55 = por %p53, %p54
      %p56 = scmp.ne.s32.totalorder %s44, %s45
      %p57 = scmp.eq.s32.totalorder %s40, 1
      %p58 = por %p56, %p57
      %p60 = scmp.ne.s32.totalorder %s45, %s59
      %p61 = scmp.eq.s32.totalorder %s40, 0
      %p62 = por %p60, %p61
      %s64 = sadd.s32 %s63, 1
      %p67 = scmp.eq.s32.totalorder %s34, 1
      %p68 = scmp.ne.s32.totalorder %s63, %s65
      %p69 = scmp.eq.s32.totalorder %s34, 0
      %p70 = por %p68, %p69
      %p71 = scmp.ne.s32.totalorder %s63, %s65
      %p72 = scmp.eq.s32.totalorder %s39, 1
      %p73 = por %p71, %p72
      %p74 = scmp.ne.s32.totalorder %s65, %s66
      %p75 = scmp.eq.s32.totalorder %s39, 0
      %p76 = por %p74, %p75
      %p77 = scmp.ne.s32.totalorder %s65, %s66
      %p78 = scmp.eq.s32.totalorder %s40, 1
      %p79 = por %p77, %p78
      %p81 = scmp.ne.s32.totalorder %s66, %s80
      %p82 = scmp.eq.s32.totalorder %s40, 0
      %p83 = por %p81, %p82
      %s85 = sadd.s32 %s84, 1
      %p88 = scmp.eq.s32.totalorder %s34, 1
      %p89 = scmp.ne.s32.totalorder %s84, %s86
      %p90 = scmp.eq.s32.totalorder %s34, 0
      %p91 = por %p89, %p90
      %p92 = scmp.ne.s32.totalorder %s84, %s86
      %p93 = scmp.eq.s32.totalorder %s39, 1
      %p94 = por %p92, %p93
      %p95 = scmp.ne.s32.totalorder %s86, %s87
      %p96 = scmp.eq.s32.totalorder %s39, 0
      %p97 = por %p95, %p96
      %p98 = scmp.ne.s32.totalorder %s86, %s87
      %p99 = scmp.eq.s32.totalorder %s40, 1
      %p100 = por %p98, %p99
      %p102 = scmp.ne.s32.totalorder %s87, %s101
      %p103 = scmp.eq.s32.totalorder %s40, 0
      %p104 = por %p102, %p103
      %s106 = sadd.s32 %s105, 1
      %p109 = scmp.eq.s32.totalorder %s34, 1
      %p110 = scmp.ne.s32.totalorder %s105, %s107
      %p111 = scmp.eq.s32.totalorder %s34, 0
      %p112 = por %p110, %p111
      %p113 = scmp.ne.s32.totalorder %s105, %s107
      %p114 = scmp.eq.s32.totalorder %s39, 1
      %p115 = por %p113, %p114
      %p116 = scmp.ne.s32.totalorder %s107, %s108
      %p117 = scmp.eq.s32.totalorder %s39, 0
      %p118 = por %p116, %p117
      %p119 = scmp.ne.s32.totalorder %s107, %s108
      %p120 = scmp.eq.s32.totalorder %s40, 1
      %p121 = por %p119, %p120
      %p123 = scmp.ne.s32.totalorder %s108, %s122
      %p124 = scmp.eq.s32.totalorder %s40, 0
      %p125 = por %p123, %p124
      %s127 = sadd.s32 %s126, 1
      %p130 = scmp.eq.s32.totalorder %s34, 1
      %p131 = scmp.ne.s32.totalorder %s126, %s128
      %p132 = scmp.eq.s32.totalorder %s34, 0
      %p133 = por %p131, %p132
      %p134 = scmp.ne.s32.totalorder %s126, %s128
      %p135 = scmp.eq.s32.totalorder %s39, 1
      %p136 = por %p134, %p135
      %p137 = scmp.ne.s32.totalorder %s128, %s129
      %p138 = scmp.eq.s32.totalorder %s39, 0
      %p139 = por %p137, %p138
      %p140 = scmp.ne.s32.totalorder %s128, %s129
      %p141 = scmp.eq.s32.totalorder %s40, 1
      %p142 = por %p140, %p141
      %p144 = scmp.ne.s32.totalorder %s129, %s143
      %p145 = scmp.eq.s32.totalorder %s40, 0
      %p146 = por %p144, %p145
      %s148 = sadd.s32 %s147, 1
      %p151 = scmp.eq.s32.totalorder %s34, 1
      %p152 = scmp.ne.s32.totalorder %s147, %s149
      %p153 = scmp.eq.s32.totalorder %s34, 0
      %p154 = por %p152, %p153
      %p155 = scmp.ne.s32.totalorder %s147, %s149
      %p156 = scmp.eq.s32.totalorder %s39, 1
      %p157 = por %p155, %p156
      %p158 = scmp.ne.s32.totalorder %s149, %s150
      %p159 = scmp.eq.s32.totalorder %s39, 0
      %p160 = por %p158, %p159
      %p161 = scmp.ne.s32.totalorder %s149, %s150
      %p162 = scmp.eq.s32.totalorder %s40, 1
      %p163 = por %p161, %p162
      %p165 = scmp.ne.s32.totalorder %s150, %s164
      %p166 = scmp.eq.s32.totalorder %s40, 0
      %p167 = por %p165, %p166
      %s169 = sadd.s32 %s168, 1
      %p172 = scmp.eq.s32.totalorder %s34, 1
      %p173 = scmp.ne.s32.totalorder %s168, %s170
      %p174 = scmp.eq.s32.totalorder %s34, 0
      %p175 = por %p173, %p174
      %p176 = scmp.ne.s32.totalorder %s168, %s170
      %p177 = scmp.eq.s32.totalorder %s39, 1
      %p178 = por %p176, %p177
      %p179 = scmp.ne.s32.totalorder %s170, %s171
      %p180 = scmp.eq.s32.totalorder %s39, 0
      %p181 = por %p179, %p180
      %p182 = scmp.ne.s32.totalorder %s170, %s171
      %p183 = scmp.eq.s32.totalorder %s40, 1
      %p184 = por %p182, %p183
      %p186 = scmp.ne.s32.totalorder %s171, %s185
      %p187 = scmp.eq.s32.totalorder %s40, 0
      %p188 = por %p186, %p187
      %s190 = sadd.s32 %s189, 1
      %p193 = scmp.eq.s32.totalorder %s34, 1
      %p194 = scmp.ne.s32.totalorder %s189, %s191
      %p195 = scmp.eq.s32.totalorder %s34, 0
      %p196 = por %p194, %p195
      %p197 = scmp.ne.s32.totalorder %s189, %s191
      %p198 = scmp.eq.s32.totalorder %s39, 1
      %p199 = por %p197, %p198
      %p200 = scmp.ne.s32.totalorder %s191, %s192
      %p201 = scmp.eq.s32.totalorder %s39, 0
      %p202 = por %p200, %p201
      %p203 = scmp.ne.s32.totalorder %s191, %s192
      %p204 = scmp.eq.s32.totalorder %s40, 1
      %p205 = por %p203, %p204
      %p207 = scmp.ne.s32.totalorder %s192, %s206
      %p208 = scmp.eq.s32.totalorder %s40, 0
      %p209 = por %p207, %p208
      %s211 = sadd.s32 %s210, 1
      %p214 = scmp.eq.s32.totalorder %s34, 1
      %p215 = scmp.ne.s32.totalorder %s210, %s212
      %p216 = scmp.eq.s32.totalorder %s34, 0
      %p217 = por %p215, %p216
      %p218 = scmp.ne.s32.totalorder %s210, %s212
      %p219 = scmp.eq.s32.totalorder %s39, 1
      %p220 = por %p218, %p219
      %p221 = scmp.ne.s32.totalorder %s212, %s213
      %p222 = scmp.eq.s32.totalorder %s39, 0
      %p223 = por %p221, %p222
      %p224 = scmp.ne.s32.totalorder %s212, %s213
      %p225 = scmp.eq.s32.totalorder %s40, 1
      %p226 = por %p224, %p225
      %p228 = scmp.ne.s32.totalorder %s213, %s227
      %p229 = scmp.eq.s32.totalorder %s40, 0
      %p230 = por %p228, %p229
      %s232 = sadd.s32 %s231, 1
      %p235 = scmp.eq.s32.totalorder %s34, 1
      %p236 = scmp.ne.s32.totalorder %s231, %s233
      %p237 = scmp.eq.s32.totalorder %s34, 0
      %p238 = por %p236, %p237
      %p239 = scmp.ne.s32.totalorder %s231, %s233
      %p240 = scmp.eq.s32.totalorder %s39, 1
      %p241 = por %p239, %p240
      %p242 = scmp.ne.s32.totalorder %s233, %s234
      %p243 = scmp.eq.s32.totalorder %s39, 0
      %p244 = por %p242, %p243
      %p245 = scmp.ne.s32.totalorder %s233, %s234
      %p246 = scmp.eq.s32.totalorder %s40, 1
      %p247 = por %p245, %p246
      %p249 = scmp.ne.s32.totalorder %s234, %s248
      %p250 = scmp.eq.s32.totalorder %s40, 0
      %p251 = por %p249, %p250
      %s253 = sadd.s32 %s252, 1
      %p256 = scmp.eq.s32.totalorder %s34, 1
      %p257 = scmp.ne.s32.totalorder %s252, %s254
      %p258 = scmp.eq.s32.totalorder %s34, 0
      %p259 = por %p257, %p258
      %p260 = scmp.ne.s32.totalorder %s252, %s254
      %p261 = scmp.eq.s32.totalorder %s39, 1
      %p262 = por %p260, %p261
      %p263 = scmp.ne.s32.totalorder %s254, %s255
      %p264 = scmp.eq.s32.totalorder %s39, 0
      %p265 = por %p263, %p264
      %p266 = scmp.ne.s32.totalorder %s254, %s255
      %p267 = scmp.eq.s32.totalorder %s40, 1
      %p268 = por %p266, %p267
      %p270 = scmp.ne.s32.totalorder %s255, %s269
      %p271 = scmp.eq.s32.totalorder %s40, 0
      %p272 = por %p270, %p271
      %s274 = sadd.s32 %s273, 1
      %p277 = scmp.eq.s32.totalorder %s34, 1
      %p278 = scmp.ne.s32.totalorder %s273, %s275
      %p279 = scmp.eq.s32.totalorder %s34, 0
      %p280 = por %p278, %p279
      %p281 = scmp.ne.s32.totalorder %s273, %s275
      %p282 = scmp.eq.s32.totalorder %s39, 1
      %p283 = por %p281, %p282
      %p284 = scmp.ne.s32.totalorder %s275, %s276
      %p285 = scmp.eq.s32.totalorder %s39, 0
      %p286 = por %p284, %p285
      %p287 = scmp.ne.s32.totalorder %s275, %s276
      %p288 = scmp.eq.s32.totalorder %s40, 1
      %p289 = por %p287, %p288
      %p291 = scmp.ne.s32.totalorder %s276, %s290
      %p292 = scmp.eq.s32.totalorder %s40, 0
      %p293 = por %p291, %p292
      %s295 = sadd.s32 %s294, 1
      %p298 = scmp.eq.s32.totalorder %s34, 1
      %p299 = scmp.ne.s32.totalorder %s294, %s296
      %p300 = scmp.eq.s32.totalorder %s34, 0
      %p301 = por %p299, %p300
      %p302 = scmp.ne.s32.totalorder %s294, %s296
      %p303 = scmp.eq.s32.totalorder %s39, 1
      %p304 = por %p302, %p303
      %p305 = scmp.ne.s32.totalorder %s296, %s297
      %p306 = scmp.eq.s32.totalorder %s39, 0
      %p307 = por %p305, %p306
      %p308 = scmp.ne.s32.totalorder %s296, %s297
      %p309 = scmp.eq.s32.totalorder %s40, 1
      %p310 = por %p308, %p309
      %p312 = scmp.ne.s32.totalorder %s297, %s311
      %p313 = scmp.eq.s32.totalorder %s40, 0
      %p314 = por %p312, %p313
      %s315 = ssub.s32 %s34, %s41
      %p316 = scmp.eq.s32.totalorder %s315, 0
      %s318 = sadd.s32 %s317, 1
      %s319 = scalar_select %p316, %s317, %s318
      %p322 = pneg %p316
      %p323 = scmp.eq.s32.totalorder %s34, 1
      %p324 = por %p322, %p323
      %p325 = scmp.ne.s32.totalorder %s317, %s320
      %p326 = scmp.eq.s32.totalorder %s34, 0
      %p327 = por %p325, %p326
      %p328 = scmp.ne.s32.totalorder %s317, %s320
      %p329 = scmp.eq.s32.totalorder %s39, 1
      %p330 = por %p328, %p329
      %p331 = scmp.ne.s32.totalorder %s320, %s321
      %p332 = scmp.eq.s32.totalorder %s39, 0
      %p333 = por %p331, %p332
      %p334 = scmp.ne.s32.totalorder %s320, %s321
      %p335 = scmp.eq.s32.totalorder %s40, 1
      %p336 = por %p334, %p335
      %p338 = scmp.ne.s32.totalorder %s321, %s337
      %p339 = scmp.eq.s32.totalorder %s40, 0
      %p340 = por %p338, %p339
      %s341 = ssub.s32 %s34, %s41
      %p342 = scmp.eq.s32.totalorder %s341, 0
      %s344 = sadd.s32 %s343, 1
      %s345 = scalar_select %p342, %s343, %s344
      %p348 = pneg %p342
      %p349 = scmp.eq.s32.totalorder %s34, 1
      %p350 = por %p348, %p349
      %p351 = scmp.ne.s32.totalorder %s343, %s346
      %p352 = scmp.eq.s32.totalorder %s34, 0
      %p353 = por %p351, %p352
      %p354 = scmp.ne.s32.totalorder %s343, %s346
      %p355 = scmp.eq.s32.totalorder %s39, 1
      %p356 = por %p354, %p355
      %p357 = scmp.ne.s32.totalorder %s346, %s347
      %p358 = scmp.eq.s32.totalorder %s39, 0
      %p359 = por %p357, %p358
      %p360 = scmp.ne.s32.totalorder %s346, %s347
      %p361 = scmp.eq.s32.totalorder %s40, 1
      %p362 = por %p360, %p361
      %p364 = scmp.ne.s32.totalorder %s347, %s363
      %p365 = scmp.eq.s32.totalorder %s40, 0
      %p366 = por %p364, %p365
      %s367 = ssub.s32 %s34, %s41
      %p368 = scmp.eq.s32.totalorder %s367, 0
      %s370 = sadd.s32 %s369, 1
      %s371 = scalar_select %p368, %s369, %s370
      %p374 = pneg %p368
      %p375 = scmp.eq.s32.totalorder %s34, 1
      %p376 = por %p374, %p375
      %p377 = scmp.ne.s32.totalorder %s369, %s372
      %p378 = scmp.eq.s32.totalorder %s34, 0
      %p379 = por %p377, %p378
      %p380 = scmp.ne.s32.totalorder %s369, %s372
      %p381 = scmp.eq.s32.totalorder %s39, 1
      %p382 = por %p380, %p381
      %p383 = scmp.ne.s32.totalorder %s372, %s373
      %p384 = scmp.eq.s32.totalorder %s39, 0
      %p385 = por %p383, %p384
      %p386 = scmp.ne.s32.totalorder %s372, %s373
      %p387 = scmp.eq.s32.totalorder %s40, 1
      %p388 = por %p386, %p387
      %p390 = scmp.ne.s32.totalorder %s373, %s389
      %p391 = scmp.eq.s32.totalorder %s40, 0
      %p392 = por %p390, %p391
      %p393 = scmp.le.s32.totalorder 1, %s34
      %p394 = scmp.lt.s32.totalorder %s34, 3
      %p395 = pnand %p393, %p394
      %p396 = pneg %p395
      // Predicated region
      $region9: #{tpu_custom_call.1} parent=5 // pred_check
        _
      $region10: #{tpu_custom_call.1} parent=5 // pred_check_branch
        %398 = sbr.rel (%p395) target = $region12
      $region11: #{tpu_custom_call.1} parent=5 // pred_region
        %s399 = ssub.s32 %s34, 1
        // Predicated region
        $region13: #{tpu_custom_call.1} parent=11 // pred_check
          %p400 = pneg %p55
        $region14: #{tpu_custom_call.1} parent=11 // pred_check_branch
          %402 = sbr.rel (%p400) target = $region16
        $region15: #{tpu_custom_call.1} parent=11 // pred_region
          %s404 = ssub.s32 256, 256
          %405 = vsyncadd [#allocation3], %s404
          %s407 = sshll.u32 [#allocation2], 4
          %s408 = int_to_ptr.vmem [resolvable:$true] %s407
          %410 = dma.hbm_to_vmem [thread:$0]  %s0, 256, %s408, [#allocation3]
        $region16: #{tpu_custom_call.1} parent=11 // pred_fallthru
          _
        // Predicated region
        $region17: #{tpu_custom_call.1} parent=11 // pred_check
          %p411 = pneg %p76
        $region18: #{tpu_custom_call.1} parent=11 // pred_check_branch
          %413 = sbr.rel (%p411) target = $region20
        $region19: #{tpu_custom_call.1} parent=11 // pred_region
          %s415 = ssub.s32 2048, 2048
          %416 = vsyncadd [#allocation6], %s415
          %s417 = sshll.u32 [#allocation5], 4
          %s418 = int_to_ptr.vmem [resolvable:$true] %s417
          %423 = dma.hbm_to_vmem [thread:$0]  %s1, 2048, %s418, [#allocation6], 64, 64, 4
        $region20: #{tpu_custom_call.1} parent=11 // pred_fallthru
          _
        // Predicated region
        $region21: #{tpu_custom_call.1} parent=11 // pred_check
          %p424 = pneg %p97
        $region22: #{tpu_custom_call.1} parent=11 // pred_check_branch
          %426 = sbr.rel (%p424) target = $region24
        $region23: #{tpu_custom_call.1} parent=11 // pred_region
          %s428 = ssub.s32 16, 16
          %429 = vsyncadd [#allocation6], %s428
          %s431 = sshll.u32 [#allocation7], 4
          %s432 = int_to_ptr.vmem [resolvable:$true] %s431
          %434 = dma.hbm_to_vmem [thread:$0]  %s2, 16, %s432, [#allocation6]
        $region24: #{tpu_custom_call.1} parent=11 // pred_fallthru
          _
        // Predicated region
        $region25: #{tpu_custom_call.1} parent=11 // pred_check
          %p435 = pneg %p118
        $region26: #{tpu_custom_call.1} parent=11 // pred_check_branch
          %437 = sbr.rel (%p435) target = $region28
        $region27: #{tpu_custom_call.1} parent=11 // pred_region
          %s439 = ssub.s32 16, 16
          %440 = vsyncadd [#allocation9], %s439
          %s442 = sshll.u32 [#allocation8], 4
          %s443 = int_to_ptr.vmem [resolvable:$true] %s442
          %445 = dma.hbm_to_vmem [thread:$0]  %s3, 16, %s443, [#allocation9]
        $region28: #{tpu_custom_call.1} parent=11 // pred_fallthru
          _
        // Predicated region
        $region29: #{tpu_custom_call.1} parent=11 // pred_check
          %p446 = pneg %p139
        $region30: #{tpu_custom_call.1} parent=11 // pred_check_branch
          %448 = sbr.rel (%p446) target = $region32
        $region31: #{tpu_custom_call.1} parent=11 // pred_region
          %s450 = ssub.s32 16, 16
          %451 = vsyncadd [#allocation9], %s450
          %s453 = sshll.u32 [#allocation10], 4
          %s454 = int_to_ptr.vmem [resolvable:$true] %s453
          %456 = dma.hbm_to_vmem [thread:$0]  %s4, 16, %s454, [#allocation9]
        $region32: #{tpu_custom_call.1} parent=11 // pred_fallthru
          _
        // Predicated region
        $region33: #{tpu_custom_call.1} parent=11 // pred_check
          %p457 = pneg %p160
        $region34: #{tpu_custom_call.1} parent=11 // pred_check_branch
          %459 = sbr.rel (%p457) target = $region36
        $region35: #{tpu_custom_call.1} parent=11 // pred_region
          %s461 = ssub.s32 2048, 2048
          %462 = vsyncadd [#allocation12], %s461
          %s463 = sshll.u32 [#allocation11], 4
          %s464 = int_to_ptr.vmem [resolvable:$true] %s463
          %469 = dma.hbm_to_vmem [thread:$0]  %s5, 2048, %s464, [#allocation12], 128, 128, 8
        $region36: #{tpu_custom_call.1} parent=11 // pred_fallthru
          _
        // Predicated region
        $region37: #{tpu_custom_call.1} parent=11 // pred_check
          %p470 = pneg %p181
        $region38: #{tpu_custom_call.1} parent=11 // pred_check_branch
          %472 = sbr.rel (%p470) target = $region40
        $region39: #{tpu_custom_call.1} parent=11 // pred_region
          %s474 = ssub.s32 32, 32
          %475 = vsyncadd [#allocation12], %s474
          %s477 = sshll.u32 [#allocation13], 4
          %s478 = int_to_ptr.vmem [resolvable:$true] %s477
          %480 = dma.hbm_to_vmem [thread:$0]  %s6, 32, %s478, [#allocation12]
        $region40: #{tpu_custom_call.1} parent=11 // pred_fallthru
          _
        // Predicated region
        $region41: #{tpu_custom_call.1} parent=11 // pred_check
          %p481 = pneg %p202
        $region42: #{tpu_custom_call.1} parent=11 // pred_check_branch
          %483 = sbr.rel (%p481) target = $region44
        $region43: #{tpu_custom_call.1} parent=11 // pred_region
          %s485 = ssub.s32 32, 32
          %486 = vsyncadd [#allocation15], %s485
          %s488 = sshll.u32 [#allocation14], 4
          %s489 = int_to_ptr.vmem [resolvable:$true] %s488
          %491 = dma.hbm_to_vmem [thread:$0]  %s7, 32, %s489, [#allocation15]
        $region44: #{tpu_custom_call.1} parent=11 // pred_fallthru
          _
        // Predicated region
        $region45: #{tpu_custom_call.1} parent=11 // pred_check
          %p492 = pneg %p223
        $region46: #{tpu_custom_call.1} parent=11 // pred_check_branch
          %494 = sbr.rel (%p492) target = $region48
        $region47: #{tpu_custom_call.1} parent=11 // pred_region
          %s496 = ssub.s32 32, 32
          %497 = vsyncadd [#allocation15], %s496
          %s499 = sshll.u32 [#allocation16], 4
          %s500 = int_to_ptr.vmem [resolvable:$true] %s499
          %502 = dma.hbm_to_vmem [thread:$0]  %s8, 32, %s500, [#allocation15]
        $region48: #{tpu_custom_call.1} parent=11 // pred_fallthru
          _
        // Predicated region
        $region49: #{tpu_custom_call.1} parent=11 // pred_check
          %p503 = pneg %p244
        $region50: #{tpu_custom_call.1} parent=11 // pred_check_branch
          %505 = sbr.rel (%p503) target = $region52
        $region51: #{tpu_custom_call.1} parent=11 // pred_region
          %s507 = ssub.s32 8192, 8192
          %508 = vsyncadd [#allocation18], %s507
          %s509 = sshll.u32 [#allocation17], 4
          %s510 = int_to_ptr.vmem [resolvable:$true] %s509
          %515 = dma.hbm_to_vmem [thread:$0]  %s9, 8192, %s510, [#allocation18], 256, 256, 16
        $region52: #{tpu_custom_call.1} parent=11 // pred_fallthru
          _
        // Predicated region
        $region53: #{tpu_custom_call.1} parent=11 // pred_check
          %p516 = pneg %p265
        $region54: #{tpu_custom_call.1} parent=11 // pred_check_branch
          %518 = sbr.rel (%p516) target = $region56
        $region55: #{tpu_custom_call.1} parent=11 // pred_region
          %s520 = ssub.s32 64, 64
          %521 = vsyncadd [#allocation18], %s520
          %s523 = sshll.u32 [#allocation19], 4
          %s524 = int_to_ptr.vmem [resolvable:$true] %s523
          %526 = dma.hbm_to_vmem [thread:$0]  %s10, 64, %s524, [#allocation18]
        $region56: #{tpu_custom_call.1} parent=11 // pred_fallthru
          _
        // Predicated region
        $region57: #{tpu_custom_call.1} parent=11 // pred_check
          %p527 = pneg %p286
        $region58: #{tpu_custom_call.1} parent=11 // pred_check_branch
          %529 = sbr.rel (%p527) target = $region60
        $region59: #{tpu_custom_call.1} parent=11 // pred_region
          %s531 = ssub.s32 64, 64
          %532 = vsyncadd [#allocation21], %s531
          %s534 = sshll.u32 [#allocation20], 4
          %s535 = int_to_ptr.vmem [resolvable:$true] %s534
          %537 = dma.hbm_to_vmem [thread:$0]  %s11, 64, %s535, [#allocation21]
        $region60: #{tpu_custom_call.1} parent=11 // pred_fallthru
          _
        // Predicated region
        $region61: #{tpu_custom_call.1} parent=11 // pred_check
          %p538 = pneg %p307
        $region62: #{tpu_custom_call.1} parent=11 // pred_check_branch
          %540 = sbr.rel (%p538) target = $region64
        $region63: #{tpu_custom_call.1} parent=11 // pred_region
          %s542 = ssub.s32 64, 64
          %543 = vsyncadd [#allocation21], %s542
          %s545 = sshll.u32 [#allocation22], 4
          %s546 = int_to_ptr.vmem [resolvable:$true] %s545
          %548 = dma.hbm_to_vmem [thread:$0]  %s12, 64, %s546, [#allocation21]
        $region64: #{tpu_custom_call.1} parent=11 // pred_fallthru
          _
      $region12: #{tpu_custom_call.1} parent=5 // pred_fallthru
        _
      %p549 = scmp.lt.s32.totalorder %s34, 2
      // Predicated region
      $region65: #{tpu_custom_call.1} parent=5 // pred_check
        %p550 = pneg %p549
      $region66: #{tpu_custom_call.1} parent=5 // pred_check_branch
        %552 = sbr.rel (%p550) target = $region68
      $region67: #{tpu_custom_call.1} parent=5 // pred_region
        // Predicated region
        $region69: #{tpu_custom_call.1} parent=67 // pred_check
          %p553 = pneg %p327
        $region70: #{tpu_custom_call.1} parent=67 // pred_check_branch
          %555 = sbr.rel (%p553) target = $region72
        $region71: #{tpu_custom_call.1} parent=67 // pred_region
          %s556 = sand.u32 %s34, 1
          %s557 = scalar_lea.sflag [#allocation24], %s556
          %s558 = sand.u32 %s317, 1
          %s559 = smul.addr %s558, 4096
          %s560 = scalar_lea.vmem [#allocation23], %s559
          %s562 = ssub.s32 65536, 65536
          %563 = vsyncadd %s557, %s562
          %s564 = smul.addr %s34, 1024
          %s565 = smul.addr %s564, 64
          %s566 = scalar_lea.hbm %s13, %s565
          %s567 = sshll.u32 %s560, 4
          %s568 = int_to_ptr.vmem [resolvable:$true] %s567
          %573 = dma.hbm_to_vmem [thread:$0]  %s566, 65536, %s568, %s557, 1024, 1024, 64
        $region72: #{tpu_custom_call.1} parent=67 // pred_fallthru
          _
        // Predicated region
        $region73: #{tpu_custom_call.1} parent=67 // pred_check
          %p574 = pneg %p353
        $region74: #{tpu_custom_call.1} parent=67 // pred_check_branch
          %576 = sbr.rel (%p574) target = $region76
        $region75: #{tpu_custom_call.1} parent=67 // pred_region
          %s577 = sand.u32 %s34, 1
          %s578 = scalar_lea.sflag [#allocation24], %s577
          %s579 = sand.u32 %s343, 1
          %s580 = smul.addr %s579, 16
          %s581 = scalar_lea.vmem [#allocation25], %s580
          %s582 = smul.u32 16, %s34
          %s584 = ssub.s32 256, 256
          %585 = vsyncadd %s578, %s584
          %s586 = smul.addr %s582, 16
          %s587 = scalar_lea.hbm %s14, %s586
          %s589 = sshll.u32 %s581, 4
          %s590 = int_to_ptr.vmem [resolvable:$true] %s589
          %592 = dma.hbm_to_vmem [thread:$0]  %s587, 256, %s590, %s578
        $region76: #{tpu_custom_call.1} parent=67 // pred_fallthru
          _
      $region68: #{tpu_custom_call.1} parent=5 // pred_fallthru
        _
      %p593 = scmp.le.s32.totalorder 1, %s34
      %p594 = scmp.lt.s32.totalorder %s34, 3
      %p595 = pnand %p593, %p594
      %p596 = pneg %p595
      // Predicated region
      $region77: #{tpu_custom_call.1} parent=5 // pred_check
        _
      $region78: #{tpu_custom_call.1} parent=5 // pred_check_branch
        %598 = sbr.rel (%p595) target = $region80
      $region79: #{tpu_custom_call.1} parent=5 // pred_region
        %s599 = ssub.s32 %s34, 1
        // Predicated region
        $region81: #{tpu_custom_call.1} parent=79 // pred_check
          %p600 = pneg %p55
        $region82: #{tpu_custom_call.1} parent=79 // pred_check_branch
          %602 = sbr.rel (%p600) target = $region84
        $region83: #{tpu_custom_call.1} parent=79 // pred_region
          %603 = dma.done [#allocation3], 256
        $region84: #{tpu_custom_call.1} parent=79 // pred_fallthru
          _
        // Predicated region
        $region85: #{tpu_custom_call.1} parent=79 // pred_check
          %p604 = pneg %p76
        $region86: #{tpu_custom_call.1} parent=79 // pred_check_branch
          %606 = sbr.rel (%p604) target = $region88
        $region87: #{tpu_custom_call.1} parent=79 // pred_region
          %607 = dma.done [#allocation6], 2048
        $region88: #{tpu_custom_call.1} parent=79 // pred_fallthru
          _
        // Predicated region
        $region89: #{tpu_custom_call.1} parent=79 // pred_check
          %p608 = pneg %p97
        $region90: #{tpu_custom_call.1} parent=79 // pred_check_branch
          %610 = sbr.rel (%p608) target = $region92
        $region91: #{tpu_custom_call.1} parent=79 // pred_region
          %611 = dma.done [#allocation6], 16
        $region92: #{tpu_custom_call.1} parent=79 // pred_fallthru
          _
        // Predicated region
        $region93: #{tpu_custom_call.1} parent=79 // pred_check
          %p612 = pneg %p118
        $region94: #{tpu_custom_call.1} parent=79 // pred_check_branch
          %614 = sbr.rel (%p612) target = $region96
        $region95: #{tpu_custom_call.1} parent=79 // pred_region
          %615 = dma.done [#allocation9], 16
        $region96: #{tpu_custom_call.1} parent=79 // pred_fallthru
          _
        // Predicated region
        $region97: #{tpu_custom_call.1} parent=79 // pred_check
          %p616 = pneg %p139
        $region98: #{tpu_custom_call.1} parent=79 // pred_check_branch
          %618 = sbr.rel (%p616) target = $region100
        $region99: #{tpu_custom_call.1} parent=79 // pred_region
          %619 = dma.done [#allocation9], 16
        $region100: #{tpu_custom_call.1} parent=79 // pred_fallthru
          _
        // Predicated region
        $region101: #{tpu_custom_call.1} parent=79 // pred_check
          %p620 = pneg %p160
        $region102: #{tpu_custom_call.1} parent=79 // pred_check_branch
          %622 = sbr.rel (%p620) target = $region104
        $region103: #{tpu_custom_call.1} parent=79 // pred_region
          %623 = dma.done [#allocation12], 2048
        $region104: #{tpu_custom_call.1} parent=79 // pred_fallthru
          _
        // Predicated region
        $region105: #{tpu_custom_call.1} parent=79 // pred_check
          %p624 = pneg %p181
        $region106: #{tpu_custom_call.1} parent=79 // pred_check_branch
          %626 = sbr.rel (%p624) target = $region108
        $region107: #{tpu_custom_call.1} parent=79 // pred_region
          %627 = dma.done [#allocation12], 32
        $region108: #{tpu_custom_call.1} parent=79 // pred_fallthru
          _
        // Predicated region
        $region109: #{tpu_custom_call.1} parent=79 // pred_check
          %p628 = pneg %p202
        $region110: #{tpu_custom_call.1} parent=79 // pred_check_branch
          %630 = sbr.rel (%p628) target = $region112
        $region111: #{tpu_custom_call.1} parent=79 // pred_region
          %631 = dma.done [#allocation15], 32
        $region112: #{tpu_custom_call.1} parent=79 // pred_fallthru
          _
        // Predicated region
        $region113: #{tpu_custom_call.1} parent=79 // pred_check
          %p632 = pneg %p223
        $region114: #{tpu_custom_call.1} parent=79 // pred_check_branch
          %634 = sbr.rel (%p632) target = $region116
        $region115: #{tpu_custom_call.1} parent=79 // pred_region
          %635 = dma.done [#allocation15], 32
        $region116: #{tpu_custom_call.1} parent=79 // pred_fallthru
          _
        // Predicated region
        $region117: #{tpu_custom_call.1} parent=79 // pred_check
          %p636 = pneg %p244
        $region118: #{tpu_custom_call.1} parent=79 // pred_check_branch
          %638 = sbr.rel (%p636) target = $region120
        $region119: #{tpu_custom_call.1} parent=79 // pred_region
          %639 = dma.done [#allocation18], 8192
        $region120: #{tpu_custom_call.1} parent=79 // pred_fallthru
          _
        // Predicated region
        $region121: #{tpu_custom_call.1} parent=79 // pred_check
          %p640 = pneg %p265
        $region122: #{tpu_custom_call.1} parent=79 // pred_check_branch
          %642 = sbr.rel (%p640) target = $region124
        $region123: #{tpu_custom_call.1} parent=79 // pred_region
          %643 = dma.done [#allocation18], 64
        $region124: #{tpu_custom_call.1} parent=79 // pred_fallthru
          _
        // Predicated region
        $region125: #{tpu_custom_call.1} parent=79 // pred_check
          %p644 = pneg %p286
        $region126: #{tpu_custom_call.1} parent=79 // pred_check_branch
          %646 = sbr.rel (%p644) target = $region128
        $region127: #{tpu_custom_call.1} parent=79 // pred_region
          %647 = dma.done [#allocation21], 64
        $region128: #{tpu_custom_call.1} parent=79 // pred_fallthru
          _
        // Predicated region
        $region129: #{tpu_custom_call.1} parent=79 // pred_check
          %p648 = pneg %p307
        $region130: #{tpu_custom_call.1} parent=79 // pred_check_branch
          %650 = sbr.rel (%p648) target = $region132
        $region131: #{tpu_custom_call.1} parent=79 // pred_region
          %651 = dma.done [#allocation21], 64
        $region132: #{tpu_custom_call.1} parent=79 // pred_fallthru
          _
        %s652 = sand.u32 %s39, 1
        %s653 = scalar_lea.sflag [#allocation24], %s652
        %s654 = sand.u32 %s320, 1
        %s655 = smul.addr %s654, 4096
        %s656 = scalar_lea.vmem [#allocation23], %s655
        // Predicated region
        $region133: #{tpu_custom_call.1} parent=79 // pred_check
          %p657 = pneg %p333
        $region134: #{tpu_custom_call.1} parent=79 // pred_check_branch
          %659 = sbr.rel (%p657) target = $region136
        $region135: #{tpu_custom_call.1} parent=79 // pred_region
          %660 = dma.done %s653, 65536
        $region136: #{tpu_custom_call.1} parent=79 // pred_fallthru
          _
        %s661 = sand.u32 %s39, 1
        %s662 = scalar_lea.sflag [#allocation24], %s661
        %s663 = sand.u32 %s346, 1
        %s664 = smul.addr %s663, 16
        %s665 = scalar_lea.vmem [#allocation25], %s664
        // Predicated region
        $region137: #{tpu_custom_call.1} parent=79 // pred_check
          %p666 = pneg %p359
        $region138: #{tpu_custom_call.1} parent=79 // pred_check_branch
          %668 = sbr.rel (%p666) target = $region140
        $region139: #{tpu_custom_call.1} parent=79 // pred_region
          %669 = dma.done %s662, 256
        $region140: #{tpu_custom_call.1} parent=79 // pred_fallthru
          _
        %p670 = pneg %p55
        %p671 = pneg %p52
        %p672 = pneg %p76
        %p673 = pneg %p73
        %p674 = pneg %p97
        %p675 = pneg %p94
        %p676 = pneg %p118
        %p677 = pneg %p115
        %p678 = pneg %p139
        %p679 = pneg %p136
        %p680 = pneg %p160
        %p681 = pneg %p157
        %p682 = pneg %p181
        %p683 = pneg %p178
        %p684 = pneg %p202
        %p685 = pneg %p199
        %p686 = pneg %p223
        %p687 = pneg %p220
        %p688 = pneg %p244
        %p689 = pneg %p241
        %p690 = pneg %p265
        %p691 = pneg %p262
        %p692 = pneg %p286
        %p693 = pneg %p283
        %p694 = pneg %p307
        %p695 = pneg %p304
        %s696 = sand.u32 %s39, 1
        %s697 = scalar_lea.sflag [#allocation24], %s696
        %s698 = sand.u32 %s320, 1
        %s699 = smul.addr %s698, 4096
        %s700 = scalar_lea.vmem [#allocation23], %s699
        %p701 = pneg %p333
        %p702 = pneg %p330
        %s703 = sand.u32 %s39, 1
        %s704 = scalar_lea.sflag [#allocation24], %s703
        %s705 = sand.u32 %s346, 1
        %s706 = smul.addr %s705, 16
        %s707 = scalar_lea.vmem [#allocation25], %s706
        %p708 = pneg %p359
        %p709 = pneg %p356
        %p710 = pneg %p385
        %p711 = pneg %p382
        %s712 = sand.u32 %s372, 1
        %s713 = scalar_lea.sflag [#allocation4], %s712
        %s714 = sand.u32 %s372, 1
        %s715 = smul.addr %s714, 128
        %s716 = scalar_lea.vmem [#allocation26], %s715
        %s717 = smul.u32 16, %s39
        %s718 = smul.u32 16, %s39
        %v720 = vld [vmem:[#allocation2] sm:$0xff]
        %v721 = vld [vmem:[#allocation2 + $0x8] sm:$0xff]
        %v722 = vld [vmem:[#allocation5] sm:$0xf]
        %v723 = vld [vmem:[#allocation5 + $0x4] sm:$0xf]
        %v724 = vld [vmem:[#allocation5 + $0x8] sm:$0xf]
        %v725 = vld [vmem:[#allocation5 + $0xc] sm:$0xf]
        %v726 = vld [vmem:[#allocation5 + $0x10] sm:$0xf]
        %v727 = vld [vmem:[#allocation5 + $0x14] sm:$0xf]
        %v728 = vld [vmem:[#allocation5 + $0x18] sm:$0xf]
        %v729 = vld [vmem:[#allocation5 + $0x1c] sm:$0xf]
        %v730 = vld [vmem:[#allocation5 + $0x20] sm:$0xf]
        %v731 = vld [vmem:[#allocation5 + $0x24] sm:$0xf]
        %v732 = vld [vmem:[#allocation5 + $0x28] sm:$0xf]
        %v733 = vld [vmem:[#allocation5 + $0x2c] sm:$0xf]
        %v734 = vld [vmem:[#allocation5 + $0x30] sm:$0xf]
        %v735 = vld [vmem:[#allocation5 + $0x34] sm:$0xf]
        %v736 = vld [vmem:[#allocation5 + $0x38] sm:$0xf]
        %v737 = vld [vmem:[#allocation5 + $0x3c] sm:$0xf]
        %v738 = vld [vmem:[#allocation5 + $0x40] sm:$0xf]
        %v739 = vld [vmem:[#allocation5 + $0x44] sm:$0xf]
        %v740 = vld [vmem:[#allocation5 + $0x48] sm:$0xf]
        %v741 = vld [vmem:[#allocation5 + $0x4c] sm:$0xf]
        %v742 = vld [vmem:[#allocation5 + $0x50] sm:$0xf]
        %v743 = vld [vmem:[#allocation5 + $0x54] sm:$0xf]
        %v744 = vld [vmem:[#allocation5 + $0x58] sm:$0xf]
        %v745 = vld [vmem:[#allocation5 + $0x5c] sm:$0xf]
        %v746 = vld [vmem:[#allocation5 + $0x60] sm:$0xf]
        %v747 = vld [vmem:[#allocation5 + $0x64] sm:$0xf]
        %v748 = vld [vmem:[#allocation5 + $0x68] sm:$0xf]
        %v749 = vld [vmem:[#allocation5 + $0x6c] sm:$0xf]
        %v750 = vld [vmem:[#allocation5 + $0x70] sm:$0xf]
        %v751 = vld [vmem:[#allocation5 + $0x74] sm:$0xf]
        %v752 = vld [vmem:[#allocation5 + $0x78] sm:$0xf]
        %v753 = vld [vmem:[#allocation5 + $0x7c] sm:$0xf]
        %v754 = vpack.c.bf16 %v720, %v720
        %v755 = vpack.c.bf16 %v721, %v721
        %v756 = vld [vmem:[#allocation7] sm:$0x1]
        %v758 = vlaneseq
        %v759 = vshrl.u32 %v758, 7
        %v760 = vsub.s32 0, %v759
        %v761 = vrot.slane %v756, %v760
        %v795 = vunpack.c.l.b16 %v722
        %v796 = vunpack.c.l.b16 %v723
        %v797 = vunpack.c.l.b16 %v724
        %v798 = vunpack.c.l.b16 %v725
        %v799 = vunpack.c.l.b16 %v726
        %v800 = vunpack.c.l.b16 %v727
        %v801 = vunpack.c.l.b16 %v728
        %v802 = vunpack.c.l.b16 %v729
        %v803 = vunpack.c.l.b16 %v730
        %v804 = vunpack.c.l.b16 %v731
        %v805 = vunpack.c.l.b16 %v732
        %v806 = vunpack.c.l.b16 %v733
        %v807 = vunpack.c.l.b16 %v734
        %v808 = vunpack.c.l.b16 %v735
        %v809 = vunpack.c.l.b16 %v736
        %v810 = vunpack.c.l.b16 %v737
        %v811 = vunpack.c.l.b16 %v738
        %v812 = vunpack.c.l.b16 %v739
        %v813 = vunpack.c.l.b16 %v740
        %v814 = vunpack.c.l.b16 %v741
        %v815 = vunpack.c.l.b16 %v742
        %v816 = vunpack.c.l.b16 %v743
        %v817 = vunpack.c.l.b16 %v744
        %v818 = vunpack.c.l.b16 %v745
        %v819 = vunpack.c.l.b16 %v746
        %v820 = vunpack.c.l.b16 %v747
        %v821 = vunpack.c.l.b16 %v748
        %v822 = vunpack.c.l.b16 %v749
        %v823 = vunpack.c.l.b16 %v750
        %v824 = vunpack.c.l.b16 %v751
        %v825 = vunpack.c.l.b16 %v752
        %v826 = vunpack.c.l.b16 %v753
        %v827 = vpack.c.b16 %v796, %v795
        %v828 = vpack.c.b16 %v798, %v797
        %v829 = vpack.c.b16 %v800, %v799
        %v830 = vpack.c.b16 %v802, %v801
        %v831 = vpack.c.b16 %v804, %v803
        %v832 = vpack.c.b16 %v806, %v805
        %v833 = vpack.c.b16 %v808, %v807
        %v834 = vpack.c.b16 %v810, %v809
        %v835 = vpack.c.b16 %v812, %v811
        %v836 = vpack.c.b16 %v814, %v813
        %v837 = vpack.c.b16 %v816, %v815
        %v838 = vpack.c.b16 %v818, %v817
        %v839 = vpack.c.b16 %v820, %v819
        %v840 = vpack.c.b16 %v822, %v821
        %v841 = vpack.c.b16 %v824, %v823
        %v842 = vpack.c.b16 %v826, %v825
        %859 = vmatprep.subr.bf16.mxu0 0
        %860 = vmatpush1.bf16.msra.mxu0 %v827
        %861 = vmatprep.subr.bf16.mxu0 0
        %862 = vmatpush1.bf16.msra.mxu0 %v828
        %863 = vmatprep.subr.bf16.mxu0 0
        %864 = vmatpush1.bf16.msra.mxu0 %v829
        %865 = vmatprep.subr.bf16.mxu0 0
        %866 = vmatpush1.bf16.msra.mxu0 %v830
        %867 = vmatprep.subr.bf16.mxu0 0
        %868 = vmatpush1.bf16.msra.mxu0 %v831
        %869 = vmatprep.subr.bf16.mxu0 0
        %870 = vmatpush1.bf16.msra.mxu0 %v832
        %871 = vmatprep.subr.bf16.mxu0 0
        %872 = vmatpush1.bf16.msra.mxu0 %v833
        %873 = vmatprep.subr.bf16.mxu0 0
        %874 = vmatpush1.bf16.msra.mxu0 %v834
        %875 = vmatprep.subr.bf16.mxu0 0
        %876 = vmatpush1.bf16.msra.mxu0 %v835
        %877 = vmatprep.subr.bf16.mxu0 0
        %878 = vmatpush1.bf16.msra.mxu0 %v836
        %879 = vmatprep.subr.bf16.mxu0 0
        %880 = vmatpush1.bf16.msra.mxu0 %v837
        %881 = vmatprep.subr.bf16.mxu0 0
        %882 = vmatpush1.bf16.msra.mxu0 %v838
        %883 = vmatprep.subr.bf16.mxu0 0
        %884 = vmatpush1.bf16.msra.mxu0 %v839
        %885 = vmatprep.subr.bf16.mxu0 0
        %886 = vmatpush1.bf16.msra.mxu0 %v840
        %887 = vmatprep.subr.bf16.mxu0 0
        %888 = vmatpush1.bf16.msra.mxu0 %v841
        %889 = vmatprep.subr.bf16.mxu0 0
        %890 = vmatpush1.bf16.msra.mxu0 %v842
        %891 = vmatprep.mubr.bf16.mxu0 %v755
        %892 = vmatmul.mubr.bf16.gmra.mrb[0].mxu0 %v754
        %v893 = vpop.f32.mrb[0].mxu0
        %v894 = vadd.f32 %v761, %v893
        %v895 = vpop.f32.mrb[0].mxu0
        %v896 = vpop.f32.mrb[0].mxu0
        %v897 = vpop.f32.mrb[0].mxu0
        %898 = vdwg.mxu0
        %v899 = vmax.f32 %v894, 0.0
        %v900 = vld [vmem:[#allocation8] sm:$0x1]
        %v901 = vld [vmem:[#allocation10] sm:$0x1]
        %902 = vadd.xlane.f32.xlu0 %v899
        %v903 = vpop.xlane.xlu0 %902
        %v904 = vrcp.pop 128.0
        %v905 = vmul.f32 %v903, %v904
        %v906 = vsub.f32 %v899, %v905
        %v907 = vmul.f32 %v906, %v906
        %908 = vadd.xlane.f32.xlu0 %v907
        %v909 = vpop.xlane.xlu0 %908
        %v910 = vmul.f32 %v909, %v904
        %v911 = vadd.f32 %v910, 1e-05
        %v912 = vrsqrt.pop %v911
        %v913 = vmul.f32 %v906, %v912
        %v915 = vlaneseq
        %v916 = vshrl.u32 %v915, 7
        %v917 = vsub.s32 0, %v916
        %v918 = vrot.slane %v900, %v917
        %v920 = vmul.f32 %v913, %v918
        %v922 = vlaneseq
        %v923 = vshrl.u32 %v922, 7
        %v924 = vsub.s32 0, %v923
        %v925 = vrot.slane %v901, %v924
        %v927 = vadd.f32 %v920, %v925
        %v928 = vld [vmem:[#allocation11] sm:$0xff]
        %v929 = vld [vmem:[#allocation11 + $0x8] sm:$0xff]
        %v930 = vld [vmem:[#allocation11 + $0x10] sm:$0xff]
        %v931 = vld [vmem:[#allocation11 + $0x18] sm:$0xff]
        %v932 = vld [vmem:[#allocation11 + $0x20] sm:$0xff]
        %v933 = vld [vmem:[#allocation11 + $0x28] sm:$0xff]
        %v934 = vld [vmem:[#allocation11 + $0x30] sm:$0xff]
        %v935 = vld [vmem:[#allocation11 + $0x38] sm:$0xff]
        %v936 = vld [vmem:[#allocation11 + $0x40] sm:$0xff]
        %v937 = vld [vmem:[#allocation11 + $0x48] sm:$0xff]
        %v938 = vld [vmem:[#allocation11 + $0x50] sm:$0xff]
        %v939 = vld [vmem:[#allocation11 + $0x58] sm:$0xff]
        %v940 = vld [vmem:[#allocation11 + $0x60] sm:$0xff]
        %v941 = vld [vmem:[#allocation11 + $0x68] sm:$0xff]
        %v942 = vld [vmem:[#allocation11 + $0x70] sm:$0xff]
        %v943 = vld [vmem:[#allocation11 + $0x78] sm:$0xff]
        %v944 = vpack.c.bf16 %v927, %v927
        %v945 = vld [vmem:[#allocation13] sm:$0x3]
        %v947 = vlaneseq
        %v948 = vshrl.u32 %v947, 7
        %v949 = vsub.s32 0, %v948
        %v950 = vrot.slane %v945, %v949
        %v951 = vlaneseq
        %v952 = vshrl.u32 %v951, 7
        %v953 = vsub.s32 1, %v952
        %v954 = vrot.slane %v945, %v953
        %v973 = vunpack.c.l.b16 %v928
        %v974 = vunpack.c.h.b16 %v928
        %v975 = vunpack.c.l.b16 %v929
        %v976 = vunpack.c.h.b16 %v929
        %v977 = vunpack.c.l.b16 %v930
        %v978 = vunpack.c.h.b16 %v930
        %v979 = vunpack.c.l.b16 %v931
        %v980 = vunpack.c.h.b16 %v931
        %v981 = vunpack.c.l.b16 %v932
        %v982 = vunpack.c.h.b16 %v932
        %v983 = vunpack.c.l.b16 %v933
        %v984 = vunpack.c.h.b16 %v933
        %v985 = vunpack.c.l.b16 %v934
        %v986 = vunpack.c.h.b16 %v934
        %v987 = vunpack.c.l.b16 %v935
        %v988 = vunpack.c.h.b16 %v935
        %v989 = vunpack.c.l.b16 %v936
        %v990 = vunpack.c.h.b16 %v936
        %v991 = vunpack.c.l.b16 %v937
        %v992 = vunpack.c.h.b16 %v937
        %v993 = vunpack.c.l.b16 %v938
        %v994 = vunpack.c.h.b16 %v938
        %v995 = vunpack.c.l.b16 %v939
        %v996 = vunpack.c.h.b16 %v939
        %v997 = vunpack.c.l.b16 %v940
        %v998 = vunpack.c.h.b16 %v940
        %v999 = vunpack.c.l.b16 %v941
        %v1000 = vunpack.c.h.b16 %v941
        %v1001 = vunpack.c.l.b16 %v942
        %v1002 = vunpack.c.h.b16 %v942
        %v1003 = vunpack.c.l.b16 %v943
        %v1004 = vunpack.c.h.b16 %v943
        %v1005 = vpack.c.b16 %v975, %v973
        %v1006 = vpack.c.b16 %v976, %v974
        %v1007 = vpack.c.b16 %v979, %v977
        %v1008 = vpack.c.b16 %v980, %v978
        %v1009 = vpack.c.b16 %v983, %v981
        %v1010 = vpack.c.b16 %v984, %v982
        %v1011 = vpack.c.b16 %v987, %v985
        %v1012 = vpack.c.b16 %v988, %v986
        %v1013 = vpack.c.b16 %v991, %v989
        %v1014 = vpack.c.b16 %v992, %v990
        %v1015 = vpack.c.b16 %v995, %v993
        %v1016 = vpack.c.b16 %v996, %v994
        %v1017 = vpack.c.b16 %v999, %v997
        %v1018 = vpack.c.b16 %v1000, %v998
        %v1019 = vpack.c.b16 %v1003, %v1001
        %v1020 = vpack.c.b16 %v1004, %v1002
        %1037 = vmatprep.subr.bf16.mxu0 %v1006
        %1038 = vmatpush1.bf16.msra.mxu0 %v1005
        %1039 = vmatprep.subr.bf16.mxu0 %v1008
        %1040 = vmatpush1.bf16.msra.mxu0 %v1007
        %1041 = vmatprep.subr.bf16.mxu0 %v1010
        %1042 = vmatpush1.bf16.msra.mxu0 %v1009
        %1043 = vmatprep.subr.bf16.mxu0 %v1012
        %1044 = vmatpush1.bf16.msra.mxu0 %v1011
        %1045 = vmatprep.subr.bf16.mxu0 %v1014
        %1046 = vmatpush1.bf16.msra.mxu0 %v1013
        %1047 = vmatprep.subr.bf16.mxu0 %v1016
        %1048 = vmatpush1.bf16.msra.mxu0 %v1015
        %1049 = vmatprep.subr.bf16.mxu0 %v1018
        %1050 = vmatpush1.bf16.msra.mxu0 %v1017
        %1051 = vmatprep.subr.bf16.mxu0 %v1020
        %1052 = vmatpush1.bf16.msra.mxu0 %v1019
        %1053 = vmatprep.subr.bf16.mxu0 0
        %1054 = vmatpush1.bf16.msra.mxu0 0
        %1055 = vmatprep.subr.bf16.mxu0 0
        %1056 = vmatpush1.bf16.msra.mxu0 0
        %1057 = vmatprep.subr.bf16.mxu0 0
        %1058 = vmatpush1.bf16.msra.mxu0 0
        %1059 = vmatprep.subr.bf16.mxu0 0
        %1060 = vmatpush1.bf16.msra.mxu0 0
        %1061 = vmatprep.subr.bf16.mxu0 0
        %1062 = vmatpush1.bf16.msra.mxu0 0
        %1063 = vmatprep.subr.bf16.mxu0 0
        %1064 = vmatpush1.bf16.msra.mxu0 0
        %1065 = vmatprep.subr.bf16.mxu0 0
        %1066 = vmatpush1.bf16.msra.mxu0 0
        %1067 = vmatprep.subr.bf16.mxu0 0
        %1068 = vmatpush1.bf16.msra.mxu0 0
        %1069 = vmatprep.mubr.bf16.mxu0 0
        %1070 = vmatmul.mubr.bf16.gmra.mrb[0].mxu0 %v944
        %v1071 = vpop.f32.mrb[0].mxu0
        %v1072 = vadd.f32 %v950, %v1071
        %v1073 = vpop.f32.mrb[0].mxu0
        %v1074 = vadd.f32 %v954, %v1073
        %v1075 = vpop.f32.mrb[0].mxu0
        %v1076 = vpop.f32.mrb[0].mxu0
        %1077 = vdwg.mxu0
        %v1078 = vmax.f32 %v1072, 0.0
        %v1079 = vmax.f32 %v1074, 0.0
        %v1080 = vld [vmem:[#allocation14] sm:$0x3]
        %v1081 = vld [vmem:[#allocation16] sm:$0x3]
        %v1082 = vadd.f32 %v1078, %v1079
        %1083 = vadd.xlane.f32.xlu0 %v1082
        %v1084 = vpop.xlane.xlu0 %1083
        %v1085 = vrcp.pop 256.0
        %v1086 = vmul.f32 %v1084, %v1085
        %v1087 = vsub.f32 %v1078, %v1086
        %v1088 = vsub.f32 %v1079, %v1086
        %v1089 = vmul.f32 %v1087, %v1087
        %v1090 = vmul.f32 %v1088, %v1088
        %v1091 = vadd.f32 %v1089, %v1090
        %1092 = vadd.xlane.f32.xlu0 %v1091
        %v1093 = vpop.xlane.xlu0 %1092
        %v1094 = vmul.f32 %v1093, %v1085
        %v1095 = vadd.f32 %v1094, 1e-05
        %v1096 = vrsqrt.pop %v1095
        %v1097 = vmul.f32 %v1087, %v1096
        %v1098 = vmul.f32 %v1088, %v1096
        %v1100 = vlaneseq
        %v1101 = vshrl.u32 %v1100, 7
        %v1102 = vsub.s32 0, %v1101
        %v1103 = vrot.slane %v1080, %v1102
        %v1104 = vlaneseq
        %v1105 = vshrl.u32 %v1104, 7
        %v1106 = vsub.s32 1, %v1105
        %v1107 = vrot.slane %v1080, %v1106
        %v1110 = vmul.f32 %v1097, %v1103
        %v1111 = vmul.f32 %v1098, %v1107
        %v1113 = vlaneseq
        %v1114 = vshrl.u32 %v1113, 7
        %v1115 = vsub.s32 0, %v1114
        %v1116 = vrot.slane %v1081, %v1115
        %v1117 = vlaneseq
        %v1118 = vshrl.u32 %v1117, 7
        %v1119 = vsub.s32 1, %v1118
        %v1120 = vrot.slane %v1081, %v1119
        %v1123 = vadd.f32 %v1110, %v1116
        %v1124 = vadd.f32 %v1111, %v1120
        %v1125 = vld [vmem:[#allocation17] sm:$0xff]
        %v1126 = vld [vmem:[#allocation17 + $0x8] sm:$0xff]
        %v1127 = vld [vmem:[#allocation17 + $0x10] sm:$0xff]
        %v1128 = vld [vmem:[#allocation17 + $0x18] sm:$0xff]
        %v1129 = vld [vmem:[#allocation17 + $0x20] sm:$0xff]
        %v1130 = vld [vmem:[#allocation17 + $0x28] sm:$0xff]
        %v1131 = vld [vmem:[#allocation17 + $0x30] sm:$0xff]
        %v1132 = vld [vmem:[#allocation17 + $0x38] sm:$0xff]
        %v1133 = vld [vmem:[#allocation17 + $0x40] sm:$0xff]
        %v1134 = vld [vmem:[#allocation17 + $0x48] sm:$0xff]
        %v1135 = vld [vmem:[#allocation17 + $0x50] sm:$0xff]
        %v1136 = vld [vmem:[#allocation17 + $0x58] sm:$0xff]
        %v1137 = vld [vmem:[#allocation17 + $0x60] sm:$0xff]
        %v1138 = vld [vmem:[#allocation17 + $0x68] sm:$0xff]
        %v1139 = vld [vmem:[#allocation17 + $0x70] sm:$0xff]
        %v1140 = vld [vmem:[#allocation17 + $0x78] sm:$0xff]
        %v1141 = vld [vmem:[#allocation17 + $0x80] sm:$0xff]
        %v1142 = vld [vmem:[#allocation17 + $0x88] sm:$0xff]
        %v1143 = vld [vmem:[#allocation17 + $0x90] sm:$0xff]
        %v1144 = vld [vmem:[#allocation17 + $0x98] sm:$0xff]
        %v1145 = vld [vmem:[#allocation17 + $0xa0] sm:$0xff]
        %v1146 = vld [vmem:[#allocation17 + $0xa8] sm:$0xff]
        %v1147 = vld [vmem:[#allocation17 + $0xb0] sm:$0xff]
        %v1148 = vld [vmem:[#allocation17 + $0xb8] sm:$0xff]
        %v1149 = vld [vmem:[#allocation17 + $0xc0] sm:$0xff]
        %v1150 = vld [vmem:[#allocation17 + $0xc8] sm:$0xff]
        %v1151 = vld [vmem:[#allocation17 + $0xd0] sm:$0xff]
        %v1152 = vld [vmem:[#allocation17 + $0xd8] sm:$0xff]
        %v1153 = vld [vmem:[#allocation17 + $0xe0] sm:$0xff]
        %v1154 = vld [vmem:[#allocation17 + $0xe8] sm:$0xff]
        %v1155 = vld [vmem:[#allocation17 + $0xf0] sm:$0xff]
        %v1156 = vld [vmem:[#allocation17 + $0xf8] sm:$0xff]
        %v1157 = vld [vmem:[#allocation17 + $0x100] sm:$0xff]
        %v1158 = vld [vmem:[#allocation17 + $0x108] sm:$0xff]
        %v1159 = vld [vmem:[#allocation17 + $0x110] sm:$0xff]
        %v1160 = vld [vmem:[#allocation17 + $0x118] sm:$0xff]
        %v1161 = vld [vmem:[#allocation17 + $0x120] sm:$0xff]
        %v1162 = vld [vmem:[#allocation17 + $0x128] sm:$0xff]
        %v1163 = vld [vmem:[#allocation17 + $0x130] sm:$0xff]
        %v1164 = vld [vmem:[#allocation17 + $0x138] sm:$0xff]
        %v1165 = vld [vmem:[#allocation17 + $0x140] sm:$0xff]
        %v1166 = vld [vmem:[#allocation17 + $0x148] sm:$0xff]
        %v1167 = vld [vmem:[#allocation17 + $0x150] sm:$0xff]
        %v1168 = vld [vmem:[#allocation17 + $0x158] sm:$0xff]
        %v1169 = vld [vmem:[#allocation17 + $0x160] sm:$0xff]
        %v1170 = vld [vmem:[#allocation17 + $0x168] sm:$0xff]
        %v1171 = vld [vmem:[#allocation17 + $0x170] sm:$0xff]
        %v1172 = vld [vmem:[#allocation17 + $0x178] sm:$0xff]
        %v1173 = vld [vmem:[#allocation17 + $0x180] sm:$0xff]
        %v1174 = vld [vmem:[#allocation17 + $0x188] sm:$0xff]
        %v1175 = vld [vmem:[#allocation17 + $0x190] sm:$0xff]
        %v1176 = vld [vmem:[#allocation17 + $0x198] sm:$0xff]
        %v1177 = vld [vmem:[#allocation17 + $0x1a0] sm:$0xff]
        %v1178 = vld [vmem:[#allocation17 + $0x1a8] sm:$0xff]
        %v1179 = vld [vmem:[#allocation17 + $0x1b0] sm:$0xff]
        %v1180 = vld [vmem:[#allocation17 + $0x1b8] sm:$0xff]
        %v1181 = vld [vmem:[#allocation17 + $0x1c0] sm:$0xff]
        %v1182 = vld [vmem:[#allocation17 + $0x1c8] sm:$0xff]
        %v1183 = vld [vmem:[#allocation17 + $0x1d0] sm:$0xff]
        %v1184 = vld [vmem:[#allocation17 + $0x1d8] sm:$0xff]
        %v1185 = vld [vmem:[#allocation17 + $0x1e0] sm:$0xff]
        %v1186 = vld [vmem:[#allocation17 + $0x1e8] sm:$0xff]
        %v1187 = vld [vmem:[#allocation17 + $0x1f0] sm:$0xff]
        %v1188 = vld [vmem:[#allocation17 + $0x1f8] sm:$0xff]
        %v1189 = vpack.c.bf16 %v1123, %v1123
        %v1190 = vpack.c.bf16 %v1124, %v1124
        %v1191 = vld [vmem:[#allocation19] sm:$0xf]
        %v1193 = vlaneseq
        %v1194 = vshrl.u32 %v1193, 7
        %v1195 = vsub.s32 0, %v1194
        %v1196 = vrot.slane %v1191, %v1195
        %v1197 = vlaneseq
        %v1198 = vshrl.u32 %v1197, 7
        %v1199 = vsub.s32 1, %v1198
        %v1200 = vrot.slane %v1191, %v1199
        %v1201 = vlaneseq
        %v1202 = vshrl.u32 %v1201, 7
        %v1203 = vsub.s32 2, %v1202
        %v1204 = vrot.slane %v1191, %v1203
        %v1205 = vlaneseq
        %v1206 = vshrl.u32 %v1205, 7
        %v1207 = vsub.s32 3, %v1206
        %v1208 = vrot.slane %v1191, %v1207
        %v1277 = vunpack.c.l.b16 %v1125
        %v1278 = vunpack.c.h.b16 %v1125
        %v1279 = vunpack.c.l.b16 %v1126
        %v1280 = vunpack.c.h.b16 %v1126
        %v1281 = vunpack.c.l.b16 %v1127
        %v1282 = vunpack.c.h.b16 %v1127
        %v1283 = vunpack.c.l.b16 %v1128
        %v1284 = vunpack.c.h.b16 %v1128
        %v1285 = vunpack.c.l.b16 %v1129
        %v1286 = vunpack.c.h.b16 %v1129
        %v1287 = vunpack.c.l.b16 %v1130
        %v1288 = vunpack.c.h.b16 %v1130
        %v1289 = vunpack.c.l.b16 %v1131
        %v1290 = vunpack.c.h.b16 %v1131
        %v1291 = vunpack.c.l.b16 %v1132
        %v1292 = vunpack.c.h.b16 %v1132
        %v1293 = vunpack.c.l.b16 %v1133
        %v1294 = vunpack.c.h.b16 %v1133
        %v1295 = vunpack.c.l.b16 %v1134
        %v1296 = vunpack.c.h.b16 %v1134
        %v1297 = vunpack.c.l.b16 %v1135
        %v1298 = vunpack.c.h.b16 %v1135
        %v1299 = vunpack.c.l.b16 %v1136
        %v1300 = vunpack.c.h.b16 %v1136
        %v1301 = vunpack.c.l.b16 %v1137
        %v1302 = vunpack.c.h.b16 %v1137
        %v1303 = vunpack.c.l.b16 %v1138
        %v1304 = vunpack.c.h.b16 %v1138
        %v1305 = vunpack.c.l.b16 %v1139
        %v1306 = vunpack.c.h.b16 %v1139
        %v1307 = vunpack.c.l.b16 %v1140
        %v1308 = vunpack.c.h.b16 %v1140
        %v1309 = vunpack.c.l.b16 %v1141
        %v1310 = vunpack.c.h.b16 %v1141
        %v1311 = vunpack.c.l.b16 %v1142
        %v1312 = vunpack.c.h.b16 %v1142
        %v1313 = vunpack.c.l.b16 %v1143
        %v1314 = vunpack.c.h.b16 %v1143
        %v1315 = vunpack.c.l.b16 %v1144
        %v1316 = vunpack.c.h.b16 %v1144
        %v1317 = vunpack.c.l.b16 %v1145
        %v1318 = vunpack.c.h.b16 %v1145
        %v1319 = vunpack.c.l.b16 %v1146
        %v1320 = vunpack.c.h.b16 %v1146
        %v1321 = vunpack.c.l.b16 %v1147
        %v1322 = vunpack.c.h.b16 %v1147
        %v1323 = vunpack.c.l.b16 %v1148
        %v1324 = vunpack.c.h.b16 %v1148
        %v1325 = vunpack.c.l.b16 %v1149
        %v1326 = vunpack.c.h.b16 %v1149
        %v1327 = vunpack.c.l.b16 %v1150
        %v1328 = vunpack.c.h.b16 %v1150
        %v1329 = vunpack.c.l.b16 %v1151
        %v1330 = vunpack.c.h.b16 %v1151
        %v1331 = vunpack.c.l.b16 %v1152
        %v1332 = vunpack.c.h.b16 %v1152
        %v1333 = vunpack.c.l.b16 %v1153
        %v1334 = vunpack.c.h.b16 %v1153
        %v1335 = vunpack.c.l.b16 %v1154
        %v1336 = vunpack.c.h.b16 %v1154
        %v1337 = vunpack.c.l.b16 %v1155
        %v1338 = vunpack.c.h.b16 %v1155
        %v1339 = vunpack.c.l.b16 %v1156
        %v1340 = vunpack.c.h.b16 %v1156
        %v1341 = vunpack.c.l.b16 %v1157
        %v1342 = vunpack.c.h.b16 %v1157
        %v1343 = vunpack.c.l.b16 %v1158
        %v1344 = vunpack.c.h.b16 %v1158
        %v1345 = vunpack.c.l.b16 %v1159
        %v1346 = vunpack.c.h.b16 %v1159
        %v1347 = vunpack.c.l.b16 %v1160
        %v1348 = vunpack.c.h.b16 %v1160
        %v1349 = vunpack.c.l.b16 %v1161
        %v1350 = vunpack.c.h.b16 %v1161
        %v1351 = vunpack.c.l.b16 %v1162
        %v1352 = vunpack.c.h.b16 %v1162
        %v1353 = vunpack.c.l.b16 %v1163
        %v1354 = vunpack.c.h.b16 %v1163
        %v1355 = vunpack.c.l.b16 %v1164
        %v1356 = vunpack.c.h.b16 %v1164
        %v1357 = vunpack.c.l.b16 %v1165
        %v1358 = vunpack.c.h.b16 %v1165
        %v1359 = vunpack.c.l.b16 %v1166
        %v1360 = vunpack.c.h.b16 %v1166
        %v1361 = vunpack.c.l.b16 %v1167
        %v1362 = vunpack.c.h.b16 %v1167
        %v1363 = vunpack.c.l.b16 %v1168
        %v1364 = vunpack.c.h.b16 %v1168
        %v1365 = vunpack.c.l.b16 %v1169
        %v1366 = vunpack.c.h.b16 %v1169
        %v1367 = vunpack.c.l.b16 %v1170
        %v1368 = vunpack.c.h.b16 %v1170
        %v1369 = vunpack.c.l.b16 %v1171
        %v1370 = vunpack.c.h.b16 %v1171
        %v1371 = vunpack.c.l.b16 %v1172
        %v1372 = vunpack.c.h.b16 %v1172
        %v1373 = vunpack.c.l.b16 %v1173
        %v1374 = vunpack.c.h.b16 %v1173
        %v1375 = vunpack.c.l.b16 %v1174
        %v1376 = vunpack.c.h.b16 %v1174
        %v1377 = vunpack.c.l.b16 %v1175
        %v1378 = vunpack.c.h.b16 %v1175
        %v1379 = vunpack.c.l.b16 %v1176
        %v1380 = vunpack.c.h.b16 %v1176
        %v1381 = vunpack.c.l.b16 %v1177
        %v1382 = vunpack.c.h.b16 %v1177
        %v1383 = vunpack.c.l.b16 %v1178
        %v1384 = vunpack.c.h.b16 %v1178
        %v1385 = vunpack.c.l.b16 %v1179
        %v1386 = vunpack.c.h.b16 %v1179
        %v1387 = vunpack.c.l.b16 %v1180
        %v1388 = vunpack.c.h.b16 %v1180
        %v1389 = vunpack.c.l.b16 %v1181
        %v1390 = vunpack.c.h.b16 %v1181
        %v1391 = vunpack.c.l.b16 %v1182
        %v1392 = vunpack.c.h.b16 %v1182
        %v1393 = vunpack.c.l.b16 %v1183
        %v1394 = vunpack.c.h.b16 %v1183
        %v1395 = vunpack.c.l.b16 %v1184
        %v1396 = vunpack.c.h.b16 %v1184
        %v1397 = vunpack.c.l.b16 %v1185
        %v1398 = vunpack.c.h.b16 %v1185
        %v1399 = vunpack.c.l.b16 %v1186
        %v1400 = vunpack.c.h.b16 %v1186
        %v1401 = vunpack.c.l.b16 %v1187
        %v1402 = vunpack.c.h.b16 %v1187
        %v1403 = vunpack.c.l.b16 %v1188
        %v1404 = vunpack.c.h.b16 %v1188
        %v1405 = vpack.c.b16 %v1281, %v1277
        %v1406 = vpack.c.b16 %v1282, %v1278
        %v1407 = vpack.c.b16 %v1283, %v1279
        %v1408 = vpack.c.b16 %v1284, %v1280
        %v1409 = vpack.c.b16 %v1289, %v1285
        %v1410 = vpack.c.b16 %v1290, %v1286
        %v1411 = vpack.c.b16 %v1291, %v1287
        %v1412 = vpack.c.b16 %v1292, %v1288
        %v1413 = vpack.c.b16 %v1297, %v1293
        %v1414 = vpack.c.b16 %v1298, %v1294
        %v1415 = vpack.c.b16 %v1299, %v1295
        %v1416 = vpack.c.b16 %v1300, %v1296
        %v1417 = vpack.c.b16 %v1305, %v1301
        %v1418 = vpack.c.b16 %v1306, %v1302
        %v1419 = vpack.c.b16 %v1307, %v1303
        %v1420 = vpack.c.b16 %v1308, %v1304
        %v1421 = vpack.c.b16 %v1313, %v1309
        %v1422 = vpack.c.b16 %v1314, %v1310
        %v1423 = vpack.c.b16 %v1315, %v1311
        %v1424 = vpack.c.b16 %v1316, %v1312
        %v1425 = vpack.c.b16 %v1321, %v1317
        %v1426 = vpack.c.b16 %v1322, %v1318
        %v1427 = vpack.c.b16 %v1323, %v1319
        %v1428 = vpack.c.b16 %v1324, %v1320
        %v1429 = vpack.c.b16 %v1329, %v1325
        %v1430 = vpack.c.b16 %v1330, %v1326
        %v1431 = vpack.c.b16 %v1331, %v1327
        %v1432 = vpack.c.b16 %v1332, %v1328
        %v1433 = vpack.c.b16 %v1337, %v1333
        %v1434 = vpack.c.b16 %v1338, %v1334
        %v1435 = vpack.c.b16 %v1339, %v1335
        %v1436 = vpack.c.b16 %v1340, %v1336
        %v1437 = vpack.c.b16 %v1345, %v1341
        %v1438 = vpack.c.b16 %v1346, %v1342
        %v1439 = vpack.c.b16 %v1347, %v1343
        %v1440 = vpack.c.b16 %v1348, %v1344
        %v1441 = vpack.c.b16 %v1353, %v1349
        %v1442 = vpack.c.b16 %v1354, %v1350
        %v1443 = vpack.c.b16 %v1355, %v1351
        %v1444 = vpack.c.b16 %v1356, %v1352
        %v1445 = vpack.c.b16 %v1361, %v1357
        %v1446 = vpack.c.b16 %v1362, %v1358
        %v1447 = vpack.c.b16 %v1363, %v1359
        %v1448 = vpack.c.b16 %v1364, %v1360
        %v1449 = vpack.c.b16 %v1369, %v1365
        %v1450 = vpack.c.b16 %v1370, %v1366
        %v1451 = vpack.c.b16 %v1371, %v1367
        %v1452 = vpack.c.b16 %v1372, %v1368
        %v1453 = vpack.c.b16 %v1377, %v1373
        %v1454 = vpack.c.b16 %v1378, %v1374
        %v1455 = vpack.c.b16 %v1379, %v1375
        %v1456 = vpack.c.b16 %v1380, %v1376
        %v1457 = vpack.c.b16 %v1385, %v1381
        %v1458 = vpack.c.b16 %v1386, %v1382
        %v1459 = vpack.c.b16 %v1387, %v1383
        %v1460 = vpack.c.b16 %v1388, %v1384
        %v1461 = vpack.c.b16 %v1393, %v1389
        %v1462 = vpack.c.b16 %v1394, %v1390
        %v1463 = vpack.c.b16 %v1395, %v1391
        %v1464 = vpack.c.b16 %v1396, %v1392
        %v1465 = vpack.c.b16 %v1401, %v1397
        %v1466 = vpack.c.b16 %v1402, %v1398
        %v1467 = vpack.c.b16 %v1403, %v1399
        %v1468 = vpack.c.b16 %v1404, %v1400
        %1533 = vmatprep.subr.bf16.mxu0 %v1406
        %1534 = vmatpush1.bf16.msra.mxu0 %v1405
        %1535 = vmatprep.subr.bf16.mxu0 %v1410
        %1536 = vmatpush1.bf16.msra.mxu0 %v1409
        %1537 = vmatprep.subr.bf16.mxu0 %v1414
        %1538 = vmatpush1.bf16.msra.mxu0 %v1413
        %1539 = vmatprep.subr.bf16.mxu0 %v1418
        %1540 = vmatpush1.bf16.msra.mxu0 %v1417
        %1541 = vmatprep.subr.bf16.mxu0 %v1422
        %1542 = vmatpush1.bf16.msra.mxu0 %v1421
        %1543 = vmatprep.subr.bf16.mxu0 %v1426
        %1544 = vmatpush1.bf16.msra.mxu0 %v1425
        %1545 = vmatprep.subr.bf16.mxu0 %v1430
        %1546 = vmatpush1.bf16.msra.mxu0 %v1429
        %1547 = vmatprep.subr.bf16.mxu0 %v1434
        %1548 = vmatpush1.bf16.msra.mxu0 %v1433
        %1549 = vmatprep.subr.bf16.mxu0 %v1438
        %1550 = vmatpush1.bf16.msra.mxu0 %v1437
        %1551 = vmatprep.subr.bf16.mxu0 %v1442
        %1552 = vmatpush1.bf16.msra.mxu0 %v1441
        %1553 = vmatprep.subr.bf16.mxu0 %v1446
        %1554 = vmatpush1.bf16.msra.mxu0 %v1445
        %1555 = vmatprep.subr.bf16.mxu0 %v1450
        %1556 = vmatpush1.bf16.msra.mxu0 %v1449
        %1557 = vmatprep.subr.bf16.mxu0 %v1454
        %1558 = vmatpush1.bf16.msra.mxu0 %v1453
        %1559 = vmatprep.subr.bf16.mxu0 %v1458
        %1560 = vmatpush1.bf16.msra.mxu0 %v1457
        %1561 = vmatprep.subr.bf16.mxu0 %v1462
        %1562 = vmatpush1.bf16.msra.mxu0 %v1461
        %1563 = vmatprep.subr.bf16.mxu0 %v1466
        %1564 = vmatpush1.bf16.msra.mxu0 %v1465
        %1565 = vmatprep.mubr.bf16.mxu0 %v1190
        %1566 = vmatmul.mubr.bf16.gmra.mrb[0].mxu0 %v1189
        %v1567 = vpop.f32.mrb[0].mxu0
        %v1568 = vadd.f32 %v1196, %v1567
        %v1569 = vpop.f32.mrb[0].mxu0
        %v1570 = vadd.f32 %v1200, %v1569
        %v1571 = vpop.f32.mrb[0].mxu0
        %v1572 = vpop.f32.mrb[0].mxu0
        %1573 = vdwg.mxu0
        %1574 = vmatprep.subr.bf16.mxu0 %v1408
        %1575 = vmatpush1.bf16.msra.mxu0 %v1407
        %1576 = vmatprep.subr.bf16.mxu0 %v1412
        %1577 = vmatpush1.bf16.msra.mxu0 %v1411
        %1578 = vmatprep.subr.bf16.mxu0 %v1416
        %1579 = vmatpush1.bf16.msra.mxu0 %v1415
        %1580 = vmatprep.subr.bf16.mxu0 %v1420
        %1581 = vmatpush1.bf16.msra.mxu0 %v1419
        %1582 = vmatprep.subr.bf16.mxu0 %v1424
        %1583 = vmatpush1.bf16.msra.mxu0 %v1423
        %1584 = vmatprep.subr.bf16.mxu0 %v1428
        %1585 = vmatpush1.bf16.msra.mxu0 %v1427
        %1586 = vmatprep.subr.bf16.mxu0 %v1432
        %1587 = vmatpush1.bf16.msra.mxu0 %v1431
        %1588 = vmatprep.subr.bf16.mxu0 %v1436
        %1589 = vmatpush1.bf16.msra.mxu0 %v1435
        %1590 = vmatprep.subr.bf16.mxu0 %v1440
        %1591 = vmatpush1.bf16.msra.mxu0 %v1439
        %1592 = vmatprep.subr.bf16.mxu0 %v1444
        %1593 = vmatpush1.bf16.msra.mxu0 %v1443
        %1594 = vmatprep.subr.bf16.mxu0 %v1448
        %1595 = vmatpush1.bf16.msra.mxu0 %v1447
        %1596 = vmatprep.subr.bf16.mxu0 %v1452
        %1597 = vmatpush1.bf16.msra.mxu0 %v1451
        %1598 = vmatprep.subr.bf16.mxu0 %v1456
        %1599 = vmatpush1.bf16.msra.mxu0 %v1455
        %1600 = vmatprep.subr.bf16.mxu0 %v1460
        %1601 = vmatpush1.bf16.msra.mxu0 %v1459
        %1602 = vmatprep.subr.bf16.mxu0 %v1464
        %1603 = vmatpush1.bf16.msra.mxu0 %v1463
        %1604 = vmatprep.subr.bf16.mxu0 %v1468
        %1605 = vmatpush1.bf16.msra.mxu0 %v1467
        %1606 = vmatprep.mubr.bf16.mxu0 %v1190
        %1607 = vmatmul.mubr.bf16.gmra.mrb[0].mxu0 %v1189
        %v1608 = vpop.f32.mrb[0].mxu0
        %v1609 = vadd.f32 %v1204, %v1608
        %v1610 = vpop.f32.mrb[0].mxu0
        %v1611 = vadd.f32 %v1208, %v1610
        %v1612 = vpop.f32.mrb[0].mxu0
        %v1613 = vpop.f32.mrb[0].mxu0
        %1614 = vdwg.mxu0
        %v1615 = vmax.f32 %v1568, 0.0
        %v1616 = vmax.f32 %v1570, 0.0
        %v1617 = vmax.f32 %v1609, 0.0
        %v1618 = vmax.f32 %v1611, 0.0
        %v1619 = vld [vmem:[#allocation20] sm:$0xf]
        %v1620 = vld [vmem:[#allocation22] sm:$0xf]
        %v1621 = vadd.f32 %v1615, %v1616
        %v1622 = vadd.f32 %v1621, %v1617
        %v1623 = vadd.f32 %v1622, %v1618
        %1624 = vadd.xlane.f32.xlu0 %v1623
        %v1625 = vpop.xlane.xlu0 %1624
        %v1626 = vrcp.pop 512.0
        %v1627 = vmul.f32 %v1625, %v1626
        %v1628 = vsub.f32 %v1615, %v1627
        %v1629 = vsub.f32 %v1616, %v1627
        %v1630 = vsub.f32 %v1617, %v1627
        %v1631 = vsub.f32 %v1618, %v1627
        %v1632 = vmul.f32 %v1628, %v1628
        %v1633 = vmul.f32 %v1629, %v1629
        %v1634 = vmul.f32 %v1630, %v1630
        %v1635 = vmul.f32 %v1631, %v1631
        %v1636 = vadd.f32 %v1632, %v1633
        %v1637 = vadd.f32 %v1636, %v1634
        %v1638 = vadd.f32 %v1637, %v1635
        %1639 = vadd.xlane.f32.xlu0 %v1638
        %v1640 = vpop.xlane.xlu0 %1639
        %v1641 = vmul.f32 %v1640, %v1626
        %v1642 = vadd.f32 %v1641, 1e-05
        %v1643 = vrsqrt.pop %v1642
        %v1644 = vmul.f32 %v1628, %v1643
        %v1645 = vmul.f32 %v1629, %v1643
        %v1646 = vmul.f32 %v1630, %v1643
        %v1647 = vmul.f32 %v1631, %v1643
        %v1649 = vlaneseq
        %v1650 = vshrl.u32 %v1649, 7
        %v1651 = vsub.s32 0, %v1650
        %v1652 = vrot.slane %v1619, %v1651
        %v1653 = vlaneseq
        %v1654 = vshrl.u32 %v1653, 7
        %v1655 = vsub.s32 1, %v1654
        %v1656 = vrot.slane %v1619, %v1655
        %v1657 = vlaneseq
        %v1658 = vshrl.u32 %v1657, 7
        %v1659 = vsub.s32 2, %v1658
        %v1660 = vrot.slane %v1619, %v1659
        %v1661 = vlaneseq
        %v1662 = vshrl.u32 %v1661, 7
        %v1663 = vsub.s32 3, %v1662
        %v1664 = vrot.slane %v1619, %v1663
        %v1669 = vmul.f32 %v1644, %v1652
        %v1670 = vmul.f32 %v1645, %v1656
        %v1671 = vmul.f32 %v1646, %v1660
        %v1672 = vmul.f32 %v1647, %v1664
        %v1674 = vlaneseq
        %v1675 = vshrl.u32 %v1674, 7
        %v1676 = vsub.s32 0, %v1675
        %v1677 = vrot.slane %v1620, %v1676
        %v1678 = vlaneseq
        %v1679 = vshrl.u32 %v1678, 7
        %v1680 = vsub.s32 1, %v1679
        %v1681 = vrot.slane %v1620, %v1680
        %v1682 = vlaneseq
        %v1683 = vshrl.u32 %v1682, 7
        %v1684 = vsub.s32 2, %v1683
        %v1685 = vrot.slane %v1620, %v1684
        %v1686 = vlaneseq
        %v1687 = vshrl.u32 %v1686, 7
        %v1688 = vsub.s32 3, %v1687
        %v1689 = vrot.slane %v1620, %v1688
        %v1694 = vadd.f32 %v1669, %v1677
        %v1695 = vadd.f32 %v1670, %v1681
        %v1696 = vadd.f32 %v1671, %v1685
        %v1697 = vadd.f32 %v1672, %v1689
        %v1698 = vpack.c.bf16 %v1694, %v1694
        %v1699 = vpack.c.bf16 %v1695, %v1695
        %v1700 = vpack.c.bf16 %v1696, %v1696
        %v1701 = vpack.c.bf16 %v1697, %v1697
        %v1702 = vld [vmem:[%s656] sm:$0xff]
        %v1703 = vld [vmem:[%s656 + $0x8] sm:$0xff]
        %v1704 = vld [vmem:[%s656 + $0x10] sm:$0xff]
        %v1705 = vld [vmem:[%s656 + $0x18] sm:$0xff]
        %v1706 = vld [vmem:[%s656 + $0x20] sm:$0xff]
        %v1707 = vld [vmem:[%s656 + $0x28] sm:$0xff]
        %v1708 = vld [vmem:[%s656 + $0x30] sm:$0xff]
        %v1709 = vld [vmem:[%s656 + $0x38] sm:$0xff]
        %v1710 = vld [vmem:[%s656 + $0x40] sm:$0xff]
        %v1711 = vld [vmem:[%s656 + $0x48] sm:$0xff]
        %v1712 = vld [vmem:[%s656 + $0x50] sm:$0xff]
        %v1713 = vld [vmem:[%s656 + $0x58] sm:$0xff]
        %v1714 = vld [vmem:[%s656 + $0x60] sm:$0xff]
        %v1715 = vld [vmem:[%s656 + $0x68] sm:$0xff]
        %v1716 = vld [vmem:[%s656 + $0x70] sm:$0xff]
        %v1717 = vld [vmem:[%s656 + $0x78] sm:$0xff]
        %v1718 = vld [vmem:[%s656 + $0x80] sm:$0xff]
        %v1719 = vld [vmem:[%s656 + $0x88] sm:$0xff]
        %v1720 = vld [vmem:[%s656 + $0x90] sm:$0xff]
        %v1721 = vld [vmem:[%s656 + $0x98] sm:$0xff]
        %v1722 = vld [vmem:[%s656 + $0xa0] sm:$0xff]
        %v1723 = vld [vmem:[%s656 + $0xa8] sm:$0xff]
        %v1724 = vld [vmem:[%s656 + $0xb0] sm:$0xff]
        %v1725 = vld [vmem:[%s656 + $0xb8] sm:$0xff]
        %v1726 = vld [vmem:[%s656 + $0xc0] sm:$0xff]
        %v1727 = vld [vmem:[%s656 + $0xc8] sm:$0xff]
        %v1728 = vld [vmem:[%s656 + $0xd0] sm:$0xff]
        %v1729 = vld [vmem:[%s656 + $0xd8] sm:$0xff]
        %v1730 = vld [vmem:[%s656 + $0xe0] sm:$0xff]
        %v1731 = vld [vmem:[%s656 + $0xe8] sm:$0xff]
        %v1732 = vld [vmem:[%s656 + $0xf0] sm:$0xff]
        %v1733 = vld [vmem:[%s656 + $0xf8] sm:$0xff]
        %v1734 = vld [vmem:[%s656 + $0x100] sm:$0xff]
        %v1735 = vld [vmem:[%s656 + $0x108] sm:$0xff]
        %v1736 = vld [vmem:[%s656 + $0x110] sm:$0xff]
        %v1737 = vld [vmem:[%s656 + $0x118] sm:$0xff]
        %v1738 = vld [vmem:[%s656 + $0x120] sm:$0xff]
        %v1739 = vld [vmem:[%s656 + $0x128] sm:$0xff]
        %v1740 = vld [vmem:[%s656 + $0x130] sm:$0xff]
        %v1741 = vld [vmem:[%s656 + $0x138] sm:$0xff]
        %v1742 = vld [vmem:[%s656 + $0x140] sm:$0xff]
        %v1743 = vld [vmem:[%s656 + $0x148] sm:$0xff]
        %v1744 = vld [vmem:[%s656 + $0x150] sm:$0xff]
        %v1745 = vld [vmem:[%s656 + $0x158] sm:$0xff]
        %v1746 = vld [vmem:[%s656 + $0x160] sm:$0xff]
        %v1747 = vld [vmem:[%s656 + $0x168] sm:$0xff]
        %v1748 = vld [vmem:[%s656 + $0x170] sm:$0xff]
        %v1749 = vld [vmem:[%s656 + $0x178] sm:$0xff]
        %v1750 = vld [vmem:[%s656 + $0x180] sm:$0xff]
        %v1751 = vld [vmem:[%s656 + $0x188] sm:$0xff]
        %v1752 = vld [vmem:[%s656 + $0x190] sm:$0xff]
        %v1753 = vld [vmem:[%s656 + $0x198] sm:$0xff]
        %v1754 = vld [vmem:[%s656 + $0x1a0] sm:$0xff]
        %v1755 = vld [vmem:[%s656 + $0x1a8] sm:$0xff]
        %v1756 = vld [vmem:[%s656 + $0x1b0] sm:$0xff]
        %v1757 = vld [vmem:[%s656 + $0x1b8] sm:$0xff]
        %v1758 = vld [vmem:[%s656 + $0x1c0] sm:$0xff]
        %v1759 = vld [vmem:[%s656 + $0x1c8] sm:$0xff]
        %v1760 = vld [vmem:[%s656 + $0x1d0] sm:$0xff]
        %v1761 = vld [vmem:[%s656 + $0x1d8] sm:$0xff]
        %v1762 = vld [vmem:[%s656 + $0x1e0] sm:$0xff]
        %v1763 = vld [vmem:[%s656 + $0x1e8] sm:$0xff]
        %v1764 = vld [vmem:[%s656 + $0x1f0] sm:$0xff]
        %v1765 = vld [vmem:[%s656 + $0x1f8] sm:$0xff]
        %v1766 = vld [vmem:[%s656 + $0x200] sm:$0xff]
        %v1767 = vld [vmem:[%s656 + $0x208] sm:$0xff]
        %v1768 = vld [vmem:[%s656 + $0x210] sm:$0xff]
        %v1769 = vld [vmem:[%s656 + $0x218] sm:$0xff]
        %v1770 = vld [vmem:[%s656 + $0x220] sm:$0xff]
        %v1771 = vld [vmem:[%s656 + $0x228] sm:$0xff]
        %v1772 = vld [vmem:[%s656 + $0x230] sm:$0xff]
        %v1773 = vld [vmem:[%s656 + $0x238] sm:$0xff]
        %v1774 = vld [vmem:[%s656 + $0x240] sm:$0xff]
        %v1775 = vld [vmem:[%s656 + $0x248] sm:$0xff]
        %v1776 = vld [vmem:[%s656 + $0x250] sm:$0xff]
        %v1777 = vld [vmem:[%s656 + $0x258] sm:$0xff]
        %v1778 = vld [vmem:[%s656 + $0x260] sm:$0xff]
        %v1779 = vld [vmem:[%s656 + $0x268] sm:$0xff]
        %v1780 = vld [vmem:[%s656 + $0x270] sm:$0xff]
        %v1781 = vld [vmem:[%s656 + $0x278] sm:$0xff]
        %v1782 = vld [vmem:[%s656 + $0x280] sm:$0xff]
        %v1783 = vld [vmem:[%s656 + $0x288] sm:$0xff]
        %v1784 = vld [vmem:[%s656 + $0x290] sm:$0xff]
        %v1785 = vld [vmem:[%s656 + $0x298] sm:$0xff]
        %v1786 = vld [vmem:[%s656 + $0x2a0] sm:$0xff]
        %v1787 = vld [vmem:[%s656 + $0x2a8] sm:$0xff]
        %v1788 = vld [vmem:[%s656 + $0x2b0] sm:$0xff]
        %v1789 = vld [vmem:[%s656 + $0x2b8] sm:$0xff]
        %v1790 = vld [vmem:[%s656 + $0x2c0] sm:$0xff]
        %v1791 = vld [vmem:[%s656 + $0x2c8] sm:$0xff]
        %v1792 = vld [vmem:[%s656 + $0x2d0] sm:$0xff]
        %v1793 = vld [vmem:[%s656 + $0x2d8] sm:$0xff]
        %v1794 = vld [vmem:[%s656 + $0x2e0] sm:$0xff]
        %v1795 = vld [vmem:[%s656 + $0x2e8] sm:$0xff]
        %v1796 = vld [vmem:[%s656 + $0x2f0] sm:$0xff]
        %v1797 = vld [vmem:[%s656 + $0x2f8] sm:$0xff]
        %v1798 = vld [vmem:[%s656 + $0x300] sm:$0xff]
        %v1799 = vld [vmem:[%s656 + $0x308] sm:$0xff]
        %v1800 = vld [vmem:[%s656 + $0x310] sm:$0xff]
        %v1801 = vld [vmem:[%s656 + $0x318] sm:$0xff]
        %v1802 = vld [vmem:[%s656 + $0x320] sm:$0xff]
        %v1803 = vld [vmem:[%s656 + $0x328] sm:$0xff]
        %v1804 = vld [vmem:[%s656 + $0x330] sm:$0xff]
        %v1805 = vld [vmem:[%s656 + $0x338] sm:$0xff]
        %v1806 = vld [vmem:[%s656 + $0x340] sm:$0xff]
        %v1807 = vld [vmem:[%s656 + $0x348] sm:$0xff]
        %v1808 = vld [vmem:[%s656 + $0x350] sm:$0xff]
        %v1809 = vld [vmem:[%s656 + $0x358] sm:$0xff]
        %v1810 = vld [vmem:[%s656 + $0x360] sm:$0xff]
        %v1811 = vld [vmem:[%s656 + $0x368] sm:$0xff]
        %v1812 = vld [vmem:[%s656 + $0x370] sm:$0xff]
        %v1813 = vld [vmem:[%s656 + $0x378] sm:$0xff]
        %v1814 = vld [vmem:[%s656 + $0x380] sm:$0xff]
        %v1815 = vld [vmem:[%s656 + $0x388] sm:$0xff]
        %v1816 = vld [vmem:[%s656 + $0x390] sm:$0xff]
        %v1817 = vld [vmem:[%s656 + $0x398] sm:$0xff]
        %v1818 = vld [vmem:[%s656 + $0x3a0] sm:$0xff]
        %v1819 = vld [vmem:[%s656 + $0x3a8] sm:$0xff]
        %v1820 = vld [vmem:[%s656 + $0x3b0] sm:$0xff]
        %v1821 = vld [vmem:[%s656 + $0x3b8] sm:$0xff]
        %v1822 = vld [vmem:[%s656 + $0x3c0] sm:$0xff]
        %v1823 = vld [vmem:[%s656 + $0x3c8] sm:$0xff]
        %v1824 = vld [vmem:[%s656 + $0x3d0] sm:$0xff]
        %v1825 = vld [vmem:[%s656 + $0x3d8] sm:$0xff]
        %v1826 = vld [vmem:[%s656 + $0x3e0] sm:$0xff]
        %v1827 = vld [vmem:[%s656 + $0x3e8] sm:$0xff]
        %v1828 = vld [vmem:[%s656 + $0x3f0] sm:$0xff]
        %v1829 = vld [vmem:[%s656 + $0x3f8] sm:$0xff]
        %v1830 = vld [vmem:[%s656 + $0x400] sm:$0xff]
        %v1831 = vld [vmem:[%s656 + $0x408] sm:$0xff]
        %v1832 = vld [vmem:[%s656 + $0x410] sm:$0xff]
        %v1833 = vld [vmem:[%s656 + $0x418] sm:$0xff]
        %v1834 = vld [vmem:[%s656 + $0x420] sm:$0xff]
        %v1835 = vld [vmem:[%s656 + $0x428] sm:$0xff]
        %v1836 = vld [vmem:[%s656 + $0x430] sm:$0xff]
        %v1837 = vld [vmem:[%s656 + $0x438] sm:$0xff]
        %v1838 = vld [vmem:[%s656 + $0x440] sm:$0xff]
        %v1839 = vld [vmem:[%s656 + $0x448] sm:$0xff]
        %v1840 = vld [vmem:[%s656 + $0x450] sm:$0xff]
        %v1841 = vld [vmem:[%s656 + $0x458] sm:$0xff]
        %v1842 = vld [vmem:[%s656 + $0x460] sm:$0xff]
        %v1843 = vld [vmem:[%s656 + $0x468] sm:$0xff]
        %v1844 = vld [vmem:[%s656 + $0x470] sm:$0xff]
        %v1845 = vld [vmem:[%s656 + $0x478] sm:$0xff]
        %v1846 = vld [vmem:[%s656 + $0x480] sm:$0xff]
        %v1847 = vld [vmem:[%s656 + $0x488] sm:$0xff]
        %v1848 = vld [vmem:[%s656 + $0x490] sm:$0xff]
        %v1849 = vld [vmem:[%s656 + $0x498] sm:$0xff]
        %v1850 = vld [vmem:[%s656 + $0x4a0] sm:$0xff]
        %v1851 = vld [vmem:[%s656 + $0x4a8] sm:$0xff]
        %v1852 = vld [vmem:[%s656 + $0x4b0] sm:$0xff]
        %v1853 = vld [vmem:[%s656 + $0x4b8] sm:$0xff]
        %v1854 = vld [vmem:[%s656 + $0x4c0] sm:$0xff]
        %v1855 = vld [vmem:[%s656 + $0x4c8] sm:$0xff]
        %v1856 = vld [vmem:[%s656 + $0x4d0] sm:$0xff]
        %v1857 = vld [vmem:[%s656 + $0x4d8] sm:$0xff]
        %v1858 = vld [vmem:[%s656 + $0x4e0] sm:$0xff]
        %v1859 = vld [vmem:[%s656 + $0x4e8] sm:$0xff]
        %v1860 = vld [vmem:[%s656 + $0x4f0] sm:$0xff]
        %v1861 = vld [vmem:[%s656 + $0x4f8] sm:$0xff]
        %v1862 = vld [vmem:[%s656 + $0x500] sm:$0xff]
        %v1863 = vld [vmem:[%s656 + $0x508] sm:$0xff]
        %v1864 = vld [vmem:[%s656 + $0x510] sm:$0xff]
        %v1865 = vld [vmem:[%s656 + $0x518] sm:$0xff]
        %v1866 = vld [vmem:[%s656 + $0x520] sm:$0xff]
        %v1867 = vld [vmem:[%s656 + $0x528] sm:$0xff]
        %v1868 = vld [vmem:[%s656 + $0x530] sm:$0xff]
        %v1869 = vld [vmem:[%s656 + $0x538] sm:$0xff]
        %v1870 = vld [vmem:[%s656 + $0x540] sm:$0xff]
        %v1871 = vld [vmem:[%s656 + $0x548] sm:$0xff]
        %v1872 = vld [vmem:[%s656 + $0x550] sm:$0xff]
        %v1873 = vld [vmem:[%s656 + $0x558] sm:$0xff]
        %v1874 = vld [vmem:[%s656 + $0x560] sm:$0xff]
        %v1875 = vld [vmem:[%s656 + $0x568] sm:$0xff]
        %v1876 = vld [vmem:[%s656 + $0x570] sm:$0xff]
        %v1877 = vld [vmem:[%s656 + $0x578] sm:$0xff]
        %v1878 = vld [vmem:[%s656 + $0x580] sm:$0xff]
        %v1879 = vld [vmem:[%s656 + $0x588] sm:$0xff]
        %v1880 = vld [vmem:[%s656 + $0x590] sm:$0xff]
        %v1881 = vld [vmem:[%s656 + $0x598] sm:$0xff]
        %v1882 = vld [vmem:[%s656 + $0x5a0] sm:$0xff]
        %v1883 = vld [vmem:[%s656 + $0x5a8] sm:$0xff]
        %v1884 = vld [vmem:[%s656 + $0x5b0] sm:$0xff]
        %v1885 = vld [vmem:[%s656 + $0x5b8] sm:$0xff]
        %v1886 = vld [vmem:[%s656 + $0x5c0] sm:$0xff]
        %v1887 = vld [vmem:[%s656 + $0x5c8] sm:$0xff]
        %v1888 = vld [vmem:[%s656 + $0x5d0] sm:$0xff]
        %v1889 = vld [vmem:[%s656 + $0x5d8] sm:$0xff]
        %v1890 = vld [vmem:[%s656 + $0x5e0] sm:$0xff]
        %v1891 = vld [vmem:[%s656 + $0x5e8] sm:$0xff]
        %v1892 = vld [vmem:[%s656 + $0x5f0] sm:$0xff]
        %v1893 = vld [vmem:[%s656 + $0x5f8] sm:$0xff]
        %v1894 = vld [vmem:[%s656 + $0x600] sm:$0xff]
        %v1895 = vld [vmem:[%s656 + $0x608] sm:$0xff]
        %v1896 = vld [vmem:[%s656 + $0x610] sm:$0xff]
        %v1897 = vld [vmem:[%s656 + $0x618] sm:$0xff]
        %v1898 = vld [vmem:[%s656 + $0x620] sm:$0xff]
        %v1899 = vld [vmem:[%s656 + $0x628] sm:$0xff]
        %v1900 = vld [vmem:[%s656 + $0x630] sm:$0xff]
        %v1901 = vld [vmem:[%s656 + $0x638] sm:$0xff]
        %v1902 = vld [vmem:[%s656 + $0x640] sm:$0xff]
        %v1903 = vld [vmem:[%s656 + $0x648] sm:$0xff]
        %v1904 = vld [vmem:[%s656 + $0x650] sm:$0xff]
        %v1905 = vld [vmem:[%s656 + $0x658] sm:$0xff]
        %v1906 = vld [vmem:[%s656 + $0x660] sm:$0xff]
        %v1907 = vld [vmem:[%s656 + $0x668] sm:$0xff]
        %v1908 = vld [vmem:[%s656 + $0x670] sm:$0xff]
        %v1909 = vld [vmem:[%s656 + $0x678] sm:$0xff]
        %v1910 = vld [vmem:[%s656 + $0x680] sm:$0xff]
        %v1911 = vld [vmem:[%s656 + $0x688] sm:$0xff]
        %v1912 = vld [vmem:[%s656 + $0x690] sm:$0xff]
        %v1913 = vld [vmem:[%s656 + $0x698] sm:$0xff]
        %v1914 = vld [vmem:[%s656 + $0x6a0] sm:$0xff]
        %v1915 = vld [vmem:[%s656 + $0x6a8] sm:$0xff]
        %v1916 = vld [vmem:[%s656 + $0x6b0] sm:$0xff]
        %v1917 = vld [vmem:[%s656 + $0x6b8] sm:$0xff]
        %v1918 = vld [vmem:[%s656 + $0x6c0] sm:$0xff]
        %v1919 = vld [vmem:[%s656 + $0x6c8] sm:$0xff]
        %v1920 = vld [vmem:[%s656 + $0x6d0] sm:$0xff]
        %v1921 = vld [vmem:[%s656 + $0x6d8] sm:$0xff]
        %v1922 = vld [vmem:[%s656 + $0x6e0] sm:$0xff]
        %v1923 = vld [vmem:[%s656 + $0x6e8] sm:$0xff]
        %v1924 = vld [vmem:[%s656 + $0x6f0] sm:$0xff]
        %v1925 = vld [vmem:[%s656 + $0x6f8] sm:$0xff]
        %v1926 = vld [vmem:[%s656 + $0x700] sm:$0xff]
        %v1927 = vld [vmem:[%s656 + $0x708] sm:$0xff]
        %v1928 = vld [vmem:[%s656 + $0x710] sm:$0xff]
        %v1929 = vld [vmem:[%s656 + $0x718] sm:$0xff]
        %v1930 = vld [vmem:[%s656 + $0x720] sm:$0xff]
        %v1931 = vld [vmem:[%s656 + $0x728] sm:$0xff]
        %v1932 = vld [vmem:[%s656 + $0x730] sm:$0xff]
        %v1933 = vld [vmem:[%s656 + $0x738] sm:$0xff]
        %v1934 = vld [vmem:[%s656 + $0x740] sm:$0xff]
        %v1935 = vld [vmem:[%s656 + $0x748] sm:$0xff]
        %v1936 = vld [vmem:[%s656 + $0x750] sm:$0xff]
        %v1937 = vld [vmem:[%s656 + $0x758] sm:$0xff]
        %v1938 = vld [vmem:[%s656 + $0x760] sm:$0xff]
        %v1939 = vld [vmem:[%s656 + $0x768] sm:$0xff]
        %v1940 = vld [vmem:[%s656 + $0x770] sm:$0xff]
        %v1941 = vld [vmem:[%s656 + $0x778] sm:$0xff]
        %v1942 = vld [vmem:[%s656 + $0x780] sm:$0xff]
        %v1943 = vld [vmem:[%s656 + $0x788] sm:$0xff]
        %v1944 = vld [vmem:[%s656 + $0x790] sm:$0xff]
        %v1945 = vld [vmem:[%s656 + $0x798] sm:$0xff]
        %v1946 = vld [vmem:[%s656 + $0x7a0] sm:$0xff]
        %v1947 = vld [vmem:[%s656 + $0x7a8] sm:$0xff]
        %v1948 = vld [vmem:[%s656 + $0x7b0] sm:$0xff]
        %v1949 = vld [vmem:[%s656 + $0x7b8] sm:$0xff]
        %v1950 = vld [vmem:[%s656 + $0x7c0] sm:$0xff]
        %v1951 = vld [vmem:[%s656 + $0x7c8] sm:$0xff]
        %v1952 = vld [vmem:[%s656 + $0x7d0] sm:$0xff]
        %v1953 = vld [vmem:[%s656 + $0x7d8] sm:$0xff]
        %v1954 = vld [vmem:[%s656 + $0x7e0] sm:$0xff]
        %v1955 = vld [vmem:[%s656 + $0x7e8] sm:$0xff]
        %v1956 = vld [vmem:[%s656 + $0x7f0] sm:$0xff]
        %v1957 = vld [vmem:[%s656 + $0x7f8] sm:$0xff]
        %v1958 = vld [vmem:[%s656 + $0x800] sm:$0xff]
        %v1959 = vld [vmem:[%s656 + $0x808] sm:$0xff]
        %v1960 = vld [vmem:[%s656 + $0x810] sm:$0xff]
        %v1961 = vld [vmem:[%s656 + $0x818] sm:$0xff]
        %v1962 = vld [vmem:[%s656 + $0x820] sm:$0xff]
        %v1963 = vld [vmem:[%s656 + $0x828] sm:$0xff]
        %v1964 = vld [vmem:[%s656 + $0x830] sm:$0xff]
        %v1965 = vld [vmem:[%s656 + $0x838] sm:$0xff]
        %v1966 = vld [vmem:[%s656 + $0x840] sm:$0xff]
        %v1967 = vld [vmem:[%s656 + $0x848] sm:$0xff]
        %v1968 = vld [vmem:[%s656 + $0x850] sm:$0xff]
        %v1969 = vld [vmem:[%s656 + $0x858] sm:$0xff]
        %v1970 = vld [vmem:[%s656 + $0x860] sm:$0xff]
        %v1971 = vld [vmem:[%s656 + $0x868] sm:$0xff]
        %v1972 = vld [vmem:[%s656 + $0x870] sm:$0xff]
        %v1973 = vld [vmem:[%s656 + $0x878] sm:$0xff]
        %v1974 = vld [vmem:[%s656 + $0x880] sm:$0xff]
        %v1975 = vld [vmem:[%s656 + $0x888] sm:$0xff]
        %v1976 = vld [vmem:[%s656 + $0x890] sm:$0xff]
        %v1977 = vld [vmem:[%s656 + $0x898] sm:$0xff]
        %v1978 = vld [vmem:[%s656 + $0x8a0] sm:$0xff]
        %v1979 = vld [vmem:[%s656 + $0x8a8] sm:$0xff]
        %v1980 = vld [vmem:[%s656 + $0x8b0] sm:$0xff]
        %v1981 = vld [vmem:[%s656 + $0x8b8] sm:$0xff]
        %v1982 = vld [vmem:[%s656 + $0x8c0] sm:$0xff]
        %v1983 = vld [vmem:[%s656 + $0x8c8] sm:$0xff]
        %v1984 = vld [vmem:[%s656 + $0x8d0] sm:$0xff]
        %v1985 = vld [vmem:[%s656 + $0x8d8] sm:$0xff]
        %v1986 = vld [vmem:[%s656 + $0x8e0] sm:$0xff]
        %v1987 = vld [vmem:[%s656 + $0x8e8] sm:$0xff]
        %v1988 = vld [vmem:[%s656 + $0x8f0] sm:$0xff]
        %v1989 = vld [vmem:[%s656 + $0x8f8] sm:$0xff]
        %v1990 = vld [vmem:[%s656 + $0x900] sm:$0xff]
        %v1991 = vld [vmem:[%s656 + $0x908] sm:$0xff]
        %v1992 = vld [vmem:[%s656 + $0x910] sm:$0xff]
        %v1993 = vld [vmem:[%s656 + $0x918] sm:$0xff]
        %v1994 = vld [vmem:[%s656 + $0x920] sm:$0xff]
        %v1995 = vld [vmem:[%s656 + $0x928] sm:$0xff]
        %v1996 = vld [vmem:[%s656 + $0x930] sm:$0xff]
        %v1997 = vld [vmem:[%s656 + $0x938] sm:$0xff]
        %v1998 = vld [vmem:[%s656 + $0x940] sm:$0xff]
        %v1999 = vld [vmem:[%s656 + $0x948] sm:$0xff]
        %v2000 = vld [vmem:[%s656 + $0x950] sm:$0xff]
        %v2001 = vld [vmem:[%s656 + $0x958] sm:$0xff]
        %v2002 = vld [vmem:[%s656 + $0x960] sm:$0xff]
        %v2003 = vld [vmem:[%s656 + $0x968] sm:$0xff]
        %v2004 = vld [vmem:[%s656 + $0x970] sm:$0xff]
        %v2005 = vld [vmem:[%s656 + $0x978] sm:$0xff]
        %v2006 = vld [vmem:[%s656 + $0x980] sm:$0xff]
        %v2007 = vld [vmem:[%s656 + $0x988] sm:$0xff]
        %v2008 = vld [vmem:[%s656 + $0x990] sm:$0xff]
        %v2009 = vld [vmem:[%s656 + $0x998] sm:$0xff]
        %v2010 = vld [vmem:[%s656 + $0x9a0] sm:$0xff]
        %v2011 = vld [vmem:[%s656 + $0x9a8] sm:$0xff]
        %v2012 = vld [vmem:[%s656 + $0x9b0] sm:$0xff]
        %v2013 = vld [vmem:[%s656 + $0x9b8] sm:$0xff]
        %v2014 = vld [vmem:[%s656 + $0x9c0] sm:$0xff]
        %v2015 = vld [vmem:[%s656 + $0x9c8] sm:$0xff]
        %v2016 = vld [vmem:[%s656 + $0x9d0] sm:$0xff]
        %v2017 = vld [vmem:[%s656 + $0x9d8] sm:$0xff]
        %v2018 = vld [vmem:[%s656 + $0x9e0] sm:$0xff]
        %v2019 = vld [vmem:[%s656 + $0x9e8] sm:$0xff]
        %v2020 = vld [vmem:[%s656 + $0x9f0] sm:$0xff]
        %v2021 = vld [vmem:[%s656 + $0x9f8] sm:$0xff]
        %v2022 = vld [vmem:[%s656 + $0xa00] sm:$0xff]
        %v2023 = vld [vmem:[%s656 + $0xa08] sm:$0xff]
        %v2024 = vld [vmem:[%s656 + $0xa10] sm:$0xff]
        %v2025 = vld [vmem:[%s656 + $0xa18] sm:$0xff]
        %v2026 = vld [vmem:[%s656 + $0xa20] sm:$0xff]
        %v2027 = vld [vmem:[%s656 + $0xa28] sm:$0xff]
        %v2028 = vld [vmem:[%s656 + $0xa30] sm:$0xff]
        %v2029 = vld [vmem:[%s656 + $0xa38] sm:$0xff]
        %v2030 = vld [vmem:[%s656 + $0xa40] sm:$0xff]
        %v2031 = vld [vmem:[%s656 + $0xa48] sm:$0xff]
        %v2032 = vld [vmem:[%s656 + $0xa50] sm:$0xff]
        %v2033 = vld [vmem:[%s656 + $0xa58] sm:$0xff]
        %v2034 = vld [vmem:[%s656 + $0xa60] sm:$0xff]
        %v2035 = vld [vmem:[%s656 + $0xa68] sm:$0xff]
        %v2036 = vld [vmem:[%s656 + $0xa70] sm:$0xff]
        %v2037 = vld [vmem:[%s656 + $0xa78] sm:$0xff]
        %v2038 = vld [vmem:[%s656 + $0xa80] sm:$0xff]
        %v2039 = vld [vmem:[%s656 + $0xa88] sm:$0xff]
        %v2040 = vld [vmem:[%s656 + $0xa90] sm:$0xff]
        %v2041 = vld [vmem:[%s656 + $0xa98] sm:$0xff]
        %v2042 = vld [vmem:[%s656 + $0xaa0] sm:$0xff]
        %v2043 = vld [vmem:[%s656 + $0xaa8] sm:$0xff]
        %v2044 = vld [vmem:[%s656 + $0xab0] sm:$0xff]
        %v2045 = vld [vmem:[%s656 + $0xab8] sm:$0xff]
        %v2046 = vld [vmem:[%s656 + $0xac0] sm:$0xff]
        %v2047 = vld [vmem:[%s656 + $0xac8] sm:$0xff]
        %v2048 = vld [vmem:[%s656 + $0xad0] sm:$0xff]
        %v2049 = vld [vmem:[%s656 + $0xad8] sm:$0xff]
        %v2050 = vld [vmem:[%s656 + $0xae0] sm:$0xff]
        %v2051 = vld [vmem:[%s656 + $0xae8] sm:$0xff]
        %v2052 = vld [vmem:[%s656 + $0xaf0] sm:$0xff]
        %v2053 = vld [vmem:[%s656 + $0xaf8] sm:$0xff]
        %v2054 = vld [vmem:[%s656 + $0xb00] sm:$0xff]
        %v2055 = vld [vmem:[%s656 + $0xb08] sm:$0xff]
        %v2056 = vld [vmem:[%s656 + $0xb10] sm:$0xff]
        %v2057 = vld [vmem:[%s656 + $0xb18] sm:$0xff]
        %v2058 = vld [vmem:[%s656 + $0xb20] sm:$0xff]
        %v2059 = vld [vmem:[%s656 + $0xb28] sm:$0xff]
        %v2060 = vld [vmem:[%s656 + $0xb30] sm:$0xff]
        %v2061 = vld [vmem:[%s656 + $0xb38] sm:$0xff]
        %v2062 = vld [vmem:[%s656 + $0xb40] sm:$0xff]
        %v2063 = vld [vmem:[%s656 + $0xb48] sm:$0xff]
        %v2064 = vld [vmem:[%s656 + $0xb50] sm:$0xff]
        %v2065 = vld [vmem:[%s656 + $0xb58] sm:$0xff]
        %v2066 = vld [vmem:[%s656 + $0xb60] sm:$0xff]
        %v2067 = vld [vmem:[%s656 + $0xb68] sm:$0xff]
        %v2068 = vld [vmem:[%s656 + $0xb70] sm:$0xff]
        %v2069 = vld [vmem:[%s656 + $0xb78] sm:$0xff]
        %v2070 = vld [vmem:[%s656 + $0xb80] sm:$0xff]
        %v2071 = vld [vmem:[%s656 + $0xb88] sm:$0xff]
        %v2072 = vld [vmem:[%s656 + $0xb90] sm:$0xff]
        %v2073 = vld [vmem:[%s656 + $0xb98] sm:$0xff]
        %v2074 = vld [vmem:[%s656 + $0xba0] sm:$0xff]
        %v2075 = vld [vmem:[%s656 + $0xba8] sm:$0xff]
        %v2076 = vld [vmem:[%s656 + $0xbb0] sm:$0xff]
        %v2077 = vld [vmem:[%s656 + $0xbb8] sm:$0xff]
        %v2078 = vld [vmem:[%s656 + $0xbc0] sm:$0xff]
        %v2079 = vld [vmem:[%s656 + $0xbc8] sm:$0xff]
        %v2080 = vld [vmem:[%s656 + $0xbd0] sm:$0xff]
        %v2081 = vld [vmem:[%s656 + $0xbd8] sm:$0xff]
        %v2082 = vld [vmem:[%s656 + $0xbe0] sm:$0xff]
        %v2083 = vld [vmem:[%s656 + $0xbe8] sm:$0xff]
        %v2084 = vld [vmem:[%s656 + $0xbf0] sm:$0xff]
        %v2085 = vld [vmem:[%s656 + $0xbf8] sm:$0xff]
        %v2086 = vld [vmem:[%s656 + $0xc00] sm:$0xff]
        %v2087 = vld [vmem:[%s656 + $0xc08] sm:$0xff]
        %v2088 = vld [vmem:[%s656 + $0xc10] sm:$0xff]
        %v2089 = vld [vmem:[%s656 + $0xc18] sm:$0xff]
        %v2090 = vld [vmem:[%s656 + $0xc20] sm:$0xff]
        %v2091 = vld [vmem:[%s656 + $0xc28] sm:$0xff]
        %v2092 = vld [vmem:[%s656 + $0xc30] sm:$0xff]
        %v2093 = vld [vmem:[%s656 + $0xc38] sm:$0xff]
        %v2094 = vld [vmem:[%s656 + $0xc40] sm:$0xff]
        %v2095 = vld [vmem:[%s656 + $0xc48] sm:$0xff]
        %v2096 = vld [vmem:[%s656 + $0xc50] sm:$0xff]
        %v2097 = vld [vmem:[%s656 + $0xc58] sm:$0xff]
        %v2098 = vld [vmem:[%s656 + $0xc60] sm:$0xff]
        %v2099 = vld [vmem:[%s656 + $0xc68] sm:$0xff]
        %v2100 = vld [vmem:[%s656 + $0xc70] sm:$0xff]
        %v2101 = vld [vmem:[%s656 + $0xc78] sm:$0xff]
        %v2102 = vld [vmem:[%s656 + $0xc80] sm:$0xff]
        %v2103 = vld [vmem:[%s656 + $0xc88] sm:$0xff]
        %v2104 = vld [vmem:[%s656 + $0xc90] sm:$0xff]
        %v2105 = vld [vmem:[%s656 + $0xc98] sm:$0xff]
        %v2106 = vld [vmem:[%s656 + $0xca0] sm:$0xff]
        %v2107 = vld [vmem:[%s656 + $0xca8] sm:$0xff]
        %v2108 = vld [vmem:[%s656 + $0xcb0] sm:$0xff]
        %v2109 = vld [vmem:[%s656 + $0xcb8] sm:$0xff]
        %v2110 = vld [vmem:[%s656 + $0xcc0] sm:$0xff]
        %v2111 = vld [vmem:[%s656 + $0xcc8] sm:$0xff]
        %v2112 = vld [vmem:[%s656 + $0xcd0] sm:$0xff]
        %v2113 = vld [vmem:[%s656 + $0xcd8] sm:$0xff]
        %v2114 = vld [vmem:[%s656 + $0xce0] sm:$0xff]
        %v2115 = vld [vmem:[%s656 + $0xce8] sm:$0xff]
        %v2116 = vld [vmem:[%s656 + $0xcf0] sm:$0xff]
        %v2117 = vld [vmem:[%s656 + $0xcf8] sm:$0xff]
        %v2118 = vld [vmem:[%s656 + $0xd00] sm:$0xff]
        %v2119 = vld [vmem:[%s656 + $0xd08] sm:$0xff]
        %v2120 = vld [vmem:[%s656 + $0xd10] sm:$0xff]
        %v2121 = vld [vmem:[%s656 + $0xd18] sm:$0xff]
        %v2122 = vld [vmem:[%s656 + $0xd20] sm:$0xff]
        %v2123 = vld [vmem:[%s656 + $0xd28] sm:$0xff]
        %v2124 = vld [vmem:[%s656 + $0xd30] sm:$0xff]
        %v2125 = vld [vmem:[%s656 + $0xd38] sm:$0xff]
        %v2126 = vld [vmem:[%s656 + $0xd40] sm:$0xff]
        %v2127 = vld [vmem:[%s656 + $0xd48] sm:$0xff]
        %v2128 = vld [vmem:[%s656 + $0xd50] sm:$0xff]
        %v2129 = vld [vmem:[%s656 + $0xd58] sm:$0xff]
        %v2130 = vld [vmem:[%s656 + $0xd60] sm:$0xff]
        %v2131 = vld [vmem:[%s656 + $0xd68] sm:$0xff]
        %v2132 = vld [vmem:[%s656 + $0xd70] sm:$0xff]
        %v2133 = vld [vmem:[%s656 + $0xd78] sm:$0xff]
        %v2134 = vld [vmem:[%s656 + $0xd80] sm:$0xff]
        %v2135 = vld [vmem:[%s656 + $0xd88] sm:$0xff]
        %v2136 = vld [vmem:[%s656 + $0xd90] sm:$0xff]
        %v2137 = vld [vmem:[%s656 + $0xd98] sm:$0xff]
        %v2138 = vld [vmem:[%s656 + $0xda0] sm:$0xff]
        %v2139 = vld [vmem:[%s656 + $0xda8] sm:$0xff]
        %v2140 = vld [vmem:[%s656 + $0xdb0] sm:$0xff]
        %v2141 = vld [vmem:[%s656 + $0xdb8] sm:$0xff]
        %v2142 = vld [vmem:[%s656 + $0xdc0] sm:$0xff]
        %v2143 = vld [vmem:[%s656 + $0xdc8] sm:$0xff]
        %v2144 = vld [vmem:[%s656 + $0xdd0] sm:$0xff]
        %v2145 = vld [vmem:[%s656 + $0xdd8] sm:$0xff]
        %v2146 = vld [vmem:[%s656 + $0xde0] sm:$0xff]
        %v2147 = vld [vmem:[%s656 + $0xde8] sm:$0xff]
        %v2148 = vld [vmem:[%s656 + $0xdf0] sm:$0xff]
        %v2149 = vld [vmem:[%s656 + $0xdf8] sm:$0xff]
        %v2150 = vld [vmem:[%s656 + $0xe00] sm:$0xff]
        %v2151 = vld [vmem:[%s656 + $0xe08] sm:$0xff]
        %v2152 = vld [vmem:[%s656 + $0xe10] sm:$0xff]
        %v2153 = vld [vmem:[%s656 + $0xe18] sm:$0xff]
        %v2154 = vld [vmem:[%s656 + $0xe20] sm:$0xff]
        %v2155 = vld [vmem:[%s656 + $0xe28] sm:$0xff]
        %v2156 = vld [vmem:[%s656 + $0xe30] sm:$0xff]
        %v2157 = vld [vmem:[%s656 + $0xe38] sm:$0xff]
        %v2158 = vld [vmem:[%s656 + $0xe40] sm:$0xff]
        %v2159 = vld [vmem:[%s656 + $0xe48] sm:$0xff]
        %v2160 = vld [vmem:[%s656 + $0xe50] sm:$0xff]
        %v2161 = vld [vmem:[%s656 + $0xe58] sm:$0xff]
        %v2162 = vld [vmem:[%s656 + $0xe60] sm:$0xff]
        %v2163 = vld [vmem:[%s656 + $0xe68] sm:$0xff]
        %v2164 = vld [vmem:[%s656 + $0xe70] sm:$0xff]
        %v2165 = vld [vmem:[%s656 + $0xe78] sm:$0xff]
        %v2166 = vld [vmem:[%s656 + $0xe80] sm:$0xff]
        %v2167 = vld [vmem:[%s656 + $0xe88] sm:$0xff]
        %v2168 = vld [vmem:[%s656 + $0xe90] sm:$0xff]
        %v2169 = vld [vmem:[%s656 + $0xe98] sm:$0xff]
        %v2170 = vld [vmem:[%s656 + $0xea0] sm:$0xff]
        %v2171 = vld [vmem:[%s656 + $0xea8] sm:$0xff]
        %v2172 = vld [vmem:[%s656 + $0xeb0] sm:$0xff]
        %v2173 = vld [vmem:[%s656 + $0xeb8] sm:$0xff]
        %v2174 = vld [vmem:[%s656 + $0xec0] sm:$0xff]
        %v2175 = vld [vmem:[%s656 + $0xec8] sm:$0xff]
        %v2176 = vld [vmem:[%s656 + $0xed0] sm:$0xff]
        %v2177 = vld [vmem:[%s656 + $0xed8] sm:$0xff]
        %v2178 = vld [vmem:[%s656 + $0xee0] sm:$0xff]
        %v2179 = vld [vmem:[%s656 + $0xee8] sm:$0xff]
        %v2180 = vld [vmem:[%s656 + $0xef0] sm:$0xff]
        %v2181 = vld [vmem:[%s656 + $0xef8] sm:$0xff]
        %v2182 = vld [vmem:[%s656 + $0xf00] sm:$0xff]
        %v2183 = vld [vmem:[%s656 + $0xf08] sm:$0xff]
        %v2184 = vld [vmem:[%s656 + $0xf10] sm:$0xff]
        %v2185 = vld [vmem:[%s656 + $0xf18] sm:$0xff]
        %v2186 = vld [vmem:[%s656 + $0xf20] sm:$0xff]
        %v2187 = vld [vmem:[%s656 + $0xf28] sm:$0xff]
        %v2188 = vld [vmem:[%s656 + $0xf30] sm:$0xff]
        %v2189 = vld [vmem:[%s656 + $0xf38] sm:$0xff]
        %v2190 = vld [vmem:[%s656 + $0xf40] sm:$0xff]
        %v2191 = vld [vmem:[%s656 + $0xf48] sm:$0xff]
        %v2192 = vld [vmem:[%s656 + $0xf50] sm:$0xff]
        %v2193 = vld [vmem:[%s656 + $0xf58] sm:$0xff]
        %v2194 = vld [vmem:[%s656 + $0xf60] sm:$0xff]
        %v2195 = vld [vmem:[%s656 + $0xf68] sm:$0xff]
        %v2196 = vld [vmem:[%s656 + $0xf70] sm:$0xff]
        %v2197 = vld [vmem:[%s656 + $0xf78] sm:$0xff]
        %v2198 = vld [vmem:[%s656 + $0xf80] sm:$0xff]
        %v2199 = vld [vmem:[%s656 + $0xf88] sm:$0xff]
        %v2200 = vld [vmem:[%s656 + $0xf90] sm:$0xff]
        %v2201 = vld [vmem:[%s656 + $0xf98] sm:$0xff]
        %v2202 = vld [vmem:[%s656 + $0xfa0] sm:$0xff]
        %v2203 = vld [vmem:[%s656 + $0xfa8] sm:$0xff]
        %v2204 = vld [vmem:[%s656 + $0xfb0] sm:$0xff]
        %v2205 = vld [vmem:[%s656 + $0xfb8] sm:$0xff]
        %v2206 = vld [vmem:[%s656 + $0xfc0] sm:$0xff]
        %v2207 = vld [vmem:[%s656 + $0xfc8] sm:$0xff]
        %v2208 = vld [vmem:[%s656 + $0xfd0] sm:$0xff]
        %v2209 = vld [vmem:[%s656 + $0xfd8] sm:$0xff]
        %v2210 = vld [vmem:[%s656 + $0xfe0] sm:$0xff]
        %v2211 = vld [vmem:[%s656 + $0xfe8] sm:$0xff]
        %v2212 = vld [vmem:[%s656 + $0xff0] sm:$0xff]
        %v2213 = vld [vmem:[%s656 + $0xff8] sm:$0xff]
        %v2214 = vld [vmem:[%s665] sm:$0xff]
        %v2215 = vld [vmem:[%s665 + $0x8] sm:$0xff]
        %v2218 = vlaneseq
        %v2219 = vshrl.u32 %v2218, 7
        %v2220 = vsub.s32 0, %v2219
        %v2221 = vrot.slane %v2214, %v2220
        %v2222 = vlaneseq
        %v2223 = vshrl.u32 %v2222, 7
        %v2224 = vsub.s32 1, %v2223
        %v2225 = vrot.slane %v2214, %v2224
        %v2226 = vlaneseq
        %v2227 = vshrl.u32 %v2226, 7
        %v2228 = vsub.s32 2, %v2227
        %v2229 = vrot.slane %v2214, %v2228
        %v2230 = vlaneseq
        %v2231 = vshrl.u32 %v2230, 7
        %v2232 = vsub.s32 3, %v2231
        %v2233 = vrot.slane %v2214, %v2232
        %v2234 = vlaneseq
        %v2235 = vshrl.u32 %v2234, 7
        %v2236 = vsub.s32 4, %v2235
        %v2237 = vrot.slane %v2214, %v2236
        %v2238 = vlaneseq
        %v2239 = vshrl.u32 %v2238, 7
        %v2240 = vsub.s32 5, %v2239
        %v2241 = vrot.slane %v2214, %v2240
        %v2242 = vlaneseq
        %v2243 = vshrl.u32 %v2242, 7
        %v2244 = vsub.s32 6, %v2243
        %v2245 = vrot.slane %v2214, %v2244
        %v2246 = vlaneseq
        %v2247 = vshrl.u32 %v2246, 7
        %v2248 = vsub.s32 7, %v2247
        %v2249 = vrot.slane %v2214, %v2248
        %v2250 = vlaneseq
        %v2251 = vshrl.u32 %v2250, 7
        %v2252 = vsub.s32 0, %v2251
        %v2253 = vrot.slane %v2215, %v2252
        %v2254 = vlaneseq
        %v2255 = vshrl.u32 %v2254, 7
        %v2256 = vsub.s32 1, %v2255
        %v2257 = vrot.slane %v2215, %v2256
        %v2258 = vlaneseq
        %v2259 = vshrl.u32 %v2258, 7
        %v2260 = vsub.s32 2, %v2259
        %v2261 = vrot.slane %v2215, %v2260
        %v2262 = vlaneseq
        %v2263 = vshrl.u32 %v2262, 7
        %v2264 = vsub.s32 3, %v2263
        %v2265 = vrot.slane %v2215, %v2264
        %v2266 = vlaneseq
        %v2267 = vshrl.u32 %v2266, 7
        %v2268 = vsub.s32 4, %v2267
        %v2269 = vrot.slane %v2215, %v2268
        %v2270 = vlaneseq
        %v2271 = vshrl.u32 %v2270, 7
        %v2272 = vsub.s32 5, %v2271
        %v2273 = vrot.slane %v2215, %v2272
        %v2274 = vlaneseq
        %v2275 = vshrl.u32 %v2274, 7
        %v2276 = vsub.s32 6, %v2275
        %v2277 = vrot.slane %v2215, %v2276
        %v2278 = vlaneseq
        %v2279 = vshrl.u32 %v2278, 7
        %v2280 = vsub.s32 7, %v2279
        %v2281 = vrot.slane %v2215, %v2280
        %v2810 = vunpack.c.l.b16 %v1702
        %v2811 = vunpack.c.h.b16 %v1702
        %v2812 = vunpack.c.l.b16 %v1703
        %v2813 = vunpack.c.h.b16 %v1703
        %v2814 = vunpack.c.l.b16 %v1704
        %v2815 = vunpack.c.h.b16 %v1704
        %v2816 = vunpack.c.l.b16 %v1705
        %v2817 = vunpack.c.h.b16 %v1705
        %v2818 = vunpack.c.l.b16 %v1706
        %v2819 = vunpack.c.h.b16 %v1706
        %v2820 = vunpack.c.l.b16 %v1707
        %v2821 = vunpack.c.h.b16 %v1707
        %v2822 = vunpack.c.l.b16 %v1708
        %v2823 = vunpack.c.h.b16 %v1708
        %v2824 = vunpack.c.l.b16 %v1709
        %v2825 = vunpack.c.h.b16 %v1709
        %v2826 = vunpack.c.l.b16 %v1710
        %v2827 = vunpack.c.h.b16 %v1710
        %v2828 = vunpack.c.l.b16 %v1711
        %v2829 = vunpack.c.h.b16 %v1711
        %v2830 = vunpack.c.l.b16 %v1712
        %v2831 = vunpack.c.h.b16 %v1712
        %v2832 = vunpack.c.l.b16 %v1713
        %v2833 = vunpack.c.h.b16 %v1713
        %v2834 = vunpack.c.l.b16 %v1714
        %v2835 = vunpack.c.h.b16 %v1714
        %v2836 = vunpack.c.l.b16 %v1715
        %v2837 = vunpack.c.h.b16 %v1715
        %v2838 = vunpack.c.l.b16 %v1716
        %v2839 = vunpack.c.h.b16 %v1716
        %v2840 = vunpack.c.l.b16 %v1717
        %v2841 = vunpack.c.h.b16 %v1717
        %v2842 = vunpack.c.l.b16 %v1718
        %v2843 = vunpack.c.h.b16 %v1718
        %v2844 = vunpack.c.l.b16 %v1719
        %v2845 = vunpack.c.h.b16 %v1719
        %v2846 = vunpack.c.l.b16 %v1720
        %v2847 = vunpack.c.h.b16 %v1720
        %v2848 = vunpack.c.l.b16 %v1721
        %v2849 = vunpack.c.h.b16 %v1721
        %v2850 = vunpack.c.l.b16 %v1722
        %v2851 = vunpack.c.h.b16 %v1722
        %v2852 = vunpack.c.l.b16 %v1723
        %v2853 = vunpack.c.h.b16 %v1723
        %v2854 = vunpack.c.l.b16 %v1724
        %v2855 = vunpack.c.h.b16 %v1724
        %v2856 = vunpack.c.l.b16 %v1725
        %v2857 = vunpack.c.h.b16 %v1725
        %v2858 = vunpack.c.l.b16 %v1726
        %v2859 = vunpack.c.h.b16 %v1726
        %v2860 = vunpack.c.l.b16 %v1727
        %v2861 = vunpack.c.h.b16 %v1727
        %v2862 = vunpack.c.l.b16 %v1728
        %v2863 = vunpack.c.h.b16 %v1728
        %v2864 = vunpack.c.l.b16 %v1729
        %v2865 = vunpack.c.h.b16 %v1729
        %v2866 = vunpack.c.l.b16 %v1730
        %v2867 = vunpack.c.h.b16 %v1730
        %v2868 = vunpack.c.l.b16 %v1731
        %v2869 = vunpack.c.h.b16 %v1731
        %v2870 = vunpack.c.l.b16 %v1732
        %v2871 = vunpack.c.h.b16 %v1732
        %v2872 = vunpack.c.l.b16 %v1733
        %v2873 = vunpack.c.h.b16 %v1733
        %v2874 = vunpack.c.l.b16 %v1734
        %v2875 = vunpack.c.h.b16 %v1734
        %v2876 = vunpack.c.l.b16 %v1735
        %v2877 = vunpack.c.h.b16 %v1735
        %v2878 = vunpack.c.l.b16 %v1736
        %v2879 = vunpack.c.h.b16 %v1736
        %v2880 = vunpack.c.l.b16 %v1737
        %v2881 = vunpack.c.h.b16 %v1737
        %v2882 = vunpack.c.l.b16 %v1738
        %v2883 = vunpack.c.h.b16 %v1738
        %v2884 = vunpack.c.l.b16 %v1739
        %v2885 = vunpack.c.h.b16 %v1739
        %v2886 = vunpack.c.l.b16 %v1740
        %v2887 = vunpack.c.h.b16 %v1740
        %v2888 = vunpack.c.l.b16 %v1741
        %v2889 = vunpack.c.h.b16 %v1741
        %v2890 = vunpack.c.l.b16 %v1742
        %v2891 = vunpack.c.h.b16 %v1742
        %v2892 = vunpack.c.l.b16 %v1743
        %v2893 = vunpack.c.h.b16 %v1743
        %v2894 = vunpack.c.l.b16 %v1744
        %v2895 = vunpack.c.h.b16 %v1744
        %v2896 = vunpack.c.l.b16 %v1745
        %v2897 = vunpack.c.h.b16 %v1745
        %v2898 = vunpack.c.l.b16 %v1746
        %v2899 = vunpack.c.h.b16 %v1746
        %v2900 = vunpack.c.l.b16 %v1747
        %v2901 = vunpack.c.h.b16 %v1747
        %v2902 = vunpack.c.l.b16 %v1748
        %v2903 = vunpack.c.h.b16 %v1748
        %v2904 = vunpack.c.l.b16 %v1749
        %v2905 = vunpack.c.h.b16 %v1749
        %v2906 = vunpack.c.l.b16 %v1750
        %v2907 = vunpack.c.h.b16 %v1750
        %v2908 = vunpack.c.l.b16 %v1751
        %v2909 = vunpack.c.h.b16 %v1751
        %v2910 = vunpack.c.l.b16 %v1752
        %v2911 = vunpack.c.h.b16 %v1752
        %v2912 = vunpack.c.l.b16 %v1753
        %v2913 = vunpack.c.h.b16 %v1753
        %v2914 = vunpack.c.l.b16 %v1754
        %v2915 = vunpack.c.h.b16 %v1754
        %v2916 = vunpack.c.l.b16 %v1755
        %v2917 = vunpack.c.h.b16 %v1755
        %v2918 = vunpack.c.l.b16 %v1756
        %v2919 = vunpack.c.h.b16 %v1756
        %v2920 = vunpack.c.l.b16 %v1757
        %v2921 = vunpack.c.h.b16 %v1757
        %v2922 = vunpack.c.l.b16 %v1758
        %v2923 = vunpack.c.h.b16 %v1758
        %v2924 = vunpack.c.l.b16 %v1759
        %v2925 = vunpack.c.h.b16 %v1759
        %v2926 = vunpack.c.l.b16 %v1760
        %v2927 = vunpack.c.h.b16 %v1760
        %v2928 = vunpack.c.l.b16 %v1761
        %v2929 = vunpack.c.h.b16 %v1761
        %v2930 = vunpack.c.l.b16 %v1762
        %v2931 = vunpack.c.h.b16 %v1762
        %v2932 = vunpack.c.l.b16 %v1763
        %v2933 = vunpack.c.h.b16 %v1763
        %v2934 = vunpack.c.l.b16 %v1764
        %v2935 = vunpack.c.h.b16 %v1764
        %v2936 = vunpack.c.l.b16 %v1765
        %v2937 = vunpack.c.h.b16 %v1765
        %v2938 = vunpack.c.l.b16 %v1766
        %v2939 = vunpack.c.h.b16 %v1766
        %v2940 = vunpack.c.l.b16 %v1767
        %v2941 = vunpack.c.h.b16 %v1767
        %v2942 = vunpack.c.l.b16 %v1768
        %v2943 = vunpack.c.h.b16 %v1768
        %v2944 = vunpack.c.l.b16 %v1769
        %v2945 = vunpack.c.h.b16 %v1769
        %v2946 = vunpack.c.l.b16 %v1770
        %v2947 = vunpack.c.h.b16 %v1770
        %v2948 = vunpack.c.l.b16 %v1771
        %v2949 = vunpack.c.h.b16 %v1771
        %v2950 = vunpack.c.l.b16 %v1772
        %v2951 = vunpack.c.h.b16 %v1772
        %v2952 = vunpack.c.l.b16 %v1773
        %v2953 = vunpack.c.h.b16 %v1773
        %v2954 = vunpack.c.l.b16 %v1774
        %v2955 = vunpack.c.h.b16 %v1774
        %v2956 = vunpack.c.l.b16 %v1775
        %v2957 = vunpack.c.h.b16 %v1775
        %v2958 = vunpack.c.l.b16 %v1776
        %v2959 = vunpack.c.h.b16 %v1776
        %v2960 = vunpack.c.l.b16 %v1777
        %v2961 = vunpack.c.h.b16 %v1777
        %v2962 = vunpack.c.l.b16 %v1778
        %v2963 = vunpack.c.h.b16 %v1778
        %v2964 = vunpack.c.l.b16 %v1779
        %v2965 = vunpack.c.h.b16 %v1779
        %v2966 = vunpack.c.l.b16 %v1780
        %v2967 = vunpack.c.h.b16 %v1780
        %v2968 = vunpack.c.l.b16 %v1781
        %v2969 = vunpack.c.h.b16 %v1781
        %v2970 = vunpack.c.l.b16 %v1782
        %v2971 = vunpack.c.h.b16 %v1782
        %v2972 = vunpack.c.l.b16 %v1783
        %v2973 = vunpack.c.h.b16 %v1783
        %v2974 = vunpack.c.l.b16 %v1784
        %v2975 = vunpack.c.h.b16 %v1784
        %v2976 = vunpack.c.l.b16 %v1785
        %v2977 = vunpack.c.h.b16 %v1785
        %v2978 = vunpack.c.l.b16 %v1786
        %v2979 = vunpack.c.h.b16 %v1786
        %v2980 = vunpack.c.l.b16 %v1787
        %v2981 = vunpack.c.h.b16 %v1787
        %v2982 = vunpack.c.l.b16 %v1788
        %v2983 = vunpack.c.h.b16 %v1788
        %v2984 = vunpack.c.l.b16 %v1789
        %v2985 = vunpack.c.h.b16 %v1789
        %v2986 = vunpack.c.l.b16 %v1790
        %v2987 = vunpack.c.h.b16 %v1790
        %v2988 = vunpack.c.l.b16 %v1791
        %v2989 = vunpack.c.h.b16 %v1791
        %v2990 = vunpack.c.l.b16 %v1792
        %v2991 = vunpack.c.h.b16 %v1792
        %v2992 = vunpack.c.l.b16 %v1793
        %v2993 = vunpack.c.h.b16 %v1793
        %v2994 = vunpack.c.l.b16 %v1794
        %v2995 = vunpack.c.h.b16 %v1794
        %v2996 = vunpack.c.l.b16 %v1795
        %v2997 = vunpack.c.h.b16 %v1795
        %v2998 = vunpack.c.l.b16 %v1796
        %v2999 = vunpack.c.h.b16 %v1796
        %v3000 = vunpack.c.l.b16 %v1797
        %v3001 = vunpack.c.h.b16 %v1797
        %v3002 = vunpack.c.l.b16 %v1798
        %v3003 = vunpack.c.h.b16 %v1798
        %v3004 = vunpack.c.l.b16 %v1799
        %v3005 = vunpack.c.h.b16 %v1799
        %v3006 = vunpack.c.l.b16 %v1800
        %v3007 = vunpack.c.h.b16 %v1800
        %v3008 = vunpack.c.l.b16 %v1801
        %v3009 = vunpack.c.h.b16 %v1801
        %v3010 = vunpack.c.l.b16 %v1802
        %v3011 = vunpack.c.h.b16 %v1802
        %v3012 = vunpack.c.l.b16 %v1803
        %v3013 = vunpack.c.h.b16 %v1803
        %v3014 = vunpack.c.l.b16 %v1804
        %v3015 = vunpack.c.h.b16 %v1804
        %v3016 = vunpack.c.l.b16 %v1805
        %v3017 = vunpack.c.h.b16 %v1805
        %v3018 = vunpack.c.l.b16 %v1806
        %v3019 = vunpack.c.h.b16 %v1806
        %v3020 = vunpack.c.l.b16 %v1807
        %v3021 = vunpack.c.h.b16 %v1807
        %v3022 = vunpack.c.l.b16 %v1808
        %v3023 = vunpack.c.h.b16 %v1808
        %v3024 = vunpack.c.l.b16 %v1809
        %v3025 = vunpack.c.h.b16 %v1809
        %v3026 = vunpack.c.l.b16 %v1810
        %v3027 = vunpack.c.h.b16 %v1810
        %v3028 = vunpack.c.l.b16 %v1811
        %v3029 = vunpack.c.h.b16 %v1811
        %v3030 = vunpack.c.l.b16 %v1812
        %v3031 = vunpack.c.h.b16 %v1812
        %v3032 = vunpack.c.l.b16 %v1813
        %v3033 = vunpack.c.h.b16 %v1813
        %v3034 = vunpack.c.l.b16 %v1814
        %v3035 = vunpack.c.h.b16 %v1814
        %v3036 = vunpack.c.l.b16 %v1815
        %v3037 = vunpack.c.h.b16 %v1815
        %v3038 = vunpack.c.l.b16 %v1816
        %v3039 = vunpack.c.h.b16 %v1816
        %v3040 = vunpack.c.l.b16 %v1817
        %v3041 = vunpack.c.h.b16 %v1817
        %v3042 = vunpack.c.l.b16 %v1818
        %v3043 = vunpack.c.h.b16 %v1818
        %v3044 = vunpack.c.l.b16 %v1819
        %v3045 = vunpack.c.h.b16 %v1819
        %v3046 = vunpack.c.l.b16 %v1820
        %v3047 = vunpack.c.h.b16 %v1820
        %v3048 = vunpack.c.l.b16 %v1821
        %v3049 = vunpack.c.h.b16 %v1821
        %v3050 = vunpack.c.l.b16 %v1822
        %v3051 = vunpack.c.h.b16 %v1822
        %v3052 = vunpack.c.l.b16 %v1823
        %v3053 = vunpack.c.h.b16 %v1823
        %v3054 = vunpack.c.l.b16 %v1824
        %v3055 = vunpack.c.h.b16 %v1824
        %v3056 = vunpack.c.l.b16 %v1825
        %v3057 = vunpack.c.h.b16 %v1825
        %v3058 = vunpack.c.l.b16 %v1826
        %v3059 = vunpack.c.h.b16 %v1826
        %v3060 = vunpack.c.l.b16 %v1827
        %v3061 = vunpack.c.h.b16 %v1827
        %v3062 = vunpack.c.l.b16 %v1828
        %v3063 = vunpack.c.h.b16 %v1828
        %v3064 = vunpack.c.l.b16 %v1829
        %v3065 = vunpack.c.h.b16 %v1829
        %v3066 = vunpack.c.l.b16 %v1830
        %v3067 = vunpack.c.h.b16 %v1830
        %v3068 = vunpack.c.l.b16 %v1831
        %v3069 = vunpack.c.h.b16 %v1831
        %v3070 = vunpack.c.l.b16 %v1832
        %v3071 = vunpack.c.h.b16 %v1832
        %v3072 = vunpack.c.l.b16 %v1833
        %v3073 = vunpack.c.h.b16 %v1833
        %v3074 = vunpack.c.l.b16 %v1834
        %v3075 = vunpack.c.h.b16 %v1834
        %v3076 = vunpack.c.l.b16 %v1835
        %v3077 = vunpack.c.h.b16 %v1835
        %v3078 = vunpack.c.l.b16 %v1836
        %v3079 = vunpack.c.h.b16 %v1836
        %v3080 = vunpack.c.l.b16 %v1837
        %v3081 = vunpack.c.h.b16 %v1837
        %v3082 = vunpack.c.l.b16 %v1838
        %v3083 = vunpack.c.h.b16 %v1838
        %v3084 = vunpack.c.l.b16 %v1839
        %v3085 = vunpack.c.h.b16 %v1839
        %v3086 = vunpack.c.l.b16 %v1840
        %v3087 = vunpack.c.h.b16 %v1840
        %v3088 = vunpack.c.l.b16 %v1841
        %v3089 = vunpack.c.h.b16 %v1841
        %v3090 = vunpack.c.l.b16 %v1842
        %v3091 = vunpack.c.h.b16 %v1842
        %v3092 = vunpack.c.l.b16 %v1843
        %v3093 = vunpack.c.h.b16 %v1843
        %v3094 = vunpack.c.l.b16 %v1844
        %v3095 = vunpack.c.h.b16 %v1844
        %v3096 = vunpack.c.l.b16 %v1845
        %v3097 = vunpack.c.h.b16 %v1845
        %v3098 = vunpack.c.l.b16 %v1846
        %v3099 = vunpack.c.h.b16 %v1846
        %v3100 = vunpack.c.l.b16 %v1847
        %v3101 = vunpack.c.h.b16 %v1847
        %v3102 = vunpack.c.l.b16 %v1848
        %v3103 = vunpack.c.h.b16 %v1848
        %v3104 = vunpack.c.l.b16 %v1849
        %v3105 = vunpack.c.h.b16 %v1849
        %v3106 = vunpack.c.l.b16 %v1850
        %v3107 = vunpack.c.h.b16 %v1850
        %v3108 = vunpack.c.l.b16 %v1851
        %v3109 = vunpack.c.h.b16 %v1851
        %v3110 = vunpack.c.l.b16 %v1852
        %v3111 = vunpack.c.h.b16 %v1852
        %v3112 = vunpack.c.l.b16 %v1853
        %v3113 = vunpack.c.h.b16 %v1853
        %v3114 = vunpack.c.l.b16 %v1854
        %v3115 = vunpack.c.h.b16 %v1854
        %v3116 = vunpack.c.l.b16 %v1855
        %v3117 = vunpack.c.h.b16 %v1855
        %v3118 = vunpack.c.l.b16 %v1856
        %v3119 = vunpack.c.h.b16 %v1856
        %v3120 = vunpack.c.l.b16 %v1857
        %v3121 = vunpack.c.h.b16 %v1857
        %v3122 = vunpack.c.l.b16 %v1858
        %v3123 = vunpack.c.h.b16 %v1858
        %v3124 = vunpack.c.l.b16 %v1859
        %v3125 = vunpack.c.h.b16 %v1859
        %v3126 = vunpack.c.l.b16 %v1860
        %v3127 = vunpack.c.h.b16 %v1860
        %v3128 = vunpack.c.l.b16 %v1861
        %v3129 = vunpack.c.h.b16 %v1861
        %v3130 = vunpack.c.l.b16 %v1862
        %v3131 = vunpack.c.h.b16 %v1862
        %v3132 = vunpack.c.l.b16 %v1863
        %v3133 = vunpack.c.h.b16 %v1863
        %v3134 = vunpack.c.l.b16 %v1864
        %v3135 = vunpack.c.h.b16 %v1864
        %v3136 = vunpack.c.l.b16 %v1865
        %v3137 = vunpack.c.h.b16 %v1865
        %v3138 = vunpack.c.l.b16 %v1866
        %v3139 = vunpack.c.h.b16 %v1866
        %v3140 = vunpack.c.l.b16 %v1867
        %v3141 = vunpack.c.h.b16 %v1867
        %v3142 = vunpack.c.l.b16 %v1868
        %v3143 = vunpack.c.h.b16 %v1868
        %v3144 = vunpack.c.l.b16 %v1869
        %v3145 = vunpack.c.h.b16 %v1869
        %v3146 = vunpack.c.l.b16 %v1870
        %v3147 = vunpack.c.h.b16 %v1870
        %v3148 = vunpack.c.l.b16 %v1871
        %v3149 = vunpack.c.h.b16 %v1871
        %v3150 = vunpack.c.l.b16 %v1872
        %v3151 = vunpack.c.h.b16 %v1872
        %v3152 = vunpack.c.l.b16 %v1873
        %v3153 = vunpack.c.h.b16 %v1873
        %v3154 = vunpack.c.l.b16 %v1874
        %v3155 = vunpack.c.h.b16 %v1874
        %v3156 = vunpack.c.l.b16 %v1875
        %v3157 = vunpack.c.h.b16 %v1875
        %v3158 = vunpack.c.l.b16 %v1876
        %v3159 = vunpack.c.h.b16 %v1876
        %v3160 = vunpack.c.l.b16 %v1877
        %v3161 = vunpack.c.h.b16 %v1877
        %v3162 = vunpack.c.l.b16 %v1878
        %v3163 = vunpack.c.h.b16 %v1878
        %v3164 = vunpack.c.l.b16 %v1879
        %v3165 = vunpack.c.h.b16 %v1879
        %v3166 = vunpack.c.l.b16 %v1880
        %v3167 = vunpack.c.h.b16 %v1880
        %v3168 = vunpack.c.l.b16 %v1881
        %v3169 = vunpack.c.h.b16 %v1881
        %v3170 = vunpack.c.l.b16 %v1882
        %v3171 = vunpack.c.h.b16 %v1882
        %v3172 = vunpack.c.l.b16 %v1883
        %v3173 = vunpack.c.h.b16 %v1883
        %v3174 = vunpack.c.l.b16 %v1884
        %v3175 = vunpack.c.h.b16 %v1884
        %v3176 = vunpack.c.l.b16 %v1885
        %v3177 = vunpack.c.h.b16 %v1885
        %v3178 = vunpack.c.l.b16 %v1886
        %v3179 = vunpack.c.h.b16 %v1886
        %v3180 = vunpack.c.l.b16 %v1887
        %v3181 = vunpack.c.h.b16 %v1887
        %v3182 = vunpack.c.l.b16 %v1888
        %v3183 = vunpack.c.h.b16 %v1888
        %v3184 = vunpack.c.l.b16 %v1889
        %v3185 = vunpack.c.h.b16 %v1889
        %v3186 = vunpack.c.l.b16 %v1890
        %v3187 = vunpack.c.h.b16 %v1890
        %v3188 = vunpack.c.l.b16 %v1891
        %v3189 = vunpack.c.h.b16 %v1891
        %v3190 = vunpack.c.l.b16 %v1892
        %v3191 = vunpack.c.h.b16 %v1892
        %v3192 = vunpack.c.l.b16 %v1893
        %v3193 = vunpack.c.h.b16 %v1893
        %v3194 = vunpack.c.l.b16 %v1894
        %v3195 = vunpack.c.h.b16 %v1894
        %v3196 = vunpack.c.l.b16 %v1895
        %v3197 = vunpack.c.h.b16 %v1895
        %v3198 = vunpack.c.l.b16 %v1896
        %v3199 = vunpack.c.h.b16 %v1896
        %v3200 = vunpack.c.l.b16 %v1897
        %v3201 = vunpack.c.h.b16 %v1897
        %v3202 = vunpack.c.l.b16 %v1898
        %v3203 = vunpack.c.h.b16 %v1898
        %v3204 = vunpack.c.l.b16 %v1899
        %v3205 = vunpack.c.h.b16 %v1899
        %v3206 = vunpack.c.l.b16 %v1900
        %v3207 = vunpack.c.h.b16 %v1900
        %v3208 = vunpack.c.l.b16 %v1901
        %v3209 = vunpack.c.h.b16 %v1901
        %v3210 = vunpack.c.l.b16 %v1902
        %v3211 = vunpack.c.h.b16 %v1902
        %v3212 = vunpack.c.l.b16 %v1903
        %v3213 = vunpack.c.h.b16 %v1903
        %v3214 = vunpack.c.l.b16 %v1904
        %v3215 = vunpack.c.h.b16 %v1904
        %v3216 = vunpack.c.l.b16 %v1905
        %v3217 = vunpack.c.h.b16 %v1905
        %v3218 = vunpack.c.l.b16 %v1906
        %v3219 = vunpack.c.h.b16 %v1906
        %v3220 = vunpack.c.l.b16 %v1907
        %v3221 = vunpack.c.h.b16 %v1907
        %v3222 = vunpack.c.l.b16 %v1908
        %v3223 = vunpack.c.h.b16 %v1908
        %v3224 = vunpack.c.l.b16 %v1909
        %v3225 = vunpack.c.h.b16 %v1909
        %v3226 = vunpack.c.l.b16 %v1910
        %v3227 = vunpack.c.h.b16 %v1910
        %v3228 = vunpack.c.l.b16 %v1911
        %v3229 = vunpack.c.h.b16 %v1911
        %v3230 = vunpack.c.l.b16 %v1912
        %v3231 = vunpack.c.h.b16 %v1912
        %v3232 = vunpack.c.l.b16 %v1913
        %v3233 = vunpack.c.h.b16 %v1913
        %v3234 = vunpack.c.l.b16 %v1914
        %v3235 = vunpack.c.h.b16 %v1914
        %v3236 = vunpack.c.l.b16 %v1915
        %v3237 = vunpack.c.h.b16 %v1915
        %v3238 = vunpack.c.l.b16 %v1916
        %v3239 = vunpack.c.h.b16 %v1916
        %v3240 = vunpack.c.l.b16 %v1917
        %v3241 = vunpack.c.h.b16 %v1917
        %v3242 = vunpack.c.l.b16 %v1918
        %v3243 = vunpack.c.h.b16 %v1918
        %v3244 = vunpack.c.l.b16 %v1919
        %v3245 = vunpack.c.h.b16 %v1919
        %v3246 = vunpack.c.l.b16 %v1920
        %v3247 = vunpack.c.h.b16 %v1920
        %v3248 = vunpack.c.l.b16 %v1921
        %v3249 = vunpack.c.h.b16 %v1921
        %v3250 = vunpack.c.l.b16 %v1922
        %v3251 = vunpack.c.h.b16 %v1922
        %v3252 = vunpack.c.l.b16 %v1923
        %v3253 = vunpack.c.h.b16 %v1923
        %v3254 = vunpack.c.l.b16 %v1924
        %v3255 = vunpack.c.h.b16 %v1924
        %v3256 = vunpack.c.l.b16 %v1925
        %v3257 = vunpack.c.h.b16 %v1925
        %v3258 = vunpack.c.l.b16 %v1926
        %v3259 = vunpack.c.h.b16 %v1926
        %v3260 = vunpack.c.l.b16 %v1927
        %v3261 = vunpack.c.h.b16 %v1927
        %v3262 = vunpack.c.l.b16 %v1928
        %v3263 = vunpack.c.h.b16 %v1928
        %v3264 = vunpack.c.l.b16 %v1929
        %v3265 = vunpack.c.h.b16 %v1929
        %v3266 = vunpack.c.l.b16 %v1930
        %v3267 = vunpack.c.h.b16 %v1930
        %v3268 = vunpack.c.l.b16 %v1931
        %v3269 = vunpack.c.h.b16 %v1931
        %v3270 = vunpack.c.l.b16 %v1932
        %v3271 = vunpack.c.h.b16 %v1932
        %v3272 = vunpack.c.l.b16 %v1933
        %v3273 = vunpack.c.h.b16 %v1933
        %v3274 = vunpack.c.l.b16 %v1934
        %v3275 = vunpack.c.h.b16 %v1934
        %v3276 = vunpack.c.l.b16 %v1935
        %v3277 = vunpack.c.h.b16 %v1935
        %v3278 = vunpack.c.l.b16 %v1936
        %v3279 = vunpack.c.h.b16 %v1936
        %v3280 = vunpack.c.l.b16 %v1937
        %v3281 = vunpack.c.h.b16 %v1937
        %v3282 = vunpack.c.l.b16 %v1938
        %v3283 = vunpack.c.h.b16 %v1938
        %v3284 = vunpack.c.l.b16 %v1939
        %v3285 = vunpack.c.h.b16 %v1939
        %v3286 = vunpack.c.l.b16 %v1940
        %v3287 = vunpack.c.h.b16 %v1940
        %v3288 = vunpack.c.l.b16 %v1941
        %v3289 = vunpack.c.h.b16 %v1941
        %v3290 = vunpack.c.l.b16 %v1942
        %v3291 = vunpack.c.h.b16 %v1942
        %v3292 = vunpack.c.l.b16 %v1943
        %v3293 = vunpack.c.h.b16 %v1943
        %v3294 = vunpack.c.l.b16 %v1944
        %v3295 = vunpack.c.h.b16 %v1944
        %v3296 = vunpack.c.l.b16 %v1945
        %v3297 = vunpack.c.h.b16 %v1945
        %v3298 = vunpack.c.l.b16 %v1946
        %v3299 = vunpack.c.h.b16 %v1946
        %v3300 = vunpack.c.l.b16 %v1947
        %v3301 = vunpack.c.h.b16 %v1947
        %v3302 = vunpack.c.l.b16 %v1948
        %v3303 = vunpack.c.h.b16 %v1948
        %v3304 = vunpack.c.l.b16 %v1949
        %v3305 = vunpack.c.h.b16 %v1949
        %v3306 = vunpack.c.l.b16 %v1950
        %v3307 = vunpack.c.h.b16 %v1950
        %v3308 = vunpack.c.l.b16 %v1951
        %v3309 = vunpack.c.h.b16 %v1951
        %v3310 = vunpack.c.l.b16 %v1952
        %v3311 = vunpack.c.h.b16 %v1952
        %v3312 = vunpack.c.l.b16 %v1953
        %v3313 = vunpack.c.h.b16 %v1953
        %v3314 = vunpack.c.l.b16 %v1954
        %v3315 = vunpack.c.h.b16 %v1954
        %v3316 = vunpack.c.l.b16 %v1955
        %v3317 = vunpack.c.h.b16 %v1955
        %v3318 = vunpack.c.l.b16 %v1956
        %v3319 = vunpack.c.h.b16 %v1956
        %v3320 = vunpack.c.l.b16 %v1957
        %v3321 = vunpack.c.h.b16 %v1957
        %v3322 = vunpack.c.l.b16 %v1958
        %v3323 = vunpack.c.h.b16 %v1958
        %v3324 = vunpack.c.l.b16 %v1959
        %v3325 = vunpack.c.h.b16 %v1959
        %v3326 = vunpack.c.l.b16 %v1960
        %v3327 = vunpack.c.h.b16 %v1960
        %v3328 = vunpack.c.l.b16 %v1961
        %v3329 = vunpack.c.h.b16 %v1961
        %v3330 = vunpack.c.l.b16 %v1962
        %v3331 = vunpack.c.h.b16 %v1962
        %v3332 = vunpack.c.l.b16 %v1963
        %v3333 = vunpack.c.h.b16 %v1963
        %v3334 = vunpack.c.l.b16 %v1964
        %v3335 = vunpack.c.h.b16 %v1964
        %v3336 = vunpack.c.l.b16 %v1965
        %v3337 = vunpack.c.h.b16 %v1965
        %v3338 = vunpack.c.l.b16 %v1966
        %v3339 = vunpack.c.h.b16 %v1966
        %v3340 = vunpack.c.l.b16 %v1967
        %v3341 = vunpack.c.h.b16 %v1967
        %v3342 = vunpack.c.l.b16 %v1968
        %v3343 = vunpack.c.h.b16 %v1968
        %v3344 = vunpack.c.l.b16 %v1969
        %v3345 = vunpack.c.h.b16 %v1969
        %v3346 = vunpack.c.l.b16 %v1970
        %v3347 = vunpack.c.h.b16 %v1970
        %v3348 = vunpack.c.l.b16 %v1971
        %v3349 = vunpack.c.h.b16 %v1971
        %v3350 = vunpack.c.l.b16 %v1972
        %v3351 = vunpack.c.h.b16 %v1972
        %v3352 = vunpack.c.l.b16 %v1973
        %v3353 = vunpack.c.h.b16 %v1973
        %v3354 = vunpack.c.l.b16 %v1974
        %v3355 = vunpack.c.h.b16 %v1974
        %v3356 = vunpack.c.l.b16 %v1975
        %v3357 = vunpack.c.h.b16 %v1975
        %v3358 = vunpack.c.l.b16 %v1976
        %v3359 = vunpack.c.h.b16 %v1976
        %v3360 = vunpack.c.l.b16 %v1977
        %v3361 = vunpack.c.h.b16 %v1977
        %v3362 = vunpack.c.l.b16 %v1978
        %v3363 = vunpack.c.h.b16 %v1978
        %v3364 = vunpack.c.l.b16 %v1979
        %v3365 = vunpack.c.h.b16 %v1979
        %v3366 = vunpack.c.l.b16 %v1980
        %v3367 = vunpack.c.h.b16 %v1980
        %v3368 = vunpack.c.l.b16 %v1981
        %v3369 = vunpack.c.h.b16 %v1981
        %v3370 = vunpack.c.l.b16 %v1982
        %v3371 = vunpack.c.h.b16 %v1982
        %v3372 = vunpack.c.l.b16 %v1983
        %v3373 = vunpack.c.h.b16 %v1983
        %v3374 = vunpack.c.l.b16 %v1984
        %v3375 = vunpack.c.h.b16 %v1984
        %v3376 = vunpack.c.l.b16 %v1985
        %v3377 = vunpack.c.h.b16 %v1985
        %v3378 = vunpack.c.l.b16 %v1986
        %v3379 = vunpack.c.h.b16 %v1986
        %v3380 = vunpack.c.l.b16 %v1987
        %v3381 = vunpack.c.h.b16 %v1987
        %v3382 = vunpack.c.l.b16 %v1988
        %v3383 = vunpack.c.h.b16 %v1988
        %v3384 = vunpack.c.l.b16 %v1989
        %v3385 = vunpack.c.h.b16 %v1989
        %v3386 = vunpack.c.l.b16 %v1990
        %v3387 = vunpack.c.h.b16 %v1990
        %v3388 = vunpack.c.l.b16 %v1991
        %v3389 = vunpack.c.h.b16 %v1991
        %v3390 = vunpack.c.l.b16 %v1992
        %v3391 = vunpack.c.h.b16 %v1992
        %v3392 = vunpack.c.l.b16 %v1993
        %v3393 = vunpack.c.h.b16 %v1993
        %v3394 = vunpack.c.l.b16 %v1994
        %v3395 = vunpack.c.h.b16 %v1994
        %v3396 = vunpack.c.l.b16 %v1995
        %v3397 = vunpack.c.h.b16 %v1995
        %v3398 = vunpack.c.l.b16 %v1996
        %v3399 = vunpack.c.h.b16 %v1996
        %v3400 = vunpack.c.l.b16 %v1997
        %v3401 = vunpack.c.h.b16 %v1997
        %v3402 = vunpack.c.l.b16 %v1998
        %v3403 = vunpack.c.h.b16 %v1998
        %v3404 = vunpack.c.l.b16 %v1999
        %v3405 = vunpack.c.h.b16 %v1999
        %v3406 = vunpack.c.l.b16 %v2000
        %v3407 = vunpack.c.h.b16 %v2000
        %v3408 = vunpack.c.l.b16 %v2001
        %v3409 = vunpack.c.h.b16 %v2001
        %v3410 = vunpack.c.l.b16 %v2002
        %v3411 = vunpack.c.h.b16 %v2002
        %v3412 = vunpack.c.l.b16 %v2003
        %v3413 = vunpack.c.h.b16 %v2003
        %v3414 = vunpack.c.l.b16 %v2004
        %v3415 = vunpack.c.h.b16 %v2004
        %v3416 = vunpack.c.l.b16 %v2005
        %v3417 = vunpack.c.h.b16 %v2005
        %v3418 = vunpack.c.l.b16 %v2006
        %v3419 = vunpack.c.h.b16 %v2006
        %v3420 = vunpack.c.l.b16 %v2007
        %v3421 = vunpack.c.h.b16 %v2007
        %v3422 = vunpack.c.l.b16 %v2008
        %v3423 = vunpack.c.h.b16 %v2008
        %v3424 = vunpack.c.l.b16 %v2009
        %v3425 = vunpack.c.h.b16 %v2009
        %v3426 = vunpack.c.l.b16 %v2010
        %v3427 = vunpack.c.h.b16 %v2010
        %v3428 = vunpack.c.l.b16 %v2011
        %v3429 = vunpack.c.h.b16 %v2011
        %v3430 = vunpack.c.l.b16 %v2012
        %v3431 = vunpack.c.h.b16 %v2012
        %v3432 = vunpack.c.l.b16 %v2013
        %v3433 = vunpack.c.h.b16 %v2013
        %v3434 = vunpack.c.l.b16 %v2014
        %v3435 = vunpack.c.h.b16 %v2014
        %v3436 = vunpack.c.l.b16 %v2015
        %v3437 = vunpack.c.h.b16 %v2015
        %v3438 = vunpack.c.l.b16 %v2016
        %v3439 = vunpack.c.h.b16 %v2016
        %v3440 = vunpack.c.l.b16 %v2017
        %v3441 = vunpack.c.h.b16 %v2017
        %v3442 = vunpack.c.l.b16 %v2018
        %v3443 = vunpack.c.h.b16 %v2018
        %v3444 = vunpack.c.l.b16 %v2019
        %v3445 = vunpack.c.h.b16 %v2019
        %v3446 = vunpack.c.l.b16 %v2020
        %v3447 = vunpack.c.h.b16 %v2020
        %v3448 = vunpack.c.l.b16 %v2021
        %v3449 = vunpack.c.h.b16 %v2021
        %v3450 = vunpack.c.l.b16 %v2022
        %v3451 = vunpack.c.h.b16 %v2022
        %v3452 = vunpack.c.l.b16 %v2023
        %v3453 = vunpack.c.h.b16 %v2023
        %v3454 = vunpack.c.l.b16 %v2024
        %v3455 = vunpack.c.h.b16 %v2024
        %v3456 = vunpack.c.l.b16 %v2025
        %v3457 = vunpack.c.h.b16 %v2025
        %v3458 = vunpack.c.l.b16 %v2026
        %v3459 = vunpack.c.h.b16 %v2026
        %v3460 = vunpack.c.l.b16 %v2027
        %v3461 = vunpack.c.h.b16 %v2027
        %v3462 = vunpack.c.l.b16 %v2028
        %v3463 = vunpack.c.h.b16 %v2028
        %v3464 = vunpack.c.l.b16 %v2029
        %v3465 = vunpack.c.h.b16 %v2029
        %v3466 = vunpack.c.l.b16 %v2030
        %v3467 = vunpack.c.h.b16 %v2030
        %v3468 = vunpack.c.l.b16 %v2031
        %v3469 = vunpack.c.h.b16 %v2031
        %v3470 = vunpack.c.l.b16 %v2032
        %v3471 = vunpack.c.h.b16 %v2032
        %v3472 = vunpack.c.l.b16 %v2033
        %v3473 = vunpack.c.h.b16 %v2033
        %v3474 = vunpack.c.l.b16 %v2034
        %v3475 = vunpack.c.h.b16 %v2034
        %v3476 = vunpack.c.l.b16 %v2035
        %v3477 = vunpack.c.h.b16 %v2035
        %v3478 = vunpack.c.l.b16 %v2036
        %v3479 = vunpack.c.h.b16 %v2036
        %v3480 = vunpack.c.l.b16 %v2037
        %v3481 = vunpack.c.h.b16 %v2037
        %v3482 = vunpack.c.l.b16 %v2038
        %v3483 = vunpack.c.h.b16 %v2038
        %v3484 = vunpack.c.l.b16 %v2039
        %v3485 = vunpack.c.h.b16 %v2039
        %v3486 = vunpack.c.l.b16 %v2040
        %v3487 = vunpack.c.h.b16 %v2040
        %v3488 = vunpack.c.l.b16 %v2041
        %v3489 = vunpack.c.h.b16 %v2041
        %v3490 = vunpack.c.l.b16 %v2042
        %v3491 = vunpack.c.h.b16 %v2042
        %v3492 = vunpack.c.l.b16 %v2043
        %v3493 = vunpack.c.h.b16 %v2043
        %v3494 = vunpack.c.l.b16 %v2044
        %v3495 = vunpack.c.h.b16 %v2044
        %v3496 = vunpack.c.l.b16 %v2045
        %v3497 = vunpack.c.h.b16 %v2045
        %v3498 = vunpack.c.l.b16 %v2046
        %v3499 = vunpack.c.h.b16 %v2046
        %v3500 = vunpack.c.l.b16 %v2047
        %v3501 = vunpack.c.h.b16 %v2047
        %v3502 = vunpack.c.l.b16 %v2048
        %v3503 = vunpack.c.h.b16 %v2048
        %v3504 = vunpack.c.l.b16 %v2049
        %v3505 = vunpack.c.h.b16 %v2049
        %v3506 = vunpack.c.l.b16 %v2050
        %v3507 = vunpack.c.h.b16 %v2050
        %v3508 = vunpack.c.l.b16 %v2051
        %v3509 = vunpack.c.h.b16 %v2051
        %v3510 = vunpack.c.l.b16 %v2052
        %v3511 = vunpack.c.h.b16 %v2052
        %v3512 = vunpack.c.l.b16 %v2053
        %v3513 = vunpack.c.h.b16 %v2053
        %v3514 = vunpack.c.l.b16 %v2054
        %v3515 = vunpack.c.h.b16 %v2054
        %v3516 = vunpack.c.l.b16 %v2055
        %v3517 = vunpack.c.h.b16 %v2055
        %v3518 = vunpack.c.l.b16 %v2056
        %v3519 = vunpack.c.h.b16 %v2056
        %v3520 = vunpack.c.l.b16 %v2057
        %v3521 = vunpack.c.h.b16 %v2057
        %v3522 = vunpack.c.l.b16 %v2058
        %v3523 = vunpack.c.h.b16 %v2058
        %v3524 = vunpack.c.l.b16 %v2059
        %v3525 = vunpack.c.h.b16 %v2059
        %v3526 = vunpack.c.l.b16 %v2060
        %v3527 = vunpack.c.h.b16 %v2060
        %v3528 = vunpack.c.l.b16 %v2061
        %v3529 = vunpack.c.h.b16 %v2061
        %v3530 = vunpack.c.l.b16 %v2062
        %v3531 = vunpack.c.h.b16 %v2062
        %v3532 = vunpack.c.l.b16 %v2063
        %v3533 = vunpack.c.h.b16 %v2063
        %v3534 = vunpack.c.l.b16 %v2064
        %v3535 = vunpack.c.h.b16 %v2064
        %v3536 = vunpack.c.l.b16 %v2065
        %v3537 = vunpack.c.h.b16 %v2065
        %v3538 = vunpack.c.l.b16 %v2066
        %v3539 = vunpack.c.h.b16 %v2066
        %v3540 = vunpack.c.l.b16 %v2067
        %v3541 = vunpack.c.h.b16 %v2067
        %v3542 = vunpack.c.l.b16 %v2068
        %v3543 = vunpack.c.h.b16 %v2068
        %v3544 = vunpack.c.l.b16 %v2069
        %v3545 = vunpack.c.h.b16 %v2069
        %v3546 = vunpack.c.l.b16 %v2070
        %v3547 = vunpack.c.h.b16 %v2070
        %v3548 = vunpack.c.l.b16 %v2071
        %v3549 = vunpack.c.h.b16 %v2071
        %v3550 = vunpack.c.l.b16 %v2072
        %v3551 = vunpack.c.h.b16 %v2072
        %v3552 = vunpack.c.l.b16 %v2073
        %v3553 = vunpack.c.h.b16 %v2073
        %v3554 = vunpack.c.l.b16 %v2074
        %v3555 = vunpack.c.h.b16 %v2074
        %v3556 = vunpack.c.l.b16 %v2075
        %v3557 = vunpack.c.h.b16 %v2075
        %v3558 = vunpack.c.l.b16 %v2076
        %v3559 = vunpack.c.h.b16 %v2076
        %v3560 = vunpack.c.l.b16 %v2077
        %v3561 = vunpack.c.h.b16 %v2077
        %v3562 = vunpack.c.l.b16 %v2078
        %v3563 = vunpack.c.h.b16 %v2078
        %v3564 = vunpack.c.l.b16 %v2079
        %v3565 = vunpack.c.h.b16 %v2079
        %v3566 = vunpack.c.l.b16 %v2080
        %v3567 = vunpack.c.h.b16 %v2080
        %v3568 = vunpack.c.l.b16 %v2081
        %v3569 = vunpack.c.h.b16 %v2081
        %v3570 = vunpack.c.l.b16 %v2082
        %v3571 = vunpack.c.h.b16 %v2082
        %v3572 = vunpack.c.l.b16 %v2083
        %v3573 = vunpack.c.h.b16 %v2083
        %v3574 = vunpack.c.l.b16 %v2084
        %v3575 = vunpack.c.h.b16 %v2084
        %v3576 = vunpack.c.l.b16 %v2085
        %v3577 = vunpack.c.h.b16 %v2085
        %v3578 = vunpack.c.l.b16 %v2086
        %v3579 = vunpack.c.h.b16 %v2086
        %v3580 = vunpack.c.l.b16 %v2087
        %v3581 = vunpack.c.h.b16 %v2087
        %v3582 = vunpack.c.l.b16 %v2088
        %v3583 = vunpack.c.h.b16 %v2088
        %v3584 = vunpack.c.l.b16 %v2089
        %v3585 = vunpack.c.h.b16 %v2089
        %v3586 = vunpack.c.l.b16 %v2090
        %v3587 = vunpack.c.h.b16 %v2090
        %v3588 = vunpack.c.l.b16 %v2091
        %v3589 = vunpack.c.h.b16 %v2091
        %v3590 = vunpack.c.l.b16 %v2092
        %v3591 = vunpack.c.h.b16 %v2092
        %v3592 = vunpack.c.l.b16 %v2093
        %v3593 = vunpack.c.h.b16 %v2093
        %v3594 = vunpack.c.l.b16 %v2094
        %v3595 = vunpack.c.h.b16 %v2094
        %v3596 = vunpack.c.l.b16 %v2095
        %v3597 = vunpack.c.h.b16 %v2095
        %v3598 = vunpack.c.l.b16 %v2096
        %v3599 = vunpack.c.h.b16 %v2096
        %v3600 = vunpack.c.l.b16 %v2097
        %v3601 = vunpack.c.h.b16 %v2097
        %v3602 = vunpack.c.l.b16 %v2098
        %v3603 = vunpack.c.h.b16 %v2098
        %v3604 = vunpack.c.l.b16 %v2099
        %v3605 = vunpack.c.h.b16 %v2099
        %v3606 = vunpack.c.l.b16 %v2100
        %v3607 = vunpack.c.h.b16 %v2100
        %v3608 = vunpack.c.l.b16 %v2101
        %v3609 = vunpack.c.h.b16 %v2101
        %v3610 = vunpack.c.l.b16 %v2102
        %v3611 = vunpack.c.h.b16 %v2102
        %v3612 = vunpack.c.l.b16 %v2103
        %v3613 = vunpack.c.h.b16 %v2103
        %v3614 = vunpack.c.l.b16 %v2104
        %v3615 = vunpack.c.h.b16 %v2104
        %v3616 = vunpack.c.l.b16 %v2105
        %v3617 = vunpack.c.h.b16 %v2105
        %v3618 = vunpack.c.l.b16 %v2106
        %v3619 = vunpack.c.h.b16 %v2106
        %v3620 = vunpack.c.l.b16 %v2107
        %v3621 = vunpack.c.h.b16 %v2107
        %v3622 = vunpack.c.l.b16 %v2108
        %v3623 = vunpack.c.h.b16 %v2108
        %v3624 = vunpack.c.l.b16 %v2109
        %v3625 = vunpack.c.h.b16 %v2109
        %v3626 = vunpack.c.l.b16 %v2110
        %v3627 = vunpack.c.h.b16 %v2110
        %v3628 = vunpack.c.l.b16 %v2111
        %v3629 = vunpack.c.h.b16 %v2111
        %v3630 = vunpack.c.l.b16 %v2112
        %v3631 = vunpack.c.h.b16 %v2112
        %v3632 = vunpack.c.l.b16 %v2113
        %v3633 = vunpack.c.h.b16 %v2113
        %v3634 = vunpack.c.l.b16 %v2114
        %v3635 = vunpack.c.h.b16 %v2114
        %v3636 = vunpack.c.l.b16 %v2115
        %v3637 = vunpack.c.h.b16 %v2115
        %v3638 = vunpack.c.l.b16 %v2116
        %v3639 = vunpack.c.h.b16 %v2116
        %v3640 = vunpack.c.l.b16 %v2117
        %v3641 = vunpack.c.h.b16 %v2117
        %v3642 = vunpack.c.l.b16 %v2118
        %v3643 = vunpack.c.h.b16 %v2118
        %v3644 = vunpack.c.l.b16 %v2119
        %v3645 = vunpack.c.h.b16 %v2119
        %v3646 = vunpack.c.l.b16 %v2120
        %v3647 = vunpack.c.h.b16 %v2120
        %v3648 = vunpack.c.l.b16 %v2121
        %v3649 = vunpack.c.h.b16 %v2121
        %v3650 = vunpack.c.l.b16 %v2122
        %v3651 = vunpack.c.h.b16 %v2122
        %v3652 = vunpack.c.l.b16 %v2123
        %v3653 = vunpack.c.h.b16 %v2123
        %v3654 = vunpack.c.l.b16 %v2124
        %v3655 = vunpack.c.h.b16 %v2124
        %v3656 = vunpack.c.l.b16 %v2125
        %v3657 = vunpack.c.h.b16 %v2125
        %v3658 = vunpack.c.l.b16 %v2126
        %v3659 = vunpack.c.h.b16 %v2126
        %v3660 = vunpack.c.l.b16 %v2127
        %v3661 = vunpack.c.h.b16 %v2127
        %v3662 = vunpack.c.l.b16 %v2128
        %v3663 = vunpack.c.h.b16 %v2128
        %v3664 = vunpack.c.l.b16 %v2129
        %v3665 = vunpack.c.h.b16 %v2129
        %v3666 = vunpack.c.l.b16 %v2130
        %v3667 = vunpack.c.h.b16 %v2130
        %v3668 = vunpack.c.l.b16 %v2131
        %v3669 = vunpack.c.h.b16 %v2131
        %v3670 = vunpack.c.l.b16 %v2132
        %v3671 = vunpack.c.h.b16 %v2132
        %v3672 = vunpack.c.l.b16 %v2133
        %v3673 = vunpack.c.h.b16 %v2133
        %v3674 = vunpack.c.l.b16 %v2134
        %v3675 = vunpack.c.h.b16 %v2134
        %v3676 = vunpack.c.l.b16 %v2135
        %v3677 = vunpack.c.h.b16 %v2135
        %v3678 = vunpack.c.l.b16 %v2136
        %v3679 = vunpack.c.h.b16 %v2136
        %v3680 = vunpack.c.l.b16 %v2137
        %v3681 = vunpack.c.h.b16 %v2137
        %v3682 = vunpack.c.l.b16 %v2138
        %v3683 = vunpack.c.h.b16 %v2138
        %v3684 = vunpack.c.l.b16 %v2139
        %v3685 = vunpack.c.h.b16 %v2139
        %v3686 = vunpack.c.l.b16 %v2140
        %v3687 = vunpack.c.h.b16 %v2140
        %v3688 = vunpack.c.l.b16 %v2141
        %v3689 = vunpack.c.h.b16 %v2141
        %v3690 = vunpack.c.l.b16 %v2142
        %v3691 = vunpack.c.h.b16 %v2142
        %v3692 = vunpack.c.l.b16 %v2143
        %v3693 = vunpack.c.h.b16 %v2143
        %v3694 = vunpack.c.l.b16 %v2144
        %v3695 = vunpack.c.h.b16 %v2144
        %v3696 = vunpack.c.l.b16 %v2145
        %v3697 = vunpack.c.h.b16 %v2145
        %v3698 = vunpack.c.l.b16 %v2146
        %v3699 = vunpack.c.h.b16 %v2146
        %v3700 = vunpack.c.l.b16 %v2147
        %v3701 = vunpack.c.h.b16 %v2147
        %v3702 = vunpack.c.l.b16 %v2148
        %v3703 = vunpack.c.h.b16 %v2148
        %v3704 = vunpack.c.l.b16 %v2149
        %v3705 = vunpack.c.h.b16 %v2149
        %v3706 = vunpack.c.l.b16 %v2150
        %v3707 = vunpack.c.h.b16 %v2150
        %v3708 = vunpack.c.l.b16 %v2151
        %v3709 = vunpack.c.h.b16 %v2151
        %v3710 = vunpack.c.l.b16 %v2152
        %v3711 = vunpack.c.h.b16 %v2152
        %v3712 = vunpack.c.l.b16 %v2153
        %v3713 = vunpack.c.h.b16 %v2153
        %v3714 = vunpack.c.l.b16 %v2154
        %v3715 = vunpack.c.h.b16 %v2154
        %v3716 = vunpack.c.l.b16 %v2155
        %v3717 = vunpack.c.h.b16 %v2155
        %v3718 = vunpack.c.l.b16 %v2156
        %v3719 = vunpack.c.h.b16 %v2156
        %v3720 = vunpack.c.l.b16 %v2157
        %v3721 = vunpack.c.h.b16 %v2157
        %v3722 = vunpack.c.l.b16 %v2158
        %v3723 = vunpack.c.h.b16 %v2158
        %v3724 = vunpack.c.l.b16 %v2159
        %v3725 = vunpack.c.h.b16 %v2159
        %v3726 = vunpack.c.l.b16 %v2160
        %v3727 = vunpack.c.h.b16 %v2160
        %v3728 = vunpack.c.l.b16 %v2161
        %v3729 = vunpack.c.h.b16 %v2161
        %v3730 = vunpack.c.l.b16 %v2162
        %v3731 = vunpack.c.h.b16 %v2162
        %v3732 = vunpack.c.l.b16 %v2163
        %v3733 = vunpack.c.h.b16 %v2163
        %v3734 = vunpack.c.l.b16 %v2164
        %v3735 = vunpack.c.h.b16 %v2164
        %v3736 = vunpack.c.l.b16 %v2165
        %v3737 = vunpack.c.h.b16 %v2165
        %v3738 = vunpack.c.l.b16 %v2166
        %v3739 = vunpack.c.h.b16 %v2166
        %v3740 = vunpack.c.l.b16 %v2167
        %v3741 = vunpack.c.h.b16 %v2167
        %v3742 = vunpack.c.l.b16 %v2168
        %v3743 = vunpack.c.h.b16 %v2168
        %v3744 = vunpack.c.l.b16 %v2169
        %v3745 = vunpack.c.h.b16 %v2169
        %v3746 = vunpack.c.l.b16 %v2170
        %v3747 = vunpack.c.h.b16 %v2170
        %v3748 = vunpack.c.l.b16 %v2171
        %v3749 = vunpack.c.h.b16 %v2171
        %v3750 = vunpack.c.l.b16 %v2172
        %v3751 = vunpack.c.h.b16 %v2172
        %v3752 = vunpack.c.l.b16 %v2173
        %v3753 = vunpack.c.h.b16 %v2173
        %v3754 = vunpack.c.l.b16 %v2174
        %v3755 = vunpack.c.h.b16 %v2174
        %v3756 = vunpack.c.l.b16 %v2175
        %v3757 = vunpack.c.h.b16 %v2175
        %v3758 = vunpack.c.l.b16 %v2176
        %v3759 = vunpack.c.h.b16 %v2176
        %v3760 = vunpack.c.l.b16 %v2177
        %v3761 = vunpack.c.h.b16 %v2177
        %v3762 = vunpack.c.l.b16 %v2178
        %v3763 = vunpack.c.h.b16 %v2178
        %v3764 = vunpack.c.l.b16 %v2179
        %v3765 = vunpack.c.h.b16 %v2179
        %v3766 = vunpack.c.l.b16 %v2180
        %v3767 = vunpack.c.h.b16 %v2180
        %v3768 = vunpack.c.l.b16 %v2181
        %v3769 = vunpack.c.h.b16 %v2181
        %v3770 = vunpack.c.l.b16 %v2182
        %v3771 = vunpack.c.h.b16 %v2182
        %v3772 = vunpack.c.l.b16 %v2183
        %v3773 = vunpack.c.h.b16 %v2183
        %v3774 = vunpack.c.l.b16 %v2184
        %v3775 = vunpack.c.h.b16 %v2184
        %v3776 = vunpack.c.l.b16 %v2185
        %v3777 = vunpack.c.h.b16 %v2185
        %v3778 = vunpack.c.l.b16 %v2186
        %v3779 = vunpack.c.h.b16 %v2186
        %v3780 = vunpack.c.l.b16 %v2187
        %v3781 = vunpack.c.h.b16 %v2187
        %v3782 = vunpack.c.l.b16 %v2188
        %v3783 = vunpack.c.h.b16 %v2188
        %v3784 = vunpack.c.l.b16 %v2189
        %v3785 = vunpack.c.h.b16 %v2189
        %v3786 = vunpack.c.l.b16 %v2190
        %v3787 = vunpack.c.h.b16 %v2190
        %v3788 = vunpack.c.l.b16 %v2191
        %v3789 = vunpack.c.h.b16 %v2191
        %v3790 = vunpack.c.l.b16 %v2192
        %v3791 = vunpack.c.h.b16 %v2192
        %v3792 = vunpack.c.l.b16 %v2193
        %v3793 = vunpack.c.h.b16 %v2193
        %v3794 = vunpack.c.l.b16 %v2194
        %v3795 = vunpack.c.h.b16 %v2194
        %v3796 = vunpack.c.l.b16 %v2195
        %v3797 = vunpack.c.h.b16 %v2195
        %v3798 = vunpack.c.l.b16 %v2196
        %v3799 = vunpack.c.h.b16 %v2196
        %v3800 = vunpack.c.l.b16 %v2197
        %v3801 = vunpack.c.h.b16 %v2197
        %v3802 = vunpack.c.l.b16 %v2198
        %v3803 = vunpack.c.h.b16 %v2198
        %v3804 = vunpack.c.l.b16 %v2199
        %v3805 = vunpack.c.h.b16 %v2199
        %v3806 = vunpack.c.l.b16 %v2200
        %v3807 = vunpack.c.h.b16 %v2200
        %v3808 = vunpack.c.l.b16 %v2201
        %v3809 = vunpack.c.h.b16 %v2201
        %v3810 = vunpack.c.l.b16 %v2202
        %v3811 = vunpack.c.h.b16 %v2202
        %v3812 = vunpack.c.l.b16 %v2203
        %v3813 = vunpack.c.h.b16 %v2203
        %v3814 = vunpack.c.l.b16 %v2204
        %v3815 = vunpack.c.h.b16 %v2204
        %v3816 = vunpack.c.l.b16 %v2205
        %v3817 = vunpack.c.h.b16 %v2205
        %v3818 = vunpack.c.l.b16 %v2206
        %v3819 = vunpack.c.h.b16 %v2206
        %v3820 = vunpack.c.l.b16 %v2207
        %v3821 = vunpack.c.h.b16 %v2207
        %v3822 = vunpack.c.l.b16 %v2208
        %v3823 = vunpack.c.h.b16 %v2208
        %v3824 = vunpack.c.l.b16 %v2209
        %v3825 = vunpack.c.h.b16 %v2209
        %v3826 = vunpack.c.l.b16 %v2210
        %v3827 = vunpack.c.h.b16 %v2210
        %v3828 = vunpack.c.l.b16 %v2211
        %v3829 = vunpack.c.h.b16 %v2211
        %v3830 = vunpack.c.l.b16 %v2212
        %v3831 = vunpack.c.h.b16 %v2212
        %v3832 = vunpack.c.l.b16 %v2213
        %v3833 = vunpack.c.h.b16 %v2213
        %v3834 = vpack.c.b16 %v2826, %v2810
        %v3835 = vpack.c.b16 %v2827, %v2811
        %v3836 = vpack.c.b16 %v2828, %v2812
        %v3837 = vpack.c.b16 %v2829, %v2813
        %v3838 = vpack.c.b16 %v2830, %v2814
        %v3839 = vpack.c.b16 %v2831, %v2815
        %v3840 = vpack.c.b16 %v2832, %v2816
        %v3841 = vpack.c.b16 %v2833, %v2817
        %v3842 = vpack.c.b16 %v2834, %v2818
        %v3843 = vpack.c.b16 %v2835, %v2819
        %v3844 = vpack.c.b16 %v2836, %v2820
        %v3845 = vpack.c.b16 %v2837, %v2821
        %v3846 = vpack.c.b16 %v2838, %v2822
        %v3847 = vpack.c.b16 %v2839, %v2823
        %v3848 = vpack.c.b16 %v2840, %v2824
        %v3849 = vpack.c.b16 %v2841, %v2825
        %v3850 = vpack.c.b16 %v2858, %v2842
        %v3851 = vpack.c.b16 %v2859, %v2843
        %v3852 = vpack.c.b16 %v2860, %v2844
        %v3853 = vpack.c.b16 %v2861, %v2845
        %v3854 = vpack.c.b16 %v2862, %v2846
        %v3855 = vpack.c.b16 %v2863, %v2847
        %v3856 = vpack.c.b16 %v2864, %v2848
        %v3857 = vpack.c.b16 %v2865, %v2849
        %v3858 = vpack.c.b16 %v2866, %v2850
        %v3859 = vpack.c.b16 %v2867, %v2851
        %v3860 = vpack.c.b16 %v2868, %v2852
        %v3861 = vpack.c.b16 %v2869, %v2853
        %v3862 = vpack.c.b16 %v2870, %v2854
        %v3863 = vpack.c.b16 %v2871, %v2855
        %v3864 = vpack.c.b16 %v2872, %v2856
        %v3865 = vpack.c.b16 %v2873, %v2857
        %v3866 = vpack.c.b16 %v2890, %v2874
        %v3867 = vpack.c.b16 %v2891, %v2875
        %v3868 = vpack.c.b16 %v2892, %v2876
        %v3869 = vpack.c.b16 %v2893, %v2877
        %v3870 = vpack.c.b16 %v2894, %v2878
        %v3871 = vpack.c.b16 %v2895, %v2879
        %v3872 = vpack.c.b16 %v2896, %v2880
        %v3873 = vpack.c.b16 %v2897, %v2881
        %v3874 = vpack.c.b16 %v2898, %v2882
        %v3875 = vpack.c.b16 %v2899, %v2883
        %v3876 = vpack.c.b16 %v2900, %v2884
        %v3877 = vpack.c.b16 %v2901, %v2885
        %v3878 = vpack.c.b16 %v2902, %v2886
        %v3879 = vpack.c.b16 %v2903, %v2887
        %v3880 = vpack.c.b16 %v2904, %v2888
        %v3881 = vpack.c.b16 %v2905, %v2889
        %v3882 = vpack.c.b16 %v2922, %v2906
        %v3883 = vpack.c.b16 %v2923, %v2907
        %v3884 = vpack.c.b16 %v2924, %v2908
        %v3885 = vpack.c.b16 %v2925, %v2909
        %v3886 = vpack.c.b16 %v2926, %v2910
        %v3887 = vpack.c.b16 %v2927, %v2911
        %v3888 = vpack.c.b16 %v2928, %v2912
        %v3889 = vpack.c.b16 %v2929, %v2913
        %v3890 = vpack.c.b16 %v2930, %v2914
        %v3891 = vpack.c.b16 %v2931, %v2915
        %v3892 = vpack.c.b16 %v2932, %v2916
        %v3893 = vpack.c.b16 %v2933, %v2917
        %v3894 = vpack.c.b16 %v2934, %v2918
        %v3895 = vpack.c.b16 %v2935, %v2919
        %v3896 = vpack.c.b16 %v2936, %v2920
        %v3897 = vpack.c.b16 %v2937, %v2921
        %v3898 = vpack.c.b16 %v2954, %v2938
        %v3899 = vpack.c.b16 %v2955, %v2939
        %v3900 = vpack.c.b16 %v2956, %v2940
        %v3901 = vpack.c.b16 %v2957, %v2941
        %v3902 = vpack.c.b16 %v2958, %v2942
        %v3903 = vpack.c.b16 %v2959, %v2943
        %v3904 = vpack.c.b16 %v2960, %v2944
        %v3905 = vpack.c.b16 %v2961, %v2945
        %v3906 = vpack.c.b16 %v2962, %v2946
        %v3907 = vpack.c.b16 %v2963, %v2947
        %v3908 = vpack.c.b16 %v2964, %v2948
        %v3909 = vpack.c.b16 %v2965, %v2949
        %v3910 = vpack.c.b16 %v2966, %v2950
        %v3911 = vpack.c.b16 %v2967, %v2951
        %v3912 = vpack.c.b16 %v2968, %v2952
        %v3913 = vpack.c.b16 %v2969, %v2953
        %v3914 = vpack.c.b16 %v2986, %v2970
        %v3915 = vpack.c.b16 %v2987, %v2971
        %v3916 = vpack.c.b16 %v2988, %v2972
        %v3917 = vpack.c.b16 %v2989, %v2973
        %v3918 = vpack.c.b16 %v2990, %v2974
        %v3919 = vpack.c.b16 %v2991, %v2975
        %v3920 = vpack.c.b16 %v2992, %v2976
        %v3921 = vpack.c.b16 %v2993, %v2977
        %v3922 = vpack.c.b16 %v2994, %v2978
        %v3923 = vpack.c.b16 %v2995, %v2979
        %v3924 = vpack.c.b16 %v2996, %v2980
        %v3925 = vpack.c.b16 %v2997, %v2981
        %v3926 = vpack.c.b16 %v2998, %v2982
        %v3927 = vpack.c.b16 %v2999, %v2983
        %v3928 = vpack.c.b16 %v3000, %v2984
        %v3929 = vpack.c.b16 %v3001, %v2985
        %v3930 = vpack.c.b16 %v3018, %v3002
        %v3931 = vpack.c.b16 %v3019, %v3003
        %v3932 = vpack.c.b16 %v3020, %v3004
        %v3933 = vpack.c.b16 %v3021, %v3005
        %v3934 = vpack.c.b16 %v3022, %v3006
        %v3935 = vpack.c.b16 %v3023, %v3007
        %v3936 = vpack.c.b16 %v3024, %v3008
        %v3937 = vpack.c.b16 %v3025, %v3009
        %v3938 = vpack.c.b16 %v3026, %v3010
        %v3939 = vpack.c.b16 %v3027, %v3011
        %v3940 = vpack.c.b16 %v3028, %v3012
        %v3941 = vpack.c.b16 %v3029, %v3013
        %v3942 = vpack.c.b16 %v3030, %v3014
        %v3943 = vpack.c.b16 %v3031, %v3015
        %v3944 = vpack.c.b16 %v3032, %v3016
        %v3945 = vpack.c.b16 %v3033, %v3017
        %v3946 = vpack.c.b16 %v3050, %v3034
        %v3947 = vpack.c.b16 %v3051, %v3035
        %v3948 = vpack.c.b16 %v3052, %v3036
        %v3949 = vpack.c.b16 %v3053, %v3037
        %v3950 = vpack.c.b16 %v3054, %v3038
        %v3951 = vpack.c.b16 %v3055, %v3039
        %v3952 = vpack.c.b16 %v3056, %v3040
        %v3953 = vpack.c.b16 %v3057, %v3041
        %v3954 = vpack.c.b16 %v3058, %v3042
        %v3955 = vpack.c.b16 %v3059, %v3043
        %v3956 = vpack.c.b16 %v3060, %v3044
        %v3957 = vpack.c.b16 %v3061, %v3045
        %v3958 = vpack.c.b16 %v3062, %v3046
        %v3959 = vpack.c.b16 %v3063, %v3047
        %v3960 = vpack.c.b16 %v3064, %v3048
        %v3961 = vpack.c.b16 %v3065, %v3049
        %v3962 = vpack.c.b16 %v3082, %v3066
        %v3963 = vpack.c.b16 %v3083, %v3067
        %v3964 = vpack.c.b16 %v3084, %v3068
        %v3965 = vpack.c.b16 %v3085, %v3069
        %v3966 = vpack.c.b16 %v3086, %v3070
        %v3967 = vpack.c.b16 %v3087, %v3071
        %v3968 = vpack.c.b16 %v3088, %v3072
        %v3969 = vpack.c.b16 %v3089, %v3073
        %v3970 = vpack.c.b16 %v3090, %v3074
        %v3971 = vpack.c.b16 %v3091, %v3075
        %v3972 = vpack.c.b16 %v3092, %v3076
        %v3973 = vpack.c.b16 %v3093, %v3077
        %v3974 = vpack.c.b16 %v3094, %v3078
        %v3975 = vpack.c.b16 %v3095, %v3079
        %v3976 = vpack.c.b16 %v3096, %v3080
        %v3977 = vpack.c.b16 %v3097, %v3081
        %v3978 = vpack.c.b16 %v3114, %v3098
        %v3979 = vpack.c.b16 %v3115, %v3099
        %v3980 = vpack.c.b16 %v3116, %v3100
        %v3981 = vpack.c.b16 %v3117, %v3101
        %v3982 = vpack.c.b16 %v3118, %v3102
        %v3983 = vpack.c.b16 %v3119, %v3103
        %v3984 = vpack.c.b16 %v3120, %v3104
        %v3985 = vpack.c.b16 %v3121, %v3105
        %v3986 = vpack.c.b16 %v3122, %v3106
        %v3987 = vpack.c.b16 %v3123, %v3107
        %v3988 = vpack.c.b16 %v3124, %v3108
        %v3989 = vpack.c.b16 %v3125, %v3109
        %v3990 = vpack.c.b16 %v3126, %v3110
        %v3991 = vpack.c.b16 %v3127, %v3111
        %v3992 = vpack.c.b16 %v3128, %v3112
        %v3993 = vpack.c.b16 %v3129, %v3113
        %v3994 = vpack.c.b16 %v3146, %v3130
        %v3995 = vpack.c.b16 %v3147, %v3131
        %v3996 = vpack.c.b16 %v3148, %v3132
        %v3997 = vpack.c.b16 %v3149, %v3133
        %v3998 = vpack.c.b16 %v3150, %v3134
        %v3999 = vpack.c.b16 %v3151, %v3135
        %v4000 = vpack.c.b16 %v3152, %v3136
        %v4001 = vpack.c.b16 %v3153, %v3137
        %v4002 = vpack.c.b16 %v3154, %v3138
        %v4003 = vpack.c.b16 %v3155, %v3139
        %v4004 = vpack.c.b16 %v3156, %v3140
        %v4005 = vpack.c.b16 %v3157, %v3141
        %v4006 = vpack.c.b16 %v3158, %v3142
        %v4007 = vpack.c.b16 %v3159, %v3143
        %v4008 = vpack.c.b16 %v3160, %v3144
        %v4009 = vpack.c.b16 %v3161, %v3145
        %v4010 = vpack.c.b16 %v3178, %v3162
        %v4011 = vpack.c.b16 %v3179, %v3163
        %v4012 = vpack.c.b16 %v3180, %v3164
        %v4013 = vpack.c.b16 %v3181, %v3165
        %v4014 = vpack.c.b16 %v3182, %v3166
        %v4015 = vpack.c.b16 %v3183, %v3167
        %v4016 = vpack.c.b16 %v3184, %v3168
        %v4017 = vpack.c.b16 %v3185, %v3169
        %v4018 = vpack.c.b16 %v3186, %v3170
        %v4019 = vpack.c.b16 %v3187, %v3171
        %v4020 = vpack.c.b16 %v3188, %v3172
        %v4021 = vpack.c.b16 %v3189, %v3173
        %v4022 = vpack.c.b16 %v3190, %v3174
        %v4023 = vpack.c.b16 %v3191, %v3175
        %v4024 = vpack.c.b16 %v3192, %v3176
        %v4025 = vpack.c.b16 %v3193, %v3177
        %v4026 = vpack.c.b16 %v3210, %v3194
        %v4027 = vpack.c.b16 %v3211, %v3195
        %v4028 = vpack.c.b16 %v3212, %v3196
        %v4029 = vpack.c.b16 %v3213, %v3197
        %v4030 = vpack.c.b16 %v3214, %v3198
        %v4031 = vpack.c.b16 %v3215, %v3199
        %v4032 = vpack.c.b16 %v3216, %v3200
        %v4033 = vpack.c.b16 %v3217, %v3201
        %v4034 = vpack.c.b16 %v3218, %v3202
        %v4035 = vpack.c.b16 %v3219, %v3203
        %v4036 = vpack.c.b16 %v3220, %v3204
        %v4037 = vpack.c.b16 %v3221, %v3205
        %v4038 = vpack.c.b16 %v3222, %v3206
        %v4039 = vpack.c.b16 %v3223, %v3207
        %v4040 = vpack.c.b16 %v3224, %v3208
        %v4041 = vpack.c.b16 %v3225, %v3209
        %v4042 = vpack.c.b16 %v3242, %v3226
        %v4043 = vpack.c.b16 %v3243, %v3227
        %v4044 = vpack.c.b16 %v3244, %v3228
        %v4045 = vpack.c.b16 %v3245, %v3229
        %v4046 = vpack.c.b16 %v3246, %v3230
        %v4047 = vpack.c.b16 %v3247, %v3231
        %v4048 = vpack.c.b16 %v3248, %v3232
        %v4049 = vpack.c.b16 %v3249, %v3233
        %v4050 = vpack.c.b16 %v3250, %v3234
        %v4051 = vpack.c.b16 %v3251, %v3235
        %v4052 = vpack.c.b16 %v3252, %v3236
        %v4053 = vpack.c.b16 %v3253, %v3237
        %v4054 = vpack.c.b16 %v3254, %v3238
        %v4055 = vpack.c.b16 %v3255, %v3239
        %v4056 = vpack.c.b16 %v3256, %v3240
        %v4057 = vpack.c.b16 %v3257, %v3241
        %v4058 = vpack.c.b16 %v3274, %v3258
        %v4059 = vpack.c.b16 %v3275, %v3259
        %v4060 = vpack.c.b16 %v3276, %v3260
        %v4061 = vpack.c.b16 %v3277, %v3261
        %v4062 = vpack.c.b16 %v3278, %v3262
        %v4063 = vpack.c.b16 %v3279, %v3263
        %v4064 = vpack.c.b16 %v3280, %v3264
        %v4065 = vpack.c.b16 %v3281, %v3265
        %v4066 = vpack.c.b16 %v3282, %v3266
        %v4067 = vpack.c.b16 %v3283, %v3267
        %v4068 = vpack.c.b16 %v3284, %v3268
        %v4069 = vpack.c.b16 %v3285, %v3269
        %v4070 = vpack.c.b16 %v3286, %v3270
        %v4071 = vpack.c.b16 %v3287, %v3271
        %v4072 = vpack.c.b16 %v3288, %v3272
        %v4073 = vpack.c.b16 %v3289, %v3273
        %v4074 = vpack.c.b16 %v3306, %v3290
        %v4075 = vpack.c.b16 %v3307, %v3291
        %v4076 = vpack.c.b16 %v3308, %v3292
        %v4077 = vpack.c.b16 %v3309, %v3293
        %v4078 = vpack.c.b16 %v3310, %v3294
        %v4079 = vpack.c.b16 %v3311, %v3295
        %v4080 = vpack.c.b16 %v3312, %v3296
        %v4081 = vpack.c.b16 %v3313, %v3297
        %v4082 = vpack.c.b16 %v3314, %v3298
        %v4083 = vpack.c.b16 %v3315, %v3299
        %v4084 = vpack.c.b16 %v3316, %v3300
        %v4085 = vpack.c.b16 %v3317, %v3301
        %v4086 = vpack.c.b16 %v3318, %v3302
        %v4087 = vpack.c.b16 %v3319, %v3303
        %v4088 = vpack.c.b16 %v3320, %v3304
        %v4089 = vpack.c.b16 %v3321, %v3305
        %v4090 = vpack.c.b16 %v3338, %v3322
        %v4091 = vpack.c.b16 %v3339, %v3323
        %v4092 = vpack.c.b16 %v3340, %v3324
        %v4093 = vpack.c.b16 %v3341, %v3325
        %v4094 = vpack.c.b16 %v3342, %v3326
        %v4095 = vpack.c.b16 %v3343, %v3327
        %v4096 = vpack.c.b16 %v3344, %v3328
        %v4097 = vpack.c.b16 %v3345, %v3329
        %v4098 = vpack.c.b16 %v3346, %v3330
        %v4099 = vpack.c.b16 %v3347, %v3331
        %v4100 = vpack.c.b16 %v3348, %v3332
        %v4101 = vpack.c.b16 %v3349, %v3333
        %v4102 = vpack.c.b16 %v3350, %v3334
        %v4103 = vpack.c.b16 %v3351, %v3335
        %v4104 = vpack.c.b16 %v3352, %v3336
        %v4105 = vpack.c.b16 %v3353, %v3337
        %v4106 = vpack.c.b16 %v3370, %v3354
        %v4107 = vpack.c.b16 %v3371, %v3355
        %v4108 = vpack.c.b16 %v3372, %v3356
        %v4109 = vpack.c.b16 %v3373, %v3357
        %v4110 = vpack.c.b16 %v3374, %v3358
        %v4111 = vpack.c.b16 %v3375, %v3359
        %v4112 = vpack.c.b16 %v3376, %v3360
        %v4113 = vpack.c.b16 %v3377, %v3361
        %v4114 = vpack.c.b16 %v3378, %v3362
        %v4115 = vpack.c.b16 %v3379, %v3363
        %v4116 = vpack.c.b16 %v3380, %v3364
        %v4117 = vpack.c.b16 %v3381, %v3365
        %v4118 = vpack.c.b16 %v3382, %v3366
        %v4119 = vpack.c.b16 %v3383, %v3367
        %v4120 = vpack.c.b16 %v3384, %v3368
        %v4121 = vpack.c.b16 %v3385, %v3369
        %v4122 = vpack.c.b16 %v3402, %v3386
        %v4123 = vpack.c.b16 %v3403, %v3387
        %v4124 = vpack.c.b16 %v3404, %v3388
        %v4125 = vpack.c.b16 %v3405, %v3389
        %v4126 = vpack.c.b16 %v3406, %v3390
        %v4127 = vpack.c.b16 %v3407, %v3391
        %v4128 = vpack.c.b16 %v3408, %v3392
        %v4129 = vpack.c.b16 %v3409, %v3393
        %v4130 = vpack.c.b16 %v3410, %v3394
        %v4131 = vpack.c.b16 %v3411, %v3395
        %v4132 = vpack.c.b16 %v3412, %v3396
        %v4133 = vpack.c.b16 %v3413, %v3397
        %v4134 = vpack.c.b16 %v3414, %v3398
        %v4135 = vpack.c.b16 %v3415, %v3399
        %v4136 = vpack.c.b16 %v3416, %v3400
        %v4137 = vpack.c.b16 %v3417, %v3401
        %v4138 = vpack.c.b16 %v3434, %v3418
        %v4139 = vpack.c.b16 %v3435, %v3419
        %v4140 = vpack.c.b16 %v3436, %v3420
        %v4141 = vpack.c.b16 %v3437, %v3421
        %v4142 = vpack.c.b16 %v3438, %v3422
        %v4143 = vpack.c.b16 %v3439, %v3423
        %v4144 = vpack.c.b16 %v3440, %v3424
        %v4145 = vpack.c.b16 %v3441, %v3425
        %v4146 = vpack.c.b16 %v3442, %v3426
        %v4147 = vpack.c.b16 %v3443, %v3427
        %v4148 = vpack.c.b16 %v3444, %v3428
        %v4149 = vpack.c.b16 %v3445, %v3429
        %v4150 = vpack.c.b16 %v3446, %v3430
        %v4151 = vpack.c.b16 %v3447, %v3431
        %v4152 = vpack.c.b16 %v3448, %v3432
        %v4153 = vpack.c.b16 %v3449, %v3433
        %v4154 = vpack.c.b16 %v3466, %v3450
        %v4155 = vpack.c.b16 %v3467, %v3451
        %v4156 = vpack.c.b16 %v3468, %v3452
        %v4157 = vpack.c.b16 %v3469, %v3453
        %v4158 = vpack.c.b16 %v3470, %v3454
        %v4159 = vpack.c.b16 %v3471, %v3455
        %v4160 = vpack.c.b16 %v3472, %v3456
        %v4161 = vpack.c.b16 %v3473, %v3457
        %v4162 = vpack.c.b16 %v3474, %v3458
        %v4163 = vpack.c.b16 %v3475, %v3459
        %v4164 = vpack.c.b16 %v3476, %v3460
        %v4165 = vpack.c.b16 %v3477, %v3461
        %v4166 = vpack.c.b16 %v3478, %v3462
        %v4167 = vpack.c.b16 %v3479, %v3463
        %v4168 = vpack.c.b16 %v3480, %v3464
        %v4169 = vpack.c.b16 %v3481, %v3465
        %v4170 = vpack.c.b16 %v3498, %v3482
        %v4171 = vpack.c.b16 %v3499, %v3483
        %v4172 = vpack.c.b16 %v3500, %v3484
        %v4173 = vpack.c.b16 %v3501, %v3485
        %v4174 = vpack.c.b16 %v3502, %v3486
        %v4175 = vpack.c.b16 %v3503, %v3487
        %v4176 = vpack.c.b16 %v3504, %v3488
        %v4177 = vpack.c.b16 %v3505, %v3489
        %v4178 = vpack.c.b16 %v3506, %v3490
        %v4179 = vpack.c.b16 %v3507, %v3491
        %v4180 = vpack.c.b16 %v3508, %v3492
        %v4181 = vpack.c.b16 %v3509, %v3493
        %v4182 = vpack.c.b16 %v3510, %v3494
        %v4183 = vpack.c.b16 %v3511, %v3495
        %v4184 = vpack.c.b16 %v3512, %v3496
        %v4185 = vpack.c.b16 %v3513, %v3497
        %v4186 = vpack.c.b16 %v3530, %v3514
        %v4187 = vpack.c.b16 %v3531, %v3515
        %v4188 = vpack.c.b16 %v3532, %v3516
        %v4189 = vpack.c.b16 %v3533, %v3517
        %v4190 = vpack.c.b16 %v3534, %v3518
        %v4191 = vpack.c.b16 %v3535, %v3519
        %v4192 = vpack.c.b16 %v3536, %v3520
        %v4193 = vpack.c.b16 %v3537, %v3521
        %v4194 = vpack.c.b16 %v3538, %v3522
        %v4195 = vpack.c.b16 %v3539, %v3523
        %v4196 = vpack.c.b16 %v3540, %v3524
        %v4197 = vpack.c.b16 %v3541, %v3525
        %v4198 = vpack.c.b16 %v3542, %v3526
        %v4199 = vpack.c.b16 %v3543, %v3527
        %v4200 = vpack.c.b16 %v3544, %v3528
        %v4201 = vpack.c.b16 %v3545, %v3529
        %v4202 = vpack.c.b16 %v3562, %v3546
        %v4203 = vpack.c.b16 %v3563, %v3547
        %v4204 = vpack.c.b16 %v3564, %v3548
        %v4205 = vpack.c.b16 %v3565, %v3549
        %v4206 = vpack.c.b16 %v3566, %v3550
        %v4207 = vpack.c.b16 %v3567, %v3551
        %v4208 = vpack.c.b16 %v3568, %v3552
        %v4209 = vpack.c.b16 %v3569, %v3553
        %v4210 = vpack.c.b16 %v3570, %v3554
        %v4211 = vpack.c.b16 %v3571, %v3555
        %v4212 = vpack.c.b16 %v3572, %v3556
        %v4213 = vpack.c.b16 %v3573, %v3557
        %v4214 = vpack.c.b16 %v3574, %v3558
        %v4215 = vpack.c.b16 %v3575, %v3559
        %v4216 = vpack.c.b16 %v3576, %v3560
        %v4217 = vpack.c.b16 %v3577, %v3561
        %v4218 = vpack.c.b16 %v3594, %v3578
        %v4219 = vpack.c.b16 %v3595, %v3579
        %v4220 = vpack.c.b16 %v3596, %v3580
        %v4221 = vpack.c.b16 %v3597, %v3581
        %v4222 = vpack.c.b16 %v3598, %v3582
        %v4223 = vpack.c.b16 %v3599, %v3583
        %v4224 = vpack.c.b16 %v3600, %v3584
        %v4225 = vpack.c.b16 %v3601, %v3585
        %v4226 = vpack.c.b16 %v3602, %v3586
        %v4227 = vpack.c.b16 %v3603, %v3587
        %v4228 = vpack.c.b16 %v3604, %v3588
        %v4229 = vpack.c.b16 %v3605, %v3589
        %v4230 = vpack.c.b16 %v3606, %v3590
        %v4231 = vpack.c.b16 %v3607, %v3591
        %v4232 = vpack.c.b16 %v3608, %v3592
        %v4233 = vpack.c.b16 %v3609, %v3593
        %v4234 = vpack.c.b16 %v3626, %v3610
        %v4235 = vpack.c.b16 %v3627, %v3611
        %v4236 = vpack.c.b16 %v3628, %v3612
        %v4237 = vpack.c.b16 %v3629, %v3613
        %v4238 = vpack.c.b16 %v3630, %v3614
        %v4239 = vpack.c.b16 %v3631, %v3615
        %v4240 = vpack.c.b16 %v3632, %v3616
        %v4241 = vpack.c.b16 %v3633, %v3617
        %v4242 = vpack.c.b16 %v3634, %v3618
        %v4243 = vpack.c.b16 %v3635, %v3619
        %v4244 = vpack.c.b16 %v3636, %v3620
        %v4245 = vpack.c.b16 %v3637, %v3621
        %v4246 = vpack.c.b16 %v3638, %v3622
        %v4247 = vpack.c.b16 %v3639, %v3623
        %v4248 = vpack.c.b16 %v3640, %v3624
        %v4249 = vpack.c.b16 %v3641, %v3625
        %v4250 = vpack.c.b16 %v3658, %v3642
        %v4251 = vpack.c.b16 %v3659, %v3643
        %v4252 = vpack.c.b16 %v3660, %v3644
        %v4253 = vpack.c.b16 %v3661, %v3645
        %v4254 = vpack.c.b16 %v3662, %v3646
        %v4255 = vpack.c.b16 %v3663, %v3647
        %v4256 = vpack.c.b16 %v3664, %v3648
        %v4257 = vpack.c.b16 %v3665, %v3649
        %v4258 = vpack.c.b16 %v3666, %v3650
        %v4259 = vpack.c.b16 %v3667, %v3651
        %v4260 = vpack.c.b16 %v3668, %v3652
        %v4261 = vpack.c.b16 %v3669, %v3653
        %v4262 = vpack.c.b16 %v3670, %v3654
        %v4263 = vpack.c.b16 %v3671, %v3655
        %v4264 = vpack.c.b16 %v3672, %v3656
        %v4265 = vpack.c.b16 %v3673, %v3657
        %v4266 = vpack.c.b16 %v3690, %v3674
        %v4267 = vpack.c.b16 %v3691, %v3675
        %v4268 = vpack.c.b16 %v3692, %v3676
        %v4269 = vpack.c.b16 %v3693, %v3677
        %v4270 = vpack.c.b16 %v3694, %v3678
        %v4271 = vpack.c.b16 %v3695, %v3679
        %v4272 = vpack.c.b16 %v3696, %v3680
        %v4273 = vpack.c.b16 %v3697, %v3681
        %v4274 = vpack.c.b16 %v3698, %v3682
        %v4275 = vpack.c.b16 %v3699, %v3683
        %v4276 = vpack.c.b16 %v3700, %v3684
        %v4277 = vpack.c.b16 %v3701, %v3685
        %v4278 = vpack.c.b16 %v3702, %v3686
        %v4279 = vpack.c.b16 %v3703, %v3687
        %v4280 = vpack.c.b16 %v3704, %v3688
        %v4281 = vpack.c.b16 %v3705, %v3689
        %v4282 = vpack.c.b16 %v3722, %v3706
        %v4283 = vpack.c.b16 %v3723, %v3707
        %v4284 = vpack.c.b16 %v3724, %v3708
        %v4285 = vpack.c.b16 %v3725, %v3709
        %v4286 = vpack.c.b16 %v3726, %v3710
        %v4287 = vpack.c.b16 %v3727, %v3711
        %v4288 = vpack.c.b16 %v3728, %v3712
        %v4289 = vpack.c.b16 %v3729, %v3713
        %v4290 = vpack.c.b16 %v3730, %v3714
        %v4291 = vpack.c.b16 %v3731, %v3715
        %v4292 = vpack.c.b16 %v3732, %v3716
        %v4293 = vpack.c.b16 %v3733, %v3717
        %v4294 = vpack.c.b16 %v3734, %v3718
        %v4295 = vpack.c.b16 %v3735, %v3719
        %v4296 = vpack.c.b16 %v3736, %v3720
        %v4297 = vpack.c.b16 %v3737, %v3721
        %v4298 = vpack.c.b16 %v3754, %v3738
        %v4299 = vpack.c.b16 %v3755, %v3739
        %v4300 = vpack.c.b16 %v3756, %v3740
        %v4301 = vpack.c.b16 %v3757, %v3741
        %v4302 = vpack.c.b16 %v3758, %v3742
        %v4303 = vpack.c.b16 %v3759, %v3743
        %v4304 = vpack.c.b16 %v3760, %v3744
        %v4305 = vpack.c.b16 %v3761, %v3745
        %v4306 = vpack.c.b16 %v3762, %v3746
        %v4307 = vpack.c.b16 %v3763, %v3747
        %v4308 = vpack.c.b16 %v3764, %v3748
        %v4309 = vpack.c.b16 %v3765, %v3749
        %v4310 = vpack.c.b16 %v3766, %v3750
        %v4311 = vpack.c.b16 %v3767, %v3751
        %v4312 = vpack.c.b16 %v3768, %v3752
        %v4313 = vpack.c.b16 %v3769, %v3753
        %v4314 = vpack.c.b16 %v3786, %v3770
        %v4315 = vpack.c.b16 %v3787, %v3771
        %v4316 = vpack.c.b16 %v3788, %v3772
        %v4317 = vpack.c.b16 %v3789, %v3773
        %v4318 = vpack.c.b16 %v3790, %v3774
        %v4319 = vpack.c.b16 %v3791, %v3775
        %v4320 = vpack.c.b16 %v3792, %v3776
        %v4321 = vpack.c.b16 %v3793, %v3777
        %v4322 = vpack.c.b16 %v3794, %v3778
        %v4323 = vpack.c.b16 %v3795, %v3779
        %v4324 = vpack.c.b16 %v3796, %v3780
        %v4325 = vpack.c.b16 %v3797, %v3781
        %v4326 = vpack.c.b16 %v3798, %v3782
        %v4327 = vpack.c.b16 %v3799, %v3783
        %v4328 = vpack.c.b16 %v3800, %v3784
        %v4329 = vpack.c.b16 %v3801, %v3785
        %v4330 = vpack.c.b16 %v3818, %v3802
        %v4331 = vpack.c.b16 %v3819, %v3803
        %v4332 = vpack.c.b16 %v3820, %v3804
        %v4333 = vpack.c.b16 %v3821, %v3805
        %v4334 = vpack.c.b16 %v3822, %v3806
        %v4335 = vpack.c.b16 %v3823, %v3807
        %v4336 = vpack.c.b16 %v3824, %v3808
        %v4337 = vpack.c.b16 %v3825, %v3809
        %v4338 = vpack.c.b16 %v3826, %v3810
        %v4339 = vpack.c.b16 %v3827, %v3811
        %v4340 = vpack.c.b16 %v3828, %v3812
        %v4341 = vpack.c.b16 %v3829, %v3813
        %v4342 = vpack.c.b16 %v3830, %v3814
        %v4343 = vpack.c.b16 %v3831, %v3815
        %v4344 = vpack.c.b16 %v3832, %v3816
        %v4345 = vpack.c.b16 %v3833, %v3817
        %4858 = vmatprep.subr.bf16.mxu0 %v3835
        %4859 = vmatpush1.bf16.msra.mxu0 %v3834
        %4860 = vmatprep.subr.bf16.mxu0 %v3851
        %4861 = vmatpush1.bf16.msra.mxu0 %v3850
        %4862 = vmatprep.subr.bf16.mxu0 %v3867
        %4863 = vmatpush1.bf16.msra.mxu0 %v3866
        %4864 = vmatprep.subr.bf16.mxu0 %v3883
        %4865 = vmatpush1.bf16.msra.mxu0 %v3882
        %4866 = vmatprep.subr.bf16.mxu0 %v3899
        %4867 = vmatpush1.bf16.msra.mxu0 %v3898
        %4868 = vmatprep.subr.bf16.mxu0 %v3915
        %4869 = vmatpush1.bf16.msra.mxu0 %v3914
        %4870 = vmatprep.subr.bf16.mxu0 %v3931
        %4871 = vmatpush1.bf16.msra.mxu0 %v3930
        %4872 = vmatprep.subr.bf16.mxu0 %v3947
        %4873 = vmatpush1.bf16.msra.mxu0 %v3946
        %4874 = vmatprep.subr.bf16.mxu0 %v3963
        %4875 = vmatpush1.bf16.msra.mxu0 %v3962
        %4876 = vmatprep.subr.bf16.mxu0 %v3979
        %4877 = vmatpush1.bf16.msra.mxu0 %v3978
        %4878 = vmatprep.subr.bf16.mxu0 %v3995
        %4879 = vmatpush1.bf16.msra.mxu0 %v3994
        %4880 = vmatprep.subr.bf16.mxu0 %v4011
        %4881 = vmatpush1.bf16.msra.mxu0 %v4010
        %4882 = vmatprep.subr.bf16.mxu0 %v4027
        %4883 = vmatpush1.bf16.msra.mxu0 %v4026
        %4884 = vmatprep.subr.bf16.mxu0 %v4043
        %4885 = vmatpush1.bf16.msra.mxu0 %v4042
        %4886 = vmatprep.subr.bf16.mxu0 %v4059
        %4887 = vmatpush1.bf16.msra.mxu0 %v4058
        %4888 = vmatprep.subr.bf16.mxu0 %v4075
        %4889 = vmatpush1.bf16.msra.mxu0 %v4074
        %4890 = vmatprep.mubr.bf16.mxu0 %v1699
        %4891 = vmatmul.mubr.bf16.gmra.mrb[0].mxu0 %v1698
        %v4892 = vpop.f32.mrb[0].mxu0
        %v4893 = vadd.f32 %v2221, %v4892
        %v4894 = vpop.f32.mrb[0].mxu0
        %v4895 = vadd.f32 %v2225, %v4894
        %v4896 = vpop.f32.mrb[0].mxu0
        %v4897 = vpop.f32.mrb[0].mxu0
        %4898 = vdwg.mxu0
        %4899 = vmatprep.subr.bf16.mxu0 %v4091
        %4900 = vmatpush1.bf16.msra.mxu0 %v4090
        %4901 = vmatprep.subr.bf16.mxu0 %v4107
        %4902 = vmatpush1.bf16.msra.mxu0 %v4106
        %4903 = vmatprep.subr.bf16.mxu0 %v4123
        %4904 = vmatpush1.bf16.msra.mxu0 %v4122
        %4905 = vmatprep.subr.bf16.mxu0 %v4139
        %4906 = vmatpush1.bf16.msra.mxu0 %v4138
        %4907 = vmatprep.subr.bf16.mxu0 %v4155
        %4908 = vmatpush1.bf16.msra.mxu0 %v4154
        %4909 = vmatprep.subr.bf16.mxu0 %v4171
        %4910 = vmatpush1.bf16.msra.mxu0 %v4170
        %4911 = vmatprep.subr.bf16.mxu0 %v4187
        %4912 = vmatpush1.bf16.msra.mxu0 %v4186
        %4913 = vmatprep.subr.bf16.mxu0 %v4203
        %4914 = vmatpush1.bf16.msra.mxu0 %v4202
        %4915 = vmatprep.subr.bf16.mxu0 %v4219
        %4916 = vmatpush1.bf16.msra.mxu0 %v4218
        %4917 = vmatprep.subr.bf16.mxu0 %v4235
        %4918 = vmatpush1.bf16.msra.mxu0 %v4234
        %4919 = vmatprep.subr.bf16.mxu0 %v4251
        %4920 = vmatpush1.bf16.msra.mxu0 %v4250
        %4921 = vmatprep.subr.bf16.mxu0 %v4267
        %4922 = vmatpush1.bf16.msra.mxu0 %v4266
        %4923 = vmatprep.subr.bf16.mxu0 %v4283
        %4924 = vmatpush1.bf16.msra.mxu0 %v4282
        %4925 = vmatprep.subr.bf16.mxu0 %v4299
        %4926 = vmatpush1.bf16.msra.mxu0 %v4298
        %4927 = vmatprep.subr.bf16.mxu0 %v4315
        %4928 = vmatpush1.bf16.msra.mxu0 %v4314
        %4929 = vmatprep.subr.bf16.mxu0 %v4331
        %4930 = vmatpush1.bf16.msra.mxu0 %v4330
        %4931 = vmatprep.mubr.bf16.mxu0 %v1701
        %4932 = vmatmul.mubr.bf16.gmra.mrb[0].mxu0 %v1700
        %v4933 = vpop.f32.mrb[0].mxu0
        %v4934 = vadd.f32 %v4893, %v4933
        %v4935 = vpop.f32.mrb[0].mxu0
        %v4936 = vadd.f32 %v4895, %v4935
        %v4937 = vpop.f32.mrb[0].mxu0
        %v4938 = vpop.f32.mrb[0].mxu0
        %4939 = vdwg.mxu0
        %4940 = vmatprep.subr.bf16.mxu0 %v3837
        %4941 = vmatpush1.bf16.msra.mxu0 %v3836
        %4942 = vmatprep.subr.bf16.mxu0 %v3853
        %4943 = vmatpush1.bf16.msra.mxu0 %v3852
        %4944 = vmatprep.subr.bf16.mxu0 %v3869
        %4945 = vmatpush1.bf16.msra.mxu0 %v3868
        %4946 = vmatprep.subr.bf16.mxu0 %v3885
        %4947 = vmatpush1.bf16.msra.mxu0 %v3884
        %4948 = vmatprep.subr.bf16.mxu0 %v3901
        %4949 = vmatpush1.bf16.msra.mxu0 %v3900
        %4950 = vmatprep.subr.bf16.mxu0 %v3917
        %4951 = vmatpush1.bf16.msra.mxu0 %v3916
        %4952 = vmatprep.subr.bf16.mxu0 %v3933
        %4953 = vmatpush1.bf16.msra.mxu0 %v3932
        %4954 = vmatprep.subr.bf16.mxu0 %v3949
        %4955 = vmatpush1.bf16.msra.mxu0 %v3948
        %4956 = vmatprep.subr.bf16.mxu0 %v3965
        %4957 = vmatpush1.bf16.msra.mxu0 %v3964
        %4958 = vmatprep.subr.bf16.mxu0 %v3981
        %4959 = vmatpush1.bf16.msra.mxu0 %v3980
        %4960 = vmatprep.subr.bf16.mxu0 %v3997
        %4961 = vmatpush1.bf16.msra.mxu0 %v3996
        %4962 = vmatprep.subr.bf16.mxu0 %v4013
        %4963 = vmatpush1.bf16.msra.mxu0 %v4012
        %4964 = vmatprep.subr.bf16.mxu0 %v4029
        %4965 = vmatpush1.bf16.msra.mxu0 %v4028
        %4966 = vmatprep.subr.bf16.mxu0 %v4045
        %4967 = vmatpush1.bf16.msra.mxu0 %v4044
        %4968 = vmatprep.subr.bf16.mxu0 %v4061
        %4969 = vmatpush1.bf16.msra.mxu0 %v4060
        %4970 = vmatprep.subr.bf16.mxu0 %v4077
        %4971 = vmatpush1.bf16.msra.mxu0 %v4076
        %4972 = vmatprep.mubr.bf16.mxu0 %v1699
        %4973 = vmatmul.mubr.bf16.gmra.mrb[0].mxu0 %v1698
        %v4974 = vpop.f32.mrb[0].mxu0
        %v4975 = vadd.f32 %v2229, %v4974
        %v4976 = vpop.f32.mrb[0].mxu0
        %v4977 = vadd.f32 %v2233, %v4976
        %v4978 = vpop.f32.mrb[0].mxu0
        %v4979 = vpop.f32.mrb[0].mxu0
        %4980 = vdwg.mxu0
        %4981 = vmatprep.subr.bf16.mxu0 %v4093
        %4982 = vmatpush1.bf16.msra.mxu0 %v4092
        %4983 = vmatprep.subr.bf16.mxu0 %v4109
        %4984 = vmatpush1.bf16.msra.mxu0 %v4108
        %4985 = vmatprep.subr.bf16.mxu0 %v4125
        %4986 = vmatpush1.bf16.msra.mxu0 %v4124
        %4987 = vmatprep.subr.bf16.mxu0 %v4141
        %4988 = vmatpush1.bf16.msra.mxu0 %v4140
        %4989 = vmatprep.subr.bf16.mxu0 %v4157
        %4990 = vmatpush1.bf16.msra.mxu0 %v4156
        %4991 = vmatprep.subr.bf16.mxu0 %v4173
        %4992 = vmatpush1.bf16.msra.mxu0 %v4172
        %4993 = vmatprep.subr.bf16.mxu0 %v4189
        %4994 = vmatpush1.bf16.msra.mxu0 %v4188
        %4995 = vmatprep.subr.bf16.mxu0 %v4205
        %4996 = vmatpush1.bf16.msra.mxu0 %v4204
        %4997 = vmatprep.subr.bf16.mxu0 %v4221
        %4998 = vmatpush1.bf16.msra.mxu0 %v4220
        %4999 = vmatprep.subr.bf16.mxu0 %v4237
        %5000 = vmatpush1.bf16.msra.mxu0 %v4236
        %5001 = vmatprep.subr.bf16.mxu0 %v4253
        %5002 = vmatpush1.bf16.msra.mxu0 %v4252
        %5003 = vmatprep.subr.bf16.mxu0 %v4269
        %5004 = vmatpush1.bf16.msra.mxu0 %v4268
        %5005 = vmatprep.subr.bf16.mxu0 %v4285
        %5006 = vmatpush1.bf16.msra.mxu0 %v4284
        %5007 = vmatprep.subr.bf16.mxu0 %v4301
        %5008 = vmatpush1.bf16.msra.mxu0 %v4300
        %5009 = vmatprep.subr.bf16.mxu0 %v4317
        %5010 = vmatpush1.bf16.msra.mxu0 %v4316
        %5011 = vmatprep.subr.bf16.mxu0 %v4333
        %5012 = vmatpush1.bf16.msra.mxu0 %v4332
        %5013 = vmatprep.mubr.bf16.mxu0 %v1701
        %5014 = vmatmul.mubr.bf16.gmra.mrb[0].mxu0 %v1700
        %v5015 = vpop.f32.mrb[0].mxu0
        %v5016 = vadd.f32 %v4975, %v5015
        %v5017 = vpop.f32.mrb[0].mxu0
        %v5018 = vadd.f32 %v4977, %v5017
        %v5019 = vpop.f32.mrb[0].mxu0
        %v5020 = vpop.f32.mrb[0].mxu0
        %5021 = vdwg.mxu0
        %5022 = vmatprep.subr.bf16.mxu0 %v3839
        %5023 = vmatpush1.bf16.msra.mxu0 %v3838
        %5024 = vmatprep.subr.bf16.mxu0 %v3855
        %5025 = vmatpush1.bf16.msra.mxu0 %v3854
        %5026 = vmatprep.subr.bf16.mxu0 %v3871
        %5027 = vmatpush1.bf16.msra.mxu0 %v3870
        %5028 = vmatprep.subr.bf16.mxu0 %v3887
        %5029 = vmatpush1.bf16.msra.mxu0 %v3886
        %5030 = vmatprep.subr.bf16.mxu0 %v3903
        %5031 = vmatpush1.bf16.msra.mxu0 %v3902
        %5032 = vmatprep.subr.bf16.mxu0 %v3919
        %5033 = vmatpush1.bf16.msra.mxu0 %v3918
        %5034 = vmatprep.subr.bf16.mxu0 %v3935
        %5035 = vmatpush1.bf16.msra.mxu0 %v3934
        %5036 = vmatprep.subr.bf16.mxu0 %v3951
        %5037 = vmatpush1.bf16.msra.mxu0 %v3950
        %5038 = vmatprep.subr.bf16.mxu0 %v3967
        %5039 = vmatpush1.bf16.msra.mxu0 %v3966
        %5040 = vmatprep.subr.bf16.mxu0 %v3983
        %5041 = vmatpush1.bf16.msra.mxu0 %v3982
        %5042 = vmatprep.subr.bf16.mxu0 %v3999
        %5043 = vmatpush1.bf16.msra.mxu0 %v3998
        %5044 = vmatprep.subr.bf16.mxu0 %v4015
        %5045 = vmatpush1.bf16.msra.mxu0 %v4014
        %5046 = vmatprep.subr.bf16.mxu0 %v4031
        %5047 = vmatpush1.bf16.msra.mxu0 %v4030
        %5048 = vmatprep.subr.bf16.mxu0 %v4047
        %5049 = vmatpush1.bf16.msra.mxu0 %v4046
        %5050 = vmatprep.subr.bf16.mxu0 %v4063
        %5051 = vmatpush1.bf16.msra.mxu0 %v4062
        %5052 = vmatprep.subr.bf16.mxu0 %v4079
        %5053 = vmatpush1.bf16.msra.mxu0 %v4078
        %5054 = vmatprep.mubr.bf16.mxu0 %v1699
        %5055 = vmatmul.mubr.bf16.gmra.mrb[0].mxu0 %v1698
        %v5056 = vpop.f32.mrb[0].mxu0
        %v5057 = vadd.f32 %v2237, %v5056
        %v5058 = vpop.f32.mrb[0].mxu0
        %v5059 = vadd.f32 %v2241, %v5058
        %v5060 = vpop.f32.mrb[0].mxu0
        %v5061 = vpop.f32.mrb[0].mxu0
        %5062 = vdwg.mxu0
        %5063 = vmatprep.subr.bf16.mxu0 %v4095
        %5064 = vmatpush1.bf16.msra.mxu0 %v4094
        %5065 = vmatprep.subr.bf16.mxu0 %v4111
        %5066 = vmatpush1.bf16.msra.mxu0 %v4110
        %5067 = vmatprep.subr.bf16.mxu0 %v4127
        %5068 = vmatpush1.bf16.msra.mxu0 %v4126
        %5069 = vmatprep.subr.bf16.mxu0 %v4143
        %5070 = vmatpush1.bf16.msra.mxu0 %v4142
        %5071 = vmatprep.subr.bf16.mxu0 %v4159
        %5072 = vmatpush1.bf16.msra.mxu0 %v4158
        %5073 = vmatprep.subr.bf16.mxu0 %v4175
        %5074 = vmatpush1.bf16.msra.mxu0 %v4174
        %5075 = vmatprep.subr.bf16.mxu0 %v4191
        %5076 = vmatpush1.bf16.msra.mxu0 %v4190
        %5077 = vmatprep.subr.bf16.mxu0 %v4207
        %5078 = vmatpush1.bf16.msra.mxu0 %v4206
        %5079 = vmatprep.subr.bf16.mxu0 %v4223
        %5080 = vmatpush1.bf16.msra.mxu0 %v4222
        %5081 = vmatprep.subr.bf16.mxu0 %v4239
        %5082 = vmatpush1.bf16.msra.mxu0 %v4238
        %5083 = vmatprep.subr.bf16.mxu0 %v4255
        %5084 = vmatpush1.bf16.msra.mxu0 %v4254
        %5085 = vmatprep.subr.bf16.mxu0 %v4271
        %5086 = vmatpush1.bf16.msra.mxu0 %v4270
        %5087 = vmatprep.subr.bf16.mxu0 %v4287
        %5088 = vmatpush1.bf16.msra.mxu0 %v4286
        %5089 = vmatprep.subr.bf16.mxu0 %v4303
        %5090 = vmatpush1.bf16.msra.mxu0 %v4302
        %5091 = vmatprep.subr.bf16.mxu0 %v4319
        %5092 = vmatpush1.bf16.msra.mxu0 %v4318
        %5093 = vmatprep.subr.bf16.mxu0 %v4335
        %5094 = vmatpush1.bf16.msra.mxu0 %v4334
        %5095 = vmatprep.mubr.bf16.mxu0 %v1701
        %5096 = vmatmul.mubr.bf16.gmra.mrb[0].mxu0 %v1700
        %v5097 = vpop.f32.mrb[0].mxu0
        %v5098 = vadd.f32 %v5057, %v5097
        %v5099 = vpop.f32.mrb[0].mxu0
        %v5100 = vadd.f32 %v5059, %v5099
        %v5101 = vpop.f32.mrb[0].mxu0
        %v5102 = vpop.f32.mrb[0].mxu0
        %5103 = vdwg.mxu0
        %5104 = vmatprep.subr.bf16.mxu0 %v3841
        %5105 = vmatpush1.bf16.msra.mxu0 %v3840
        %5106 = vmatprep.subr.bf16.mxu0 %v3857
        %5107 = vmatpush1.bf16.msra.mxu0 %v3856
        %5108 = vmatprep.subr.bf16.mxu0 %v3873
        %5109 = vmatpush1.bf16.msra.mxu0 %v3872
        %5110 = vmatprep.subr.bf16.mxu0 %v3889
        %5111 = vmatpush1.bf16.msra.mxu0 %v3888
        %5112 = vmatprep.subr.bf16.mxu0 %v3905
        %5113 = vmatpush1.bf16.msra.mxu0 %v3904
        %5114 = vmatprep.subr.bf16.mxu0 %v3921
        %5115 = vmatpush1.bf16.msra.mxu0 %v3920
        %5116 = vmatprep.subr.bf16.mxu0 %v3937
        %5117 = vmatpush1.bf16.msra.mxu0 %v3936
        %5118 = vmatprep.subr.bf16.mxu0 %v3953
        %5119 = vmatpush1.bf16.msra.mxu0 %v3952
        %5120 = vmatprep.subr.bf16.mxu0 %v3969
        %5121 = vmatpush1.bf16.msra.mxu0 %v3968
        %5122 = vmatprep.subr.bf16.mxu0 %v3985
        %5123 = vmatpush1.bf16.msra.mxu0 %v3984
        %5124 = vmatprep.subr.bf16.mxu0 %v4001
        %5125 = vmatpush1.bf16.msra.mxu0 %v4000
        %5126 = vmatprep.subr.bf16.mxu0 %v4017
        %5127 = vmatpush1.bf16.msra.mxu0 %v4016
        %5128 = vmatprep.subr.bf16.mxu0 %v4033
        %5129 = vmatpush1.bf16.msra.mxu0 %v4032
        %5130 = vmatprep.subr.bf16.mxu0 %v4049
        %5131 = vmatpush1.bf16.msra.mxu0 %v4048
        %5132 = vmatprep.subr.bf16.mxu0 %v4065
        %5133 = vmatpush1.bf16.msra.mxu0 %v4064
        %5134 = vmatprep.subr.bf16.mxu0 %v4081
        %5135 = vmatpush1.bf16.msra.mxu0 %v4080
        %5136 = vmatprep.mubr.bf16.mxu0 %v1699
        %5137 = vmatmul.mubr.bf16.gmra.mrb[0].mxu0 %v1698
        %v5138 = vpop.f32.mrb[0].mxu0
        %v5139 = vadd.f32 %v2245, %v5138
        %v5140 = vpop.f32.mrb[0].mxu0
        %v5141 = vadd.f32 %v2249, %v5140
        %v5142 = vpop.f32.mrb[0].mxu0
        %v5143 = vpop.f32.mrb[0].mxu0
        %5144 = vdwg.mxu0
        %5145 = vmatprep.subr.bf16.mxu0 %v4097
        %5146 = vmatpush1.bf16.msra.mxu0 %v4096
        %5147 = vmatprep.subr.bf16.mxu0 %v4113
        %5148 = vmatpush1.bf16.msra.mxu0 %v4112
        %5149 = vmatprep.subr.bf16.mxu0 %v4129
        %5150 = vmatpush1.bf16.msra.mxu0 %v4128
        %5151 = vmatprep.subr.bf16.mxu0 %v4145
        %5152 = vmatpush1.bf16.msra.mxu0 %v4144
        %5153 = vmatprep.subr.bf16.mxu0 %v4161
        %5154 = vmatpush1.bf16.msra.mxu0 %v4160
        %5155 = vmatprep.subr.bf16.mxu0 %v4177
        %5156 = vmatpush1.bf16.msra.mxu0 %v4176
        %5157 = vmatprep.subr.bf16.mxu0 %v4193
        %5158 = vmatpush1.bf16.msra.mxu0 %v4192
        %5159 = vmatprep.subr.bf16.mxu0 %v4209
        %5160 = vmatpush1.bf16.msra.mxu0 %v4208
        %5161 = vmatprep.subr.bf16.mxu0 %v4225
        %5162 = vmatpush1.bf16.msra.mxu0 %v4224
        %5163 = vmatprep.subr.bf16.mxu0 %v4241
        %5164 = vmatpush1.bf16.msra.mxu0 %v4240
        %5165 = vmatprep.subr.bf16.mxu0 %v4257
        %5166 = vmatpush1.bf16.msra.mxu0 %v4256
        %5167 = vmatprep.subr.bf16.mxu0 %v4273
        %5168 = vmatpush1.bf16.msra.mxu0 %v4272
        %5169 = vmatprep.subr.bf16.mxu0 %v4289
        %5170 = vmatpush1.bf16.msra.mxu0 %v4288
        %5171 = vmatprep.subr.bf16.mxu0 %v4305
        %5172 = vmatpush1.bf16.msra.mxu0 %v4304
        %5173 = vmatprep.subr.bf16.mxu0 %v4321
        %5174 = vmatpush1.bf16.msra.mxu0 %v4320
        %5175 = vmatprep.subr.bf16.mxu0 %v4337
        %5176 = vmatpush1.bf16.msra.mxu0 %v4336
        %5177 = vmatprep.mubr.bf16.mxu0 %v1701
        %5178 = vmatmul.mubr.bf16.gmra.mrb[0].mxu0 %v1700
        %v5179 = vpop.f32.mrb[0].mxu0
        %v5180 = vadd.f32 %v5139, %v5179
        %v5181 = vpop.f32.mrb[0].mxu0
        %v5182 = vadd.f32 %v5141, %v5181
        %v5183 = vpop.f32.mrb[0].mxu0
        %v5184 = vpop.f32.mrb[0].mxu0
        %5185 = vdwg.mxu0
        %5186 = vmatprep.subr.bf16.mxu0 %v3843
        %5187 = vmatpush1.bf16.msra.mxu0 %v3842
        %5188 = vmatprep.subr.bf16.mxu0 %v3859
        %5189 = vmatpush1.bf16.msra.mxu0 %v3858
        %5190 = vmatprep.subr.bf16.mxu0 %v3875
        %5191 = vmatpush1.bf16.msra.mxu0 %v3874
        %5192 = vmatprep.subr.bf16.mxu0 %v3891
        %5193 = vmatpush1.bf16.msra.mxu0 %v3890
        %5194 = vmatprep.subr.bf16.mxu0 %v3907
        %5195 = vmatpush1.bf16.msra.mxu0 %v3906
        %5196 = vmatprep.subr.bf16.mxu0 %v3923
        %5197 = vmatpush1.bf16.msra.mxu0 %v3922
        %5198 = vmatprep.subr.bf16.mxu0 %v3939
        %5199 = vmatpush1.bf16.msra.mxu0 %v3938
        %5200 = vmatprep.subr.bf16.mxu0 %v3955
        %5201 = vmatpush1.bf16.msra.mxu0 %v3954
        %5202 = vmatprep.subr.bf16.mxu0 %v3971
        %5203 = vmatpush1.bf16.msra.mxu0 %v3970
        %5204 = vmatprep.subr.bf16.mxu0 %v3987
        %5205 = vmatpush1.bf16.msra.mxu0 %v3986
        %5206 = vmatprep.subr.bf16.mxu0 %v4003
        %5207 = vmatpush1.bf16.msra.mxu0 %v4002
        %5208 = vmatprep.subr.bf16.mxu0 %v4019
        %5209 = vmatpush1.bf16.msra.mxu0 %v4018
        %5210 = vmatprep.subr.bf16.mxu0 %v4035
        %5211 = vmatpush1.bf16.msra.mxu0 %v4034
        %5212 = vmatprep.subr.bf16.mxu0 %v4051
        %5213 = vmatpush1.bf16.msra.mxu0 %v4050
        %5214 = vmatprep.subr.bf16.mxu0 %v4067
        %5215 = vmatpush1.bf16.msra.mxu0 %v4066
        %5216 = vmatprep.subr.bf16.mxu0 %v4083
        %5217 = vmatpush1.bf16.msra.mxu0 %v4082
        %5218 = vmatprep.mubr.bf16.mxu0 %v1699
        %5219 = vmatmul.mubr.bf16.gmra.mrb[0].mxu0 %v1698
        %v5220 = vpop.f32.mrb[0].mxu0
        %v5221 = vadd.f32 %v2253, %v5220
        %v5222 = vpop.f32.mrb[0].mxu0
        %v5223 = vadd.f32 %v2257, %v5222
        %v5224 = vpop.f32.mrb[0].mxu0
        %v5225 = vpop.f32.mrb[0].mxu0
        %5226 = vdwg.mxu0
        %5227 = vmatprep.subr.bf16.mxu0 %v4099
        %5228 = vmatpush1.bf16.msra.mxu0 %v4098
        %5229 = vmatprep.subr.bf16.mxu0 %v4115
        %5230 = vmatpush1.bf16.msra.mxu0 %v4114
        %5231 = vmatprep.subr.bf16.mxu0 %v4131
        %5232 = vmatpush1.bf16.msra.mxu0 %v4130
        %5233 = vmatprep.subr.bf16.mxu0 %v4147
        %5234 = vmatpush1.bf16.msra.mxu0 %v4146
        %5235 = vmatprep.subr.bf16.mxu0 %v4163
        %5236 = vmatpush1.bf16.msra.mxu0 %v4162
        %5237 = vmatprep.subr.bf16.mxu0 %v4179
        %5238 = vmatpush1.bf16.msra.mxu0 %v4178
        %5239 = vmatprep.subr.bf16.mxu0 %v4195
        %5240 = vmatpush1.bf16.msra.mxu0 %v4194
        %5241 = vmatprep.subr.bf16.mxu0 %v4211
        %5242 = vmatpush1.bf16.msra.mxu0 %v4210
        %5243 = vmatprep.subr.bf16.mxu0 %v4227
        %5244 = vmatpush1.bf16.msra.mxu0 %v4226
        %5245 = vmatprep.subr.bf16.mxu0 %v4243
        %5246 = vmatpush1.bf16.msra.mxu0 %v4242
        %5247 = vmatprep.subr.bf16.mxu0 %v4259
        %5248 = vmatpush1.bf16.msra.mxu0 %v4258
        %5249 = vmatprep.subr.bf16.mxu0 %v4275
        %5250 = vmatpush1.bf16.msra.mxu0 %v4274
        %5251 = vmatprep.subr.bf16.mxu0 %v4291
        %5252 = vmatpush1.bf16.msra.mxu0 %v4290
        %5253 = vmatprep.subr.bf16.mxu0 %v4307
        %5254 = vmatpush1.bf16.msra.mxu0 %v4306
        %5255 = vmatprep.subr.bf16.mxu0 %v4323
        %5256 = vmatpush1.bf16.msra.mxu0 %v4322
        %5257 = vmatprep.subr.bf16.mxu0 %v4339
        %5258 = vmatpush1.bf16.msra.mxu0 %v4338
        %5259 = vmatprep.mubr.bf16.mxu0 %v1701
        %5260 = vmatmul.mubr.bf16.gmra.mrb[0].mxu0 %v1700
        %v5261 = vpop.f32.mrb[0].mxu0
        %v5262 = vadd.f32 %v5221, %v5261
        %v5263 = vpop.f32.mrb[0].mxu0
        %v5264 = vadd.f32 %v5223, %v5263
        %v5265 = vpop.f32.mrb[0].mxu0
        %v5266 = vpop.f32.mrb[0].mxu0
        %5267 = vdwg.mxu0
        %5268 = vmatprep.subr.bf16.mxu0 %v3845
        %5269 = vmatpush1.bf16.msra.mxu0 %v3844
        %5270 = vmatprep.subr.bf16.mxu0 %v3861
        %5271 = vmatpush1.bf16.msra.mxu0 %v3860
        %5272 = vmatprep.subr.bf16.mxu0 %v3877
        %5273 = vmatpush1.bf16.msra.mxu0 %v3876
        %5274 = vmatprep.subr.bf16.mxu0 %v3893
        %5275 = vmatpush1.bf16.msra.mxu0 %v3892
        %5276 = vmatprep.subr.bf16.mxu0 %v3909
        %5277 = vmatpush1.bf16.msra.mxu0 %v3908
        %5278 = vmatprep.subr.bf16.mxu0 %v3925
        %5279 = vmatpush1.bf16.msra.mxu0 %v3924
        %5280 = vmatprep.subr.bf16.mxu0 %v3941
        %5281 = vmatpush1.bf16.msra.mxu0 %v3940
        %5282 = vmatprep.subr.bf16.mxu0 %v3957
        %5283 = vmatpush1.bf16.msra.mxu0 %v3956
        %5284 = vmatprep.subr.bf16.mxu0 %v3973
        %5285 = vmatpush1.bf16.msra.mxu0 %v3972
        %5286 = vmatprep.subr.bf16.mxu0 %v3989
        %5287 = vmatpush1.bf16.msra.mxu0 %v3988
        %5288 = vmatprep.subr.bf16.mxu0 %v4005
        %5289 = vmatpush1.bf16.msra.mxu0 %v4004
        %5290 = vmatprep.subr.bf16.mxu0 %v4021
        %5291 = vmatpush1.bf16.msra.mxu0 %v4020
        %5292 = vmatprep.subr.bf16.mxu0 %v4037
        %5293 = vmatpush1.bf16.msra.mxu0 %v4036
        %5294 = vmatprep.subr.bf16.mxu0 %v4053
        %5295 = vmatpush1.bf16.msra.mxu0 %v4052
        %5296 = vmatprep.subr.bf16.mxu0 %v4069
        %5297 = vmatpush1.bf16.msra.mxu0 %v4068
        %5298 = vmatprep.subr.bf16.mxu0 %v4085
        %5299 = vmatpush1.bf16.msra.mxu0 %v4084
        %5300 = vmatprep.mubr.bf16.mxu0 %v1699
        %5301 = vmatmul.mubr.bf16.gmra.mrb[0].mxu0 %v1698
        %v5302 = vpop.f32.mrb[0].mxu0
        %v5303 = vadd.f32 %v2261, %v5302
        %v5304 = vpop.f32.mrb[0].mxu0
        %v5305 = vadd.f32 %v2265, %v5304
        %v5306 = vpop.f32.mrb[0].mxu0
        %v5307 = vpop.f32.mrb[0].mxu0
        %5308 = vdwg.mxu0
        %5309 = vmatprep.subr.bf16.mxu0 %v4101
        %5310 = vmatpush1.bf16.msra.mxu0 %v4100
        %5311 = vmatprep.subr.bf16.mxu0 %v4117
        %5312 = vmatpush1.bf16.msra.mxu0 %v4116
        %5313 = vmatprep.subr.bf16.mxu0 %v4133
        %5314 = vmatpush1.bf16.msra.mxu0 %v4132
        %5315 = vmatprep.subr.bf16.mxu0 %v4149
        %5316 = vmatpush1.bf16.msra.mxu0 %v4148
        %5317 = vmatprep.subr.bf16.mxu0 %v4165
        %5318 = vmatpush1.bf16.msra.mxu0 %v4164
        %5319 = vmatprep.subr.bf16.mxu0 %v4181
        %5320 = vmatpush1.bf16.msra.mxu0 %v4180
        %5321 = vmatprep.subr.bf16.mxu0 %v4197
        %5322 = vmatpush1.bf16.msra.mxu0 %v4196
        %5323 = vmatprep.subr.bf16.mxu0 %v4213
        %5324 = vmatpush1.bf16.msra.mxu0 %v4212
        %5325 = vmatprep.subr.bf16.mxu0 %v4229
        %5326 = vmatpush1.bf16.msra.mxu0 %v4228
        %5327 = vmatprep.subr.bf16.mxu0 %v4245
        %5328 = vmatpush1.bf16.msra.mxu0 %v4244
        %5329 = vmatprep.subr.bf16.mxu0 %v4261
        %5330 = vmatpush1.bf16.msra.mxu0 %v4260
        %5331 = vmatprep.subr.bf16.mxu0 %v4277
        %5332 = vmatpush1.bf16.msra.mxu0 %v4276
        %5333 = vmatprep.subr.bf16.mxu0 %v4293
        %5334 = vmatpush1.bf16.msra.mxu0 %v4292
        %5335 = vmatprep.subr.bf16.mxu0 %v4309
        %5336 = vmatpush1.bf16.msra.mxu0 %v4308
        %5337 = vmatprep.subr.bf16.mxu0 %v4325
        %5338 = vmatpush1.bf16.msra.mxu0 %v4324
        %5339 = vmatprep.subr.bf16.mxu0 %v4341
        %5340 = vmatpush1.bf16.msra.mxu0 %v4340
        %5341 = vmatprep.mubr.bf16.mxu0 %v1701
        %5342 = vmatmul.mubr.bf16.gmra.mrb[0].mxu0 %v1700
        %v5343 = vpop.f32.mrb[0].mxu0
        %v5344 = vadd.f32 %v5303, %v5343
        %v5345 = vpop.f32.mrb[0].mxu0
        %v5346 = vadd.f32 %v5305, %v5345
        %v5347 = vpop.f32.mrb[0].mxu0
        %v5348 = vpop.f32.mrb[0].mxu0
        %5349 = vdwg.mxu0
        %5350 = vmatprep.subr.bf16.mxu0 %v3847
        %5351 = vmatpush1.bf16.msra.mxu0 %v3846
        %5352 = vmatprep.subr.bf16.mxu0 %v3863
        %5353 = vmatpush1.bf16.msra.mxu0 %v3862
        %5354 = vmatprep.subr.bf16.mxu0 %v3879
        %5355 = vmatpush1.bf16.msra.mxu0 %v3878
        %5356 = vmatprep.subr.bf16.mxu0 %v3895
        %5357 = vmatpush1.bf16.msra.mxu0 %v3894
        %5358 = vmatprep.subr.bf16.mxu0 %v3911
        %5359 = vmatpush1.bf16.msra.mxu0 %v3910
        %5360 = vmatprep.subr.bf16.mxu0 %v3927
        %5361 = vmatpush1.bf16.msra.mxu0 %v3926
        %5362 = vmatprep.subr.bf16.mxu0 %v3943
        %5363 = vmatpush1.bf16.msra.mxu0 %v3942
        %5364 = vmatprep.subr.bf16.mxu0 %v3959
        %5365 = vmatpush1.bf16.msra.mxu0 %v3958
        %5366 = vmatprep.subr.bf16.mxu0 %v3975
        %5367 = vmatpush1.bf16.msra.mxu0 %v3974
        %5368 = vmatprep.subr.bf16.mxu0 %v3991
        %5369 = vmatpush1.bf16.msra.mxu0 %v3990
        %5370 = vmatprep.subr.bf16.mxu0 %v4007
        %5371 = vmatpush1.bf16.msra.mxu0 %v4006
        %5372 = vmatprep.subr.bf16.mxu0 %v4023
        %5373 = vmatpush1.bf16.msra.mxu0 %v4022
        %5374 = vmatprep.subr.bf16.mxu0 %v4039
        %5375 = vmatpush1.bf16.msra.mxu0 %v4038
        %5376 = vmatprep.subr.bf16.mxu0 %v4055
        %5377 = vmatpush1.bf16.msra.mxu0 %v4054
        %5378 = vmatprep.subr.bf16.mxu0 %v4071
        %5379 = vmatpush1.bf16.msra.mxu0 %v4070
        %5380 = vmatprep.subr.bf16.mxu0 %v4087
        %5381 = vmatpush1.bf16.msra.mxu0 %v4086
        %5382 = vmatprep.mubr.bf16.mxu0 %v1699
        %5383 = vmatmul.mubr.bf16.gmra.mrb[0].mxu0 %v1698
        %v5384 = vpop.f32.mrb[0].mxu0
        %v5385 = vadd.f32 %v2269, %v5384
        %v5386 = vpop.f32.mrb[0].mxu0
        %v5387 = vadd.f32 %v2273, %v5386
        %v5388 = vpop.f32.mrb[0].mxu0
        %v5389 = vpop.f32.mrb[0].mxu0
        %5390 = vdwg.mxu0
        %5391 = vmatprep.subr.bf16.mxu0 %v4103
        %5392 = vmatpush1.bf16.msra.mxu0 %v4102
        %5393 = vmatprep.subr.bf16.mxu0 %v4119
        %5394 = vmatpush1.bf16.msra.mxu0 %v4118
        %5395 = vmatprep.subr.bf16.mxu0 %v4135
        %5396 = vmatpush1.bf16.msra.mxu0 %v4134
        %5397 = vmatprep.subr.bf16.mxu0 %v4151
        %5398 = vmatpush1.bf16.msra.mxu0 %v4150
        %5399 = vmatprep.subr.bf16.mxu0 %v4167
        %5400 = vmatpush1.bf16.msra.mxu0 %v4166
        %5401 = vmatprep.subr.bf16.mxu0 %v4183
        %5402 = vmatpush1.bf16.msra.mxu0 %v4182
        %5403 = vmatprep.subr.bf16.mxu0 %v4199
        %5404 = vmatpush1.bf16.msra.mxu0 %v4198
        %5405 = vmatprep.subr.bf16.mxu0 %v4215
        %5406 = vmatpush1.bf16.msra.mxu0 %v4214
        %5407 = vmatprep.subr.bf16.mxu0 %v4231
        %5408 = vmatpush1.bf16.msra.mxu0 %v4230
        %5409 = vmatprep.subr.bf16.mxu0 %v4247
        %5410 = vmatpush1.bf16.msra.mxu0 %v4246
        %5411 = vmatprep.subr.bf16.mxu0 %v4263
        %5412 = vmatpush1.bf16.msra.mxu0 %v4262
        %5413 = vmatprep.subr.bf16.mxu0 %v4279
        %5414 = vmatpush1.bf16.msra.mxu0 %v4278
        %5415 = vmatprep.subr.bf16.mxu0 %v4295
        %5416 = vmatpush1.bf16.msra.mxu0 %v4294
        %5417 = vmatprep.subr.bf16.mxu0 %v4311
        %5418 = vmatpush1.bf16.msra.mxu0 %v4310
        %5419 = vmatprep.subr.bf16.mxu0 %v4327
        %5420 = vmatpush1.bf16.msra.mxu0 %v4326
        %5421 = vmatprep.subr.bf16.mxu0 %v4343
        %5422 = vmatpush1.bf16.msra.mxu0 %v4342
        %5423 = vmatprep.mubr.bf16.mxu0 %v1701
        %5424 = vmatmul.mubr.bf16.gmra.mrb[0].mxu0 %v1700
        %v5425 = vpop.f32.mrb[0].mxu0
        %v5426 = vadd.f32 %v5385, %v5425
        %v5427 = vpop.f32.mrb[0].mxu0
        %v5428 = vadd.f32 %v5387, %v5427
        %v5429 = vpop.f32.mrb[0].mxu0
        %v5430 = vpop.f32.mrb[0].mxu0
        %5431 = vdwg.mxu0
        %5432 = vmatprep.subr.bf16.mxu0 %v3849
        %5433 = vmatpush1.bf16.msra.mxu0 %v3848
        %5434 = vmatprep.subr.bf16.mxu0 %v3865
        %5435 = vmatpush1.bf16.msra.mxu0 %v3864
        %5436 = vmatprep.subr.bf16.mxu0 %v3881
        %5437 = vmatpush1.bf16.msra.mxu0 %v3880
        %5438 = vmatprep.subr.bf16.mxu0 %v3897
        %5439 = vmatpush1.bf16.msra.mxu0 %v3896
        %5440 = vmatprep.subr.bf16.mxu0 %v3913
        %5441 = vmatpush1.bf16.msra.mxu0 %v3912
        %5442 = vmatprep.subr.bf16.mxu0 %v3929
        %5443 = vmatpush1.bf16.msra.mxu0 %v3928
        %5444 = vmatprep.subr.bf16.mxu0 %v3945
        %5445 = vmatpush1.bf16.msra.mxu0 %v3944
        %5446 = vmatprep.subr.bf16.mxu0 %v3961
        %5447 = vmatpush1.bf16.msra.mxu0 %v3960
        %5448 = vmatprep.subr.bf16.mxu0 %v3977
        %5449 = vmatpush1.bf16.msra.mxu0 %v3976
        %5450 = vmatprep.subr.bf16.mxu0 %v3993
        %5451 = vmatpush1.bf16.msra.mxu0 %v3992
        %5452 = vmatprep.subr.bf16.mxu0 %v4009
        %5453 = vmatpush1.bf16.msra.mxu0 %v4008
        %5454 = vmatprep.subr.bf16.mxu0 %v4025
        %5455 = vmatpush1.bf16.msra.mxu0 %v4024
        %5456 = vmatprep.subr.bf16.mxu0 %v4041
        %5457 = vmatpush1.bf16.msra.mxu0 %v4040
        %5458 = vmatprep.subr.bf16.mxu0 %v4057
        %5459 = vmatpush1.bf16.msra.mxu0 %v4056
        %5460 = vmatprep.subr.bf16.mxu0 %v4073
        %5461 = vmatpush1.bf16.msra.mxu0 %v4072
        %5462 = vmatprep.subr.bf16.mxu0 %v4089
        %5463 = vmatpush1.bf16.msra.mxu0 %v4088
        %5464 = vmatprep.mubr.bf16.mxu0 %v1699
        %5465 = vmatmul.mubr.bf16.gmra.mrb[0].mxu0 %v1698
        %v5466 = vpop.f32.mrb[0].mxu0
        %v5467 = vadd.f32 %v2277, %v5466
        %v5468 = vpop.f32.mrb[0].mxu0
        %v5469 = vadd.f32 %v2281, %v5468
        %v5470 = vpop.f32.mrb[0].mxu0
        %v5471 = vpop.f32.mrb[0].mxu0
        %5472 = vdwg.mxu0
        %5473 = vmatprep.subr.bf16.mxu0 %v4105
        %5474 = vmatpush1.bf16.msra.mxu0 %v4104
        %5475 = vmatprep.subr.bf16.mxu0 %v4121
        %5476 = vmatpush1.bf16.msra.mxu0 %v4120
        %5477 = vmatprep.subr.bf16.mxu0 %v4137
        %5478 = vmatpush1.bf16.msra.mxu0 %v4136
        %5479 = vmatprep.subr.bf16.mxu0 %v4153
        %5480 = vmatpush1.bf16.msra.mxu0 %v4152
        %5481 = vmatprep.subr.bf16.mxu0 %v4169
        %5482 = vmatpush1.bf16.msra.mxu0 %v4168
        %5483 = vmatprep.subr.bf16.mxu0 %v4185
        %5484 = vmatpush1.bf16.msra.mxu0 %v4184
        %5485 = vmatprep.subr.bf16.mxu0 %v4201
        %5486 = vmatpush1.bf16.msra.mxu0 %v4200
        %5487 = vmatprep.subr.bf16.mxu0 %v4217
        %5488 = vmatpush1.bf16.msra.mxu0 %v4216
        %5489 = vmatprep.subr.bf16.mxu0 %v4233
        %5490 = vmatpush1.bf16.msra.mxu0 %v4232
        %5491 = vmatprep.subr.bf16.mxu0 %v4249
        %5492 = vmatpush1.bf16.msra.mxu0 %v4248
        %5493 = vmatprep.subr.bf16.mxu0 %v4265
        %5494 = vmatpush1.bf16.msra.mxu0 %v4264
        %5495 = vmatprep.subr.bf16.mxu0 %v4281
        %5496 = vmatpush1.bf16.msra.mxu0 %v4280
        %5497 = vmatprep.subr.bf16.mxu0 %v4297
        %5498 = vmatpush1.bf16.msra.mxu0 %v4296
        %5499 = vmatprep.subr.bf16.mxu0 %v4313
        %5500 = vmatpush1.bf16.msra.mxu0 %v4312
        %5501 = vmatprep.subr.bf16.mxu0 %v4329
        %5502 = vmatpush1.bf16.msra.mxu0 %v4328
        %5503 = vmatprep.subr.bf16.mxu0 %v4345
        %5504 = vmatpush1.bf16.msra.mxu0 %v4344
        %5505 = vmatprep.mubr.bf16.mxu0 %v1701
        %5506 = vmatmul.mubr.bf16.gmra.mrb[0].mxu0 %v1700
        %v5507 = vpop.f32.mrb[0].mxu0
        %v5508 = vadd.f32 %v5467, %v5507
        %v5509 = vpop.f32.mrb[0].mxu0
        %v5510 = vadd.f32 %v5469, %v5509
        %v5511 = vpop.f32.mrb[0].mxu0
        %v5512 = vpop.f32.mrb[0].mxu0
        %5513 = vdwg.mxu0
        %v5514 = vxor.u32 %v4934, 2147483648
        %v5515 = vxor.u32 %v4936, 2147483648
        %v5516 = vxor.u32 %v5016, 2147483648
        %v5517 = vxor.u32 %v5018, 2147483648
        %v5518 = vxor.u32 %v5098, 2147483648
        %v5519 = vxor.u32 %v5100, 2147483648
        %v5520 = vxor.u32 %v5180, 2147483648
        %v5521 = vxor.u32 %v5182, 2147483648
        %v5522 = vxor.u32 %v5262, 2147483648
        %v5523 = vxor.u32 %v5264, 2147483648
        %v5524 = vxor.u32 %v5344, 2147483648
        %v5525 = vxor.u32 %v5346, 2147483648
        %v5526 = vxor.u32 %v5426, 2147483648
        %v5527 = vxor.u32 %v5428, 2147483648
        %v5528 = vxor.u32 %v5508, 2147483648
        %v5529 = vxor.u32 %v5510, 2147483648
        %v5530 = vmul.f32 %v5514, 1.442695
        %v5531 = vpow.pop %v5530
        %v5532 = vmul.f32 %v5515, 1.442695
        %v5533 = vpow.pop %v5532
        %v5534 = vmul.f32 %v5516, 1.442695
        %v5535 = vpow.pop %v5534
        %v5536 = vmul.f32 %v5517, 1.442695
        %v5537 = vpow.pop %v5536
        %v5538 = vmul.f32 %v5518, 1.442695
        %v5539 = vpow.pop %v5538
        %v5540 = vmul.f32 %v5519, 1.442695
        %v5541 = vpow.pop %v5540
        %v5542 = vmul.f32 %v5520, 1.442695
        %v5543 = vpow.pop %v5542
        %v5544 = vmul.f32 %v5521, 1.442695
        %v5545 = vpow.pop %v5544
        %v5546 = vmul.f32 %v5522, 1.442695
        %v5547 = vpow.pop %v5546
        %v5548 = vmul.f32 %v5523, 1.442695
        %v5549 = vpow.pop %v5548
        %v5550 = vmul.f32 %v5524, 1.442695
        %v5551 = vpow.pop %v5550
        %v5552 = vmul.f32 %v5525, 1.442695
        %v5553 = vpow.pop %v5552
        %v5554 = vmul.f32 %v5526, 1.442695
        %v5555 = vpow.pop %v5554
        %v5556 = vmul.f32 %v5527, 1.442695
        %v5557 = vpow.pop %v5556
        %v5558 = vmul.f32 %v5528, 1.442695
        %v5559 = vpow.pop %v5558
        %v5560 = vmul.f32 %v5529, 1.442695
        %v5561 = vpow.pop %v5560
        %v5562 = vadd.f32 %v5531, 1.0
        %v5563 = vadd.f32 %v5533, 1.0
        %v5564 = vadd.f32 %v5535, 1.0
        %v5565 = vadd.f32 %v5537, 1.0
        %v5566 = vadd.f32 %v5539, 1.0
        %v5567 = vadd.f32 %v5541, 1.0
        %v5568 = vadd.f32 %v5543, 1.0
        %v5569 = vadd.f32 %v5545, 1.0
        %v5570 = vadd.f32 %v5547, 1.0
        %v5571 = vadd.f32 %v5549, 1.0
        %v5572 = vadd.f32 %v5551, 1.0
        %v5573 = vadd.f32 %v5553, 1.0
        %v5574 = vadd.f32 %v5555, 1.0
        %v5575 = vadd.f32 %v5557, 1.0
        %v5576 = vadd.f32 %v5559, 1.0
        %v5577 = vadd.f32 %v5561, 1.0
        %v5578 = vrcp.pop %v5562
        %v5579 = vmul.f32 1.0, %v5578
        %v5580 = vrcp.pop %v5563
        %v5581 = vmul.f32 1.0, %v5580
        %v5582 = vrcp.pop %v5564
        %v5583 = vmul.f32 1.0, %v5582
        %v5584 = vrcp.pop %v5565
        %v5585 = vmul.f32 1.0, %v5584
        %v5586 = vrcp.pop %v5566
        %v5587 = vmul.f32 1.0, %v5586
        %v5588 = vrcp.pop %v5567
        %v5589 = vmul.f32 1.0, %v5588
        %v5590 = vrcp.pop %v5568
        %v5591 = vmul.f32 1.0, %v5590
        %v5592 = vrcp.pop %v5569
        %v5593 = vmul.f32 1.0, %v5592
        %v5594 = vrcp.pop %v5570
        %v5595 = vmul.f32 1.0, %v5594
        %v5596 = vrcp.pop %v5571
        %v5597 = vmul.f32 1.0, %v5596
        %v5598 = vrcp.pop %v5572
        %v5599 = vmul.f32 1.0, %v5598
        %v5600 = vrcp.pop %v5573
        %v5601 = vmul.f32 1.0, %v5600
        %v5602 = vrcp.pop %v5574
        %v5603 = vmul.f32 1.0, %v5602
        %v5604 = vrcp.pop %v5575
        %v5605 = vmul.f32 1.0, %v5604
        %v5606 = vrcp.pop %v5576
        %v5607 = vmul.f32 1.0, %v5606
        %v5608 = vrcp.pop %v5577
        %v5609 = vmul.f32 1.0, %v5608
        %5610 = vst [vmem:[%s716] sm:$0xff] %v5579
        %5611 = vst [vmem:[%s716 + $0x8] sm:$0xff] %v5581
        %5612 = vst [vmem:[%s716 + $0x10] sm:$0xff] %v5583
        %5613 = vst [vmem:[%s716 + $0x18] sm:$0xff] %v5585
        %5614 = vst [vmem:[%s716 + $0x20] sm:$0xff] %v5587
        %5615 = vst [vmem:[%s716 + $0x28] sm:$0xff] %v5589
        %5616 = vst [vmem:[%s716 + $0x30] sm:$0xff] %v5591
        %5617 = vst [vmem:[%s716 + $0x38] sm:$0xff] %v5593
        %5618 = vst [vmem:[%s716 + $0x40] sm:$0xff] %v5595
        %5619 = vst [vmem:[%s716 + $0x48] sm:$0xff] %v5597
        %5620 = vst [vmem:[%s716 + $0x50] sm:$0xff] %v5599
        %5621 = vst [vmem:[%s716 + $0x58] sm:$0xff] %v5601
        %5622 = vst [vmem:[%s716 + $0x60] sm:$0xff] %v5603
        %5623 = vst [vmem:[%s716 + $0x68] sm:$0xff] %v5605
        %5624 = vst [vmem:[%s716 + $0x70] sm:$0xff] %v5607
        %5625 = vst [vmem:[%s716 + $0x78] sm:$0xff] %v5609
        %s5626 = sand.u32 %s372, 1
        %s5627 = scalar_lea.sflag [#allocation4], %s5626
        %s5628 = sand.u32 %s372, 1
        %s5629 = smul.addr %s5628, 128
        %s5630 = scalar_lea.vmem [#allocation26], %s5629
        // Predicated region
        $region141: #{tpu_custom_call.1} parent=79 // pred_check
          %p5631 = pneg %p382
        $region142: #{tpu_custom_call.1} parent=79 // pred_check_branch
          %5633 = sbr.rel (%p5631) target = $region144
        $region143: #{tpu_custom_call.1} parent=79 // pred_region
          %s5634 = smul.u32 16, %s39
          %s5636 = ssub.s32 2048, 2048
          %5637 = vsyncadd %s5627, %s5636
          %s5638 = smul.addr %s5634, 128
          %s5639 = scalar_lea.hbm %s15, %s5638
          %s5641 = sshll.u32 %s5630, 4
          %s5642 = int_to_ptr.vmem [resolvable:$true] %s5641
          %5644 = dma.vmem_to_hbm [thread:$0]  %s5642, 2048, %s5639, %s5627
        $region144: #{tpu_custom_call.1} parent=79 // pred_fallthru
          _
      $region80: #{tpu_custom_call.1} parent=5 // pred_fallthru
        _
      %p5645 = scmp.le.s32.totalorder 2, %s34
      // Predicated region
      $region145: #{tpu_custom_call.1} parent=5 // pred_check
        %p5646 = pneg %p5645
      $region146: #{tpu_custom_call.1} parent=5 // pred_check_branch
        %5648 = sbr.rel (%p5646) target = $region148
      $region147: #{tpu_custom_call.1} parent=5 // pred_region
        %s5649 = ssub.s32 %s34, 2
        // Predicated region
        $region149: #{tpu_custom_call.1} parent=147 // pred_check
          %p5650 = pneg %p388
        $region150: #{tpu_custom_call.1} parent=147 // pred_check_branch
          %5652 = sbr.rel (%p5650) target = $region152
        $region151: #{tpu_custom_call.1} parent=147 // pred_region
          %s5653 = sand.u32 %s373, 1
          %s5654 = scalar_lea.sflag [#allocation4], %s5653
          %s5655 = sand.u32 %s373, 1
          %s5656 = smul.addr %s5655, 128
          %s5657 = scalar_lea.vmem [#allocation26], %s5656
          %5658 = dma.done %s5654, 2048
        $region152: #{tpu_custom_call.1} parent=147 // pred_fallthru
          _
      $region148: #{tpu_custom_call.1} parent=5 // pred_fallthru
        _
    $region6: #{tpu_custom_call.1} parent=1 // loop_footer
      %s38 = sadd.s32 1, %s34
    $region7: #{tpu_custom_call.1} parent=1 // loop_footer_branch
      %33 = sbr.rel target = $region3
    $region8: #{tpu_custom_call.1} parent=1 // loop_exit
      _
    %5659 = vsyncpa [#allocation3], 1
    %s5660 = scalar_lea.sflag [#allocation3], 1
    %5661 = vsyncpa %s5660, 1
    %5662 = vsyncpa [#allocation6], 1
    %5663 = vsyncpa [#allocation9], 1
    %5664 = vsyncpa [#allocation12], 1
    %5665 = vsyncpa [#allocation15], 1
    %5666 = vsyncpa [#allocation18], 1
    %5667 = vsyncpa [#allocation21], 1
    %5668 = vsyncpa [#allocation24], 1
    %s5669 = scalar_lea.sflag [#allocation24], 1
    %5670 = vsyncpa %s5669, 1
    %5671 = vsyncpa [#allocation4], 1
    %s5672 = scalar_lea.sflag [#allocation4], 1
    %5673 = vsyncpa %s5672, 1

</llo_original>
